<compile_context>
chip_gen: v6e
topology: v6e:2x2x1
jax: 0.10.0
libtpu: 0.0.40
codegen_flags: <defaults>
</compile_context>

<pallas_src>
import jax
import jax.numpy as jnp
import numpy as np
from jax import lax
from jax.experimental import pallas as pl
from jax.experimental.pallas import tpu as pltpu  # noqa: F401

# ---------------- config (small, consistent with the module) ----------------
VOCAB = 128
EMBED = 32
N_HEAD = 4
HEAD_DIM = EMBED // N_HEAD
BLOCK_SIZE = 8          # max sequence length (== T here)
NUM_LAYERS = 2
BATCH = 2
SEQ = 8
LN_EPS = 1e-5
NEG_INF = -1e30


# ---------------- in-kernel helpers ----------------
def _layernorm(x, g, b):
    mu = jnp.mean(x, axis=-1, keepdims=True)
    var = jnp.mean((x - mu) ** 2, axis=-1, keepdims=True)
    return (x - mu) * lax.rsqrt(var + LN_EPS) * g + b


def _gelu_exact(x):
    # matches torch.nn.GELU(approximate='none')
    return 0.5 * x * (1.0 + lax.erf(x * 0.7071067811865476))


# ---------------- single fused forward kernel ----------------
def gpt_fused_kernel(tok_ref, pos_ref, bias_ref, wte_ref,
                     ln1g_ref, ln1b_ref, wqkv_ref, wo_ref, bo_ref,
                     ln2g_ref, ln2b_ref, w1_ref, b1_ref, w2_ref, b2_ref,
                     lnfg_ref, lnfb_ref, wh_ref, bh_ref,
                     out_ref):
    NT = tok_ref.shape[0]           # N * T  (= 16)
    V, C = wte_ref.shape            # (128, 32)
    d = C // N_HEAD                 # 8
    num_layers = wqkv_ref.shape[0]
    # NOTE: the PyTorch module scales by sqrt(embed_dim), not sqrt(head_dim)
    scale = 1.0 / (C ** 0.5)

    # ---- embedding: exact gather via one-hot matmul, + positional ----
    tok = tok_ref[...]                                          # (NT, 1) int32
    vocab_ids = lax.broadcasted_iota(jnp.int32, (NT, V), 1)
    onehot = (vocab_ids == tok).astype(jnp.float32)             # (NT, V)
    x = jnp.dot(onehot, wte_ref[...], preferred_element_type=jnp.float32)
    x = x + pos_ref[...]                                        # embd_drop p=0.0

    # block-diagonal causal additive mask, loaded once (hoisted across layers)
    attn_bias = bias_ref[...]                                   # (NT, NT)

    for l in range(num_layers):
        # ---- ln1 + causal self attention ----
        h = _layernorm(x, ln1g_ref[l], ln1b_ref[l])
        # fused QKV projection: one (NT, C) x (C, 3C) matmul
        qkv = jnp.dot(h, wqkv_ref[l], preferred_element_type=jnp.float32)

        head_outs = []
        for hh in range(N_HEAD):
            q = qkv[:, hh * d:(hh + 1) * d]                     # (NT, d)
            k = qkv[:, C + hh * d:C + (hh + 1) * d]
            v = qkv[:, 2 * C + hh * d:2 * C + (hh + 1) * d]
            # q @ k^T across the flattened batch*time axis; cross-batch and
            # non-causal entries are killed by the additive bias below.
            e = lax.dot_general(q, k, (((1,), (1,)), ((), ())),
                                preferred_element_type=jnp.float32)
            e = e * scale + attn_bias                           # (NT, NT)
            m = jnp.max(e, axis=-1, keepdims=True)
            p = jnp.exp(e - m)
            denom = jnp.sum(p, axis=-1, keepdims=True)
            p = p * pl.reciprocal(denom, approx=True)           # EUP slot
            head_outs.append(jnp.dot(p, v,
                                     preferred_element_type=jnp.float32))
        attn = jnp.concatenate(head_outs, axis=-1)              # (NT, C)
        attn = jnp.dot(attn, wo_ref[l],
                       preferred_element_type=jnp.float32) + bo_ref[l]
        x = x + attn                                            # resid_drop p=0.0

        # ---- ln2 + MLP ----
        h2 = _layernorm(x, ln2g_ref[l], ln2b_ref[l])
        m1 = jnp.dot(h2, w1_ref[l],
                     preferred_element_type=jnp.float32) + b1_ref[l]
        m1 = _gelu_exact(m1)
        x = x + jnp.dot(m1, w2_ref[l],
                        preferred_element_type=jnp.float32) + b2_ref[l]

    # ---- final LN + LM head (lane-dense output: last dim V = 128) ----
    hf = _layernorm(x, lnfg_ref[...], lnfb_ref[...])
    out_ref[...] = jnp.dot(hf, wh_ref[...],
                           preferred_element_type=jnp.float32) + bh_ref[...]


# ---------------- wrapper ----------------
def gpt_forward(params, tokens):
    N, T = tokens.shape
    NT = N * T
    V = VOCAB

    tok_flat = tokens.reshape(NT, 1).astype(jnp.int32)
    # positional embedding pre-tiled to the flattened (N*T, C) slab
    pos_flat = jnp.tile(params["wpe"][0, :T, :], (N, 1))        # (NT, C)

    # Block-diagonal causal additive mask (constant; built host-side once).
    r = np.arange(NT)
    same_batch = (r[:, None] // T) == (r[None, :] // T)
    causal = (r[:, None] % T) >= (r[None, :] % T)
    attn_bias = jnp.asarray(
        np.where(same_batch & causal, 0.0, NEG_INF).astype(np.float32))

    logits_flat = pl.pallas_call(
        gpt_fused_kernel,
        out_shape=jax.ShapeDtypeStruct((NT, V), jnp.float32),
    )(tok_flat, pos_flat, attn_bias, params["wte"],
      params["ln1_g"], params["ln1_b"], params["wqkv"], params["wo"],
      params["bo"], params["ln2_g"], params["ln2_b"], params["w1"],
      params["b1"], params["w2"], params["b2"],
      params["lnf_g"], params["lnf_b"], params["w_head"], params["b_head"])

    return logits_flat.reshape(N, T, V)
    # TODO(synk): cross-entropy loss (targets path) left to plain JAX if needed.


# ---------------- parameter init (deterministic, synthetic, stacked) --------
def init_params(key):
    C, H4, V, L = EMBED, 4 * EMBED, VOCAB, NUM_LAYERS
    ks = jax.random.split(key, 12)

    def rnd(k, shape, s=0.02):
        return s * jax.random.normal(k, shape, jnp.float32)

    return {
        "wte": rnd(ks[0], (V, C)),
        # module inits pos_embedding to zeros; use small nonzero values here so
        # the positional path is actually exercised by the check
        "wpe": rnd(ks[1], (1, BLOCK_SIZE, C), 0.01),
        # per-layer weights stacked along a leading NUM_LAYERS axis
        "ln1_g": jnp.ones((L, 1, C), jnp.float32),
        "ln1_b": jnp.zeros((L, 1, C), jnp.float32),
        "wqkv": rnd(ks[2], (L, C, 3 * C)),
        "wo":   rnd(ks[3], (L, C, C)),
        "bo":   rnd(ks[4], (L, 1, C)),
        "ln2_g": jnp.ones((L, 1, C), jnp.float32),
        "ln2_b": jnp.zeros((L, 1, C), jnp.float32),
        "w1":   rnd(ks[5], (L, C, H4)),
        "b1":   rnd(ks[6], (L, 1, H4)),
        "w2":   rnd(ks[7], (L, H4, C)),
        "b2":   rnd(ks[8], (L, 1, C)),
        # final LN + head
        "lnf_g": jnp.ones((1, C), jnp.float32),
        "lnf_b": jnp.zeros((1, C), jnp.float32),
        "w_head": rnd(ks[9], (C, V)),
        "b_head": rnd(ks[10], (1, V)),
    }


# ---------------- pure-JAX reference for the sanity check -------------------
def _ref_forward(params, tokens):
    def ln(x, g, b):
        mu = x.mean(-1, keepdims=True)
        var = ((x - mu) ** 2).mean(-1, keepdims=True)
        return (x - mu) / jnp.sqrt(var + LN_EPS) * g + b

    N, T = tokens.shape
    C = EMBED
    x = jnp.take(params["wte"], tokens, axis=0) + params["wpe"][:, :T, :]
    mask = jnp.tril(jnp.ones((T, T), bool))
    for l in range(NUM_LAYERS):
        h = ln(x, params["ln1_g"][l], params["ln1_b"][l])
        qkv = h @ params["wqkv"][l]
        q, k, v = qkv[..., :C], qkv[..., C:2 * C], qkv[..., 2 * C:]
        q = q.reshape(N, T, N_HEAD, HEAD_DIM).transpose(0, 2, 1, 3)
        k = k.reshape(N, T, N_HEAD, HEAD_DIM).transpose(0, 2, 1, 3)
        v = v.reshape(N, T, N_HEAD, HEAD_DIM).transpose(0, 2, 1, 3)
        e = jnp.einsum("nhtd,nhsd->nhts", q, k) / (C ** 0.5)
        e = jnp.where(mask, e, -jnp.inf)
        a = jax.nn.softmax(e, axis=-1)
        o = jnp.einsum("nhts,nhsd->nhtd", a, v).transpose(0, 2, 1, 3)
        o = o.reshape(N, T, C) @ params["wo"][l] + params["bo"][l]
        x = x + o
        h2 = ln(x, params["ln2_g"][l], params["ln2_b"][l])
        m = jax.nn.gelu(h2 @ params["w1"][l] + params["b1"][l],
                        approximate=False)
        x = x + (m @ params["w2"][l] + params["b2"][l])
    hf = ln(x, params["lnf_g"], params["lnf_b"])
    return hf @ params["w_head"] + params["b_head"]


if __name__ == "__main__":
    key = jax.random.PRNGKey(0)
    pkey, tkey = jax.random.split(key)
    params = init_params(pkey)
    tokens = jax.random.randint(tkey, (BATCH, SEQ), 0, VOCAB, dtype=jnp.int32)

    logits = jax.block_until_ready(gpt_forward(params, tokens))
    ref = jax.block_until_ready(_ref_forward(params, tokens))

    # tolerance has a little extra headroom for the approx EUP reciprocal in
    # the in-kernel softmax; structural bugs would be orders of magnitude off.
    np.testing.assert_allclose(np.asarray(logits), np.asarray(ref),
                               rtol=2e-3, atol=2e-3)
    assert logits.shape == (BATCH, SEQ, VOCAB)
    print("KERNEL_OK")
</pallas_src>

<mosaic_0001>
module attributes {stable_mosaic.version = 11 : i64} {
  func.func @gpt_fused_kernel(%arg0: memref<16x1xi32, #tpu.memory_space<vmem>>, %arg1: memref<16x32xf32, #tpu.memory_space<vmem>>, %arg2: memref<16x16xf32, #tpu.memory_space<vmem>>, %arg3: memref<128x32xf32, #tpu.memory_space<vmem>>, %arg4: memref<2x1x32xf32, #tpu.memory_space<vmem>>, %arg5: memref<2x1x32xf32, #tpu.memory_space<vmem>>, %arg6: memref<2x32x96xf32, #tpu.memory_space<vmem>>, %arg7: memref<2x32x32xf32, #tpu.memory_space<vmem>>, %arg8: memref<2x1x32xf32, #tpu.memory_space<vmem>>, %arg9: memref<2x1x32xf32, #tpu.memory_space<vmem>>, %arg10: memref<2x1x32xf32, #tpu.memory_space<vmem>>, %arg11: memref<2x32x128xf32, #tpu.memory_space<vmem>>, %arg12: memref<2x1x128xf32, #tpu.memory_space<vmem>>, %arg13: memref<2x128x32xf32, #tpu.memory_space<vmem>>, %arg14: memref<2x1x32xf32, #tpu.memory_space<vmem>>, %arg15: memref<1x32xf32, #tpu.memory_space<vmem>>, %arg16: memref<1x32xf32, #tpu.memory_space<vmem>>, %arg17: memref<32x128xf32, #tpu.memory_space<vmem>>, %arg18: memref<1x128xf32, #tpu.memory_space<vmem>>, %arg19: memref<16x128xf32, #tpu.memory_space<vmem>>) attributes {dimension_semantics = [], scalar_prefetch = 0 : i64, scratch_operands = 0 : i64, tpu.core_type = #tpu.core_type<tc>} {
    %c0 = arith.constant 0 : index
    %c0_0 = arith.constant 0 : index
    %0 = vector.load %arg0[%c0, %c0_0] : memref<16x1xi32, #tpu.memory_space<vmem>>, vector<16x1xi32>
    %1 = tpu.iota {dimensions = array<i32: 1>} : vector<16x128xi32>
    %2 = vector.broadcast %0 : vector<16x1xi32> to vector<16x128xi32>
    %3 = arith.cmpi eq, %1, %2 : vector<16x128xi32>
    %4 = arith.extui %3 : vector<16x128xi1> to vector<16x128xi32>
    %5 = arith.sitofp %4 : vector<16x128xi32> to vector<16x128xf32>
    %c0_1 = arith.constant 0 : index
    %c0_2 = arith.constant 0 : index
    %6 = vector.load %arg3[%c0_1, %c0_2] : memref<128x32xf32, #tpu.memory_space<vmem>>, vector<128x32xf32>
    %cst = arith.constant dense<0.000000e+00> : vector<16x32xf32>
    %7 = tpu.matmul %5, %6, %cst {dimension_numbers = #tpu.dot_dimension_numbers<[1], [0], [0], [1], [0, 0, 1, 1], [], []>} : vector<16x128xf32>, vector<128x32xf32>, vector<16x32xf32> -> vector<16x32xf32>
    %c0_3 = arith.constant 0 : index
    %c0_4 = arith.constant 0 : index
    %8 = vector.load %arg1[%c0_3, %c0_4] : memref<16x32xf32, #tpu.memory_space<vmem>>, vector<16x32xf32>
    %9 = arith.addf %7, %8 : vector<16x32xf32>
    %c0_5 = arith.constant 0 : index
    %c0_6 = arith.constant 0 : index
    %10 = vector.load %arg2[%c0_5, %c0_6] : memref<16x16xf32, #tpu.memory_space<vmem>>, vector<16x16xf32>
    %c0_7 = arith.constant 0 : index
    %c0_8 = arith.constant 0 : index
    %c0_9 = arith.constant 0 : index
    %11 = vector.load %arg4[%c0_7, %c0_8, %c0_9] : memref<2x1x32xf32, #tpu.memory_space<vmem>>, vector<1x1x32xf32>
    %12 = vector.shape_cast %11 : vector<1x1x32xf32> to vector<1x32xf32>
    %c0_10 = arith.constant 0 : index
    %c0_11 = arith.constant 0 : index
    %c0_12 = arith.constant 0 : index
    %13 = vector.load %arg5[%c0_10, %c0_11, %c0_12] : memref<2x1x32xf32, #tpu.memory_space<vmem>>, vector<1x1x32xf32>
    %14 = vector.shape_cast %13 : vector<1x1x32xf32> to vector<1x32xf32>
    %cst_13 = arith.constant dense<0.000000e+00> : vector<16xf32>
    %15 = vector.multi_reduction <add>, %9, %cst_13 [1] : vector<16x32xf32> to vector<16xf32>
    %16 = vector.shape_cast %15 : vector<16xf32> to vector<16x1xf32>
    %cst_14 = arith.constant 3.200000e+01 : f32
    %17 = vector.broadcast %cst_14 : f32 to vector<16x1xf32>
    %18 = arith.divf %16, %17 : vector<16x1xf32>
    %19 = vector.broadcast %18 : vector<16x1xf32> to vector<16x32xf32>
    %20 = arith.subf %9, %19 : vector<16x32xf32>
    %21 = arith.mulf %20, %20 : vector<16x32xf32>
    %cst_15 = arith.constant dense<0.000000e+00> : vector<16xf32>
    %22 = vector.multi_reduction <add>, %21, %cst_15 [1] : vector<16x32xf32> to vector<16xf32>
    %23 = vector.shape_cast %22 : vector<16xf32> to vector<16x1xf32>
    %cst_16 = arith.constant 3.200000e+01 : f32
    %24 = vector.broadcast %cst_16 : f32 to vector<16x1xf32>
    %25 = arith.divf %23, %24 : vector<16x1xf32>
    %26 = vector.broadcast %18 : vector<16x1xf32> to vector<16x32xf32>
    %27 = arith.subf %9, %26 : vector<16x32xf32>
    %cst_17 = arith.constant 9.99999974E-6 : f32
    %28 = vector.broadcast %cst_17 : f32 to vector<16x1xf32>
    %29 = arith.addf %25, %28 : vector<16x1xf32>
    %30 = math.rsqrt %29 : vector<16x1xf32>
    %31 = vector.broadcast %30 : vector<16x1xf32> to vector<16x32xf32>
    %32 = arith.mulf %27, %31 : vector<16x32xf32>
    %33 = vector.broadcast %12 : vector<1x32xf32> to vector<16x32xf32>
    %34 = arith.mulf %32, %33 : vector<16x32xf32>
    %35 = vector.broadcast %14 : vector<1x32xf32> to vector<16x32xf32>
    %36 = arith.addf %34, %35 : vector<16x32xf32>
    %c0_18 = arith.constant 0 : index
    %c0_19 = arith.constant 0 : index
    %c0_20 = arith.constant 0 : index
    %37 = vector.load %arg6[%c0_18, %c0_19, %c0_20] : memref<2x32x96xf32, #tpu.memory_space<vmem>>, vector<1x32x96xf32>
    %38 = vector.shape_cast %37 : vector<1x32x96xf32> to vector<32x96xf32>
    %cst_21 = arith.constant dense<0.000000e+00> : vector<16x96xf32>
    %39 = tpu.matmul %36, %38, %cst_21 {dimension_numbers = #tpu.dot_dimension_numbers<[1], [0], [0], [1], [0, 0, 1, 1], [], []>} : vector<16x32xf32>, vector<32x96xf32>, vector<16x96xf32> -> vector<16x96xf32>
    %40 = vector.extract_strided_slice %39 {offsets = [0, 0], sizes = [16, 8], strides = [1, 1]} : vector<16x96xf32> to vector<16x8xf32>
    %41 = vector.extract_strided_slice %39 {offsets = [0, 32], sizes = [16, 8], strides = [1, 1]} : vector<16x96xf32> to vector<16x8xf32>
    %42 = vector.extract_strided_slice %39 {offsets = [0, 64], sizes = [16, 8], strides = [1, 1]} : vector<16x96xf32> to vector<16x8xf32>
    %cst_22 = arith.constant dense<0.000000e+00> : vector<16x16xf32>
    %43 = tpu.matmul %40, %41, %cst_22 {dimension_numbers = #tpu.dot_dimension_numbers<[1], [1], [0], [0], [0, 0, 1, 0], [], []>} : vector<16x8xf32>, vector<16x8xf32>, vector<16x16xf32> -> vector<16x16xf32>
    %cst_23 = arith.constant 0.176776692 : f32
    %44 = vector.broadcast %cst_23 : f32 to vector<16x16xf32>
    %45 = arith.mulf %43, %44 : vector<16x16xf32>
    %46 = arith.addf %45, %10 : vector<16x16xf32>
    %cst_24 = arith.constant dense<0xFF800000> : vector<16xf32>
    %47 = vector.multi_reduction <maximumf>, %46, %cst_24 [1] : vector<16x16xf32> to vector<16xf32>
    %48 = vector.shape_cast %47 : vector<16xf32> to vector<16x1xf32>
    %49 = vector.broadcast %48 : vector<16x1xf32> to vector<16x16xf32>
    %50 = arith.subf %46, %49 : vector<16x16xf32>
    %51 = math.exp %50 : vector<16x16xf32>
    %cst_25 = arith.constant dense<0.000000e+00> : vector<16xf32>
    %52 = vector.multi_reduction <add>, %51, %cst_25 [1] : vector<16x16xf32> to vector<16xf32>
    %53 = vector.shape_cast %52 : vector<16xf32> to vector<16x1xf32>
    %54 = tpu.reciprocal %53 {approx = true} : vector<16x1xf32> -> vector<16x1xf32>
    %55 = vector.broadcast %54 : vector<16x1xf32> to vector<16x16xf32>
    %56 = arith.mulf %51, %55 : vector<16x16xf32>
    %cst_26 = arith.constant dense<0.000000e+00> : vector<16x8xf32>
    %57 = tpu.matmul %56, %42, %cst_26 {dimension_numbers = #tpu.dot_dimension_numbers<[1], [0], [0], [1], [0, 0, 1, 1], [], []>} : vector<16x16xf32>, vector<16x8xf32>, vector<16x8xf32> -> vector<16x8xf32>
    %58 = vector.extract_strided_slice %39 {offsets = [0, 8], sizes = [16, 8], strides = [1, 1]} : vector<16x96xf32> to vector<16x8xf32>
    %59 = vector.extract_strided_slice %39 {offsets = [0, 40], sizes = [16, 8], strides = [1, 1]} : vector<16x96xf32> to vector<16x8xf32>
    %60 = vector.extract_strided_slice %39 {offsets = [0, 72], sizes = [16, 8], strides = [1, 1]} : vector<16x96xf32> to vector<16x8xf32>
    %cst_27 = arith.constant dense<0.000000e+00> : vector<16x16xf32>
    %61 = tpu.matmul %58, %59, %cst_27 {dimension_numbers = #tpu.dot_dimension_numbers<[1], [1], [0], [0], [0, 0, 1, 0], [], []>} : vector<16x8xf32>, vector<16x8xf32>, vector<16x16xf32> -> vector<16x16xf32>
    %cst_28 = arith.constant 0.176776692 : f32
    %62 = vector.broadcast %cst_28 : f32 to vector<16x16xf32>
    %63 = arith.mulf %61, %62 : vector<16x16xf32>
    %64 = arith.addf %63, %10 : vector<16x16xf32>
    %cst_29 = arith.constant dense<0xFF800000> : vector<16xf32>
    %65 = vector.multi_reduction <maximumf>, %64, %cst_29 [1] : vector<16x16xf32> to vector<16xf32>
    %66 = vector.shape_cast %65 : vector<16xf32> to vector<16x1xf32>
    %67 = vector.broadcast %66 : vector<16x1xf32> to vector<16x16xf32>
    %68 = arith.subf %64, %67 : vector<16x16xf32>
    %69 = math.exp %68 : vector<16x16xf32>
    %cst_30 = arith.constant dense<0.000000e+00> : vector<16xf32>
    %70 = vector.multi_reduction <add>, %69, %cst_30 [1] : vector<16x16xf32> to vector<16xf32>
    %71 = vector.shape_cast %70 : vector<16xf32> to vector<16x1xf32>
    %72 = tpu.reciprocal %71 {approx = true} : vector<16x1xf32> -> vector<16x1xf32>
    %73 = vector.broadcast %72 : vector<16x1xf32> to vector<16x16xf32>
    %74 = arith.mulf %69, %73 : vector<16x16xf32>
    %cst_31 = arith.constant dense<0.000000e+00> : vector<16x8xf32>
    %75 = tpu.matmul %74, %60, %cst_31 {dimension_numbers = #tpu.dot_dimension_numbers<[1], [0], [0], [1], [0, 0, 1, 1], [], []>} : vector<16x16xf32>, vector<16x8xf32>, vector<16x8xf32> -> vector<16x8xf32>
    %76 = vector.extract_strided_slice %39 {offsets = [0, 16], sizes = [16, 8], strides = [1, 1]} : vector<16x96xf32> to vector<16x8xf32>
    %77 = vector.extract_strided_slice %39 {offsets = [0, 48], sizes = [16, 8], strides = [1, 1]} : vector<16x96xf32> to vector<16x8xf32>
    %78 = vector.extract_strided_slice %39 {offsets = [0, 80], sizes = [16, 8], strides = [1, 1]} : vector<16x96xf32> to vector<16x8xf32>
    %cst_32 = arith.constant dense<0.000000e+00> : vector<16x16xf32>
    %79 = tpu.matmul %76, %77, %cst_32 {dimension_numbers = #tpu.dot_dimension_numbers<[1], [1], [0], [0], [0, 0, 1, 0], [], []>} : vector<16x8xf32>, vector<16x8xf32>, vector<16x16xf32> -> vector<16x16xf32>
    %cst_33 = arith.constant 0.176776692 : f32
    %80 = vector.broadcast %cst_33 : f32 to vector<16x16xf32>
    %81 = arith.mulf %79, %80 : vector<16x16xf32>
    %82 = arith.addf %81, %10 : vector<16x16xf32>
    %cst_34 = arith.constant dense<0xFF800000> : vector<16xf32>
    %83 = vector.multi_reduction <maximumf>, %82, %cst_34 [1] : vector<16x16xf32> to vector<16xf32>
    %84 = vector.shape_cast %83 : vector<16xf32> to vector<16x1xf32>
    %85 = vector.broadcast %84 : vector<16x1xf32> to vector<16x16xf32>
    %86 = arith.subf %82, %85 : vector<16x16xf32>
    %87 = math.exp %86 : vector<16x16xf32>
    %cst_35 = arith.constant dense<0.000000e+00> : vector<16xf32>
    %88 = vector.multi_reduction <add>, %87, %cst_35 [1] : vector<16x16xf32> to vector<16xf32>
    %89 = vector.shape_cast %88 : vector<16xf32> to vector<16x1xf32>
    %90 = tpu.reciprocal %89 {approx = true} : vector<16x1xf32> -> vector<16x1xf32>
    %91 = vector.broadcast %90 : vector<16x1xf32> to vector<16x16xf32>
    %92 = arith.mulf %87, %91 : vector<16x16xf32>
    %cst_36 = arith.constant dense<0.000000e+00> : vector<16x8xf32>
    %93 = tpu.matmul %92, %78, %cst_36 {dimension_numbers = #tpu.dot_dimension_numbers<[1], [0], [0], [1], [0, 0, 1, 1], [], []>} : vector<16x16xf32>, vector<16x8xf32>, vector<16x8xf32> -> vector<16x8xf32>
    %94 = vector.extract_strided_slice %39 {offsets = [0, 24], sizes = [16, 8], strides = [1, 1]} : vector<16x96xf32> to vector<16x8xf32>
    %95 = vector.extract_strided_slice %39 {offsets = [0, 56], sizes = [16, 8], strides = [1, 1]} : vector<16x96xf32> to vector<16x8xf32>
    %96 = vector.extract_strided_slice %39 {offsets = [0, 88], sizes = [16, 8], strides = [1, 1]} : vector<16x96xf32> to vector<16x8xf32>
    %cst_37 = arith.constant dense<0.000000e+00> : vector<16x16xf32>
    %97 = tpu.matmul %94, %95, %cst_37 {dimension_numbers = #tpu.dot_dimension_numbers<[1], [1], [0], [0], [0, 0, 1, 0], [], []>} : vector<16x8xf32>, vector<16x8xf32>, vector<16x16xf32> -> vector<16x16xf32>
    %cst_38 = arith.constant 0.176776692 : f32
    %98 = vector.broadcast %cst_38 : f32 to vector<16x16xf32>
    %99 = arith.mulf %97, %98 : vector<16x16xf32>
    %100 = arith.addf %99, %10 : vector<16x16xf32>
    %cst_39 = arith.constant dense<0xFF800000> : vector<16xf32>
    %101 = vector.multi_reduction <maximumf>, %100, %cst_39 [1] : vector<16x16xf32> to vector<16xf32>
    %102 = vector.shape_cast %101 : vector<16xf32> to vector<16x1xf32>
    %103 = vector.broadcast %102 : vector<16x1xf32> to vector<16x16xf32>
    %104 = arith.subf %100, %103 : vector<16x16xf32>
    %105 = math.exp %104 : vector<16x16xf32>
    %cst_40 = arith.constant dense<0.000000e+00> : vector<16xf32>
    %106 = vector.multi_reduction <add>, %105, %cst_40 [1] : vector<16x16xf32> to vector<16xf32>
    %107 = vector.shape_cast %106 : vector<16xf32> to vector<16x1xf32>
    %108 = tpu.reciprocal %107 {approx = true} : vector<16x1xf32> -> vector<16x1xf32>
    %109 = vector.broadcast %108 : vector<16x1xf32> to vector<16x16xf32>
    %110 = arith.mulf %105, %109 : vector<16x16xf32>
    %cst_41 = arith.constant dense<0.000000e+00> : vector<16x8xf32>
    %111 = tpu.matmul %110, %96, %cst_41 {dimension_numbers = #tpu.dot_dimension_numbers<[1], [0], [0], [1], [0, 0, 1, 1], [], []>} : vector<16x16xf32>, vector<16x8xf32>, vector<16x8xf32> -> vector<16x8xf32>
    %112 = tpu.concatenate %57, %75, %93, %111 in 1 : vector<16x8xf32>, vector<16x8xf32>, vector<16x8xf32>, vector<16x8xf32> -> vector<16x32xf32>
    %c0_42 = arith.constant 0 : index
    %c0_43 = arith.constant 0 : index
    %c0_44 = arith.constant 0 : index
    %113 = vector.load %arg7[%c0_42, %c0_43, %c0_44] : memref<2x32x32xf32, #tpu.memory_space<vmem>>, vector<1x32x32xf32>
    %114 = vector.shape_cast %113 : vector<1x32x32xf32> to vector<32x32xf32>
    %cst_45 = arith.constant dense<0.000000e+00> : vector<16x32xf32>
    %115 = tpu.matmul %112, %114, %cst_45 {dimension_numbers = #tpu.dot_dimension_numbers<[1], [0], [0], [1], [0, 0, 1, 1], [], []>} : vector<16x32xf32>, vector<32x32xf32>, vector<16x32xf32> -> vector<16x32xf32>
    %c0_46 = arith.constant 0 : index
    %c0_47 = arith.constant 0 : index
    %c0_48 = arith.constant 0 : index
    %116 = vector.load %arg8[%c0_46, %c0_47, %c0_48] : memref<2x1x32xf32, #tpu.memory_space<vmem>>, vector<1x1x32xf32>
    %117 = vector.shape_cast %116 : vector<1x1x32xf32> to vector<1x32xf32>
    %118 = vector.broadcast %117 : vector<1x32xf32> to vector<16x32xf32>
    %119 = arith.addf %115, %118 : vector<16x32xf32>
    %120 = arith.addf %9, %119 : vector<16x32xf32>
    %c0_49 = arith.constant 0 : index
    %c0_50 = arith.constant 0 : index
    %c0_51 = arith.constant 0 : index
    %121 = vector.load %arg9[%c0_49, %c0_50, %c0_51] : memref<2x1x32xf32, #tpu.memory_space<vmem>>, vector<1x1x32xf32>
    %122 = vector.shape_cast %121 : vector<1x1x32xf32> to vector<1x32xf32>
    %c0_52 = arith.constant 0 : index
    %c0_53 = arith.constant 0 : index
    %c0_54 = arith.constant 0 : index
    %123 = vector.load %arg10[%c0_52, %c0_53, %c0_54] : memref<2x1x32xf32, #tpu.memory_space<vmem>>, vector<1x1x32xf32>
    %124 = vector.shape_cast %123 : vector<1x1x32xf32> to vector<1x32xf32>
    %cst_55 = arith.constant dense<0.000000e+00> : vector<16xf32>
    %125 = vector.multi_reduction <add>, %120, %cst_55 [1] : vector<16x32xf32> to vector<16xf32>
    %126 = vector.shape_cast %125 : vector<16xf32> to vector<16x1xf32>
    %cst_56 = arith.constant 3.200000e+01 : f32
    %127 = vector.broadcast %cst_56 : f32 to vector<16x1xf32>
    %128 = arith.divf %126, %127 : vector<16x1xf32>
    %129 = vector.broadcast %128 : vector<16x1xf32> to vector<16x32xf32>
    %130 = arith.subf %120, %129 : vector<16x32xf32>
    %131 = arith.mulf %130, %130 : vector<16x32xf32>
    %cst_57 = arith.constant dense<0.000000e+00> : vector<16xf32>
    %132 = vector.multi_reduction <add>, %131, %cst_57 [1] : vector<16x32xf32> to vector<16xf32>
    %133 = vector.shape_cast %132 : vector<16xf32> to vector<16x1xf32>
    %cst_58 = arith.constant 3.200000e+01 : f32
    %134 = vector.broadcast %cst_58 : f32 to vector<16x1xf32>
    %135 = arith.divf %133, %134 : vector<16x1xf32>
    %136 = vector.broadcast %128 : vector<16x1xf32> to vector<16x32xf32>
    %137 = arith.subf %120, %136 : vector<16x32xf32>
    %cst_59 = arith.constant 9.99999974E-6 : f32
    %138 = vector.broadcast %cst_59 : f32 to vector<16x1xf32>
    %139 = arith.addf %135, %138 : vector<16x1xf32>
    %140 = math.rsqrt %139 : vector<16x1xf32>
    %141 = vector.broadcast %140 : vector<16x1xf32> to vector<16x32xf32>
    %142 = arith.mulf %137, %141 : vector<16x32xf32>
    %143 = vector.broadcast %122 : vector<1x32xf32> to vector<16x32xf32>
    %144 = arith.mulf %142, %143 : vector<16x32xf32>
    %145 = vector.broadcast %124 : vector<1x32xf32> to vector<16x32xf32>
    %146 = arith.addf %144, %145 : vector<16x32xf32>
    %c0_60 = arith.constant 0 : index
    %c0_61 = arith.constant 0 : index
    %c0_62 = arith.constant 0 : index
    %147 = vector.load %arg11[%c0_60, %c0_61, %c0_62] : memref<2x32x128xf32, #tpu.memory_space<vmem>>, vector<1x32x128xf32>
    %148 = vector.shape_cast %147 : vector<1x32x128xf32> to vector<32x128xf32>
    %cst_63 = arith.constant dense<0.000000e+00> : vector<16x128xf32>
    %149 = tpu.matmul %146, %148, %cst_63 {dimension_numbers = #tpu.dot_dimension_numbers<[1], [0], [0], [1], [0, 0, 1, 1], [], []>} : vector<16x32xf32>, vector<32x128xf32>, vector<16x128xf32> -> vector<16x128xf32>
    %c0_64 = arith.constant 0 : index
    %c0_65 = arith.constant 0 : index
    %c0_66 = arith.constant 0 : index
    %150 = vector.load %arg12[%c0_64, %c0_65, %c0_66] : memref<2x1x128xf32, #tpu.memory_space<vmem>>, vector<1x1x128xf32>
    %151 = vector.shape_cast %150 : vector<1x1x128xf32> to vector<1x128xf32>
    %152 = vector.broadcast %151 : vector<1x128xf32> to vector<16x128xf32>
    %153 = arith.addf %149, %152 : vector<16x128xf32>
    %cst_67 = arith.constant 5.000000e-01 : f32
    %154 = vector.broadcast %cst_67 : f32 to vector<16x128xf32>
    %155 = arith.mulf %154, %153 : vector<16x128xf32>
    %cst_68 = arith.constant 0.707106769 : f32
    %156 = vector.broadcast %cst_68 : f32 to vector<16x128xf32>
    %157 = arith.mulf %153, %156 : vector<16x128xf32>
    %158 = math.erf %157 : vector<16x128xf32>
    %cst_69 = arith.constant 1.000000e+00 : f32
    %159 = vector.broadcast %cst_69 : f32 to vector<16x128xf32>
    %160 = arith.addf %159, %158 : vector<16x128xf32>
    %161 = arith.mulf %155, %160 : vector<16x128xf32>
    %c0_70 = arith.constant 0 : index
    %c0_71 = arith.constant 0 : index
    %c0_72 = arith.constant 0 : index
    %162 = vector.load %arg13[%c0_70, %c0_71, %c0_72] : memref<2x128x32xf32, #tpu.memory_space<vmem>>, vector<1x128x32xf32>
    %163 = vector.shape_cast %162 : vector<1x128x32xf32> to vector<128x32xf32>
    %cst_73 = arith.constant dense<0.000000e+00> : vector<16x32xf32>
    %164 = tpu.matmul %161, %163, %cst_73 {dimension_numbers = #tpu.dot_dimension_numbers<[1], [0], [0], [1], [0, 0, 1, 1], [], []>} : vector<16x128xf32>, vector<128x32xf32>, vector<16x32xf32> -> vector<16x32xf32>
    %165 = arith.addf %120, %164 : vector<16x32xf32>
    %c0_74 = arith.constant 0 : index
    %c0_75 = arith.constant 0 : index
    %c0_76 = arith.constant 0 : index
    %166 = vector.load %arg14[%c0_74, %c0_75, %c0_76] : memref<2x1x32xf32, #tpu.memory_space<vmem>>, vector<1x1x32xf32>
    %167 = vector.shape_cast %166 : vector<1x1x32xf32> to vector<1x32xf32>
    %168 = vector.broadcast %167 : vector<1x32xf32> to vector<16x32xf32>
    %169 = arith.addf %165, %168 : vector<16x32xf32>
    %c1 = arith.constant 1 : index
    %c0_77 = arith.constant 0 : index
    %c0_78 = arith.constant 0 : index
    %170 = vector.load %arg4[%c1, %c0_77, %c0_78] : memref<2x1x32xf32, #tpu.memory_space<vmem>>, vector<1x1x32xf32>
    %171 = vector.shape_cast %170 : vector<1x1x32xf32> to vector<1x32xf32>
    %c1_79 = arith.constant 1 : index
    %c0_80 = arith.constant 0 : index
    %c0_81 = arith.constant 0 : index
    %172 = vector.load %arg5[%c1_79, %c0_80, %c0_81] : memref<2x1x32xf32, #tpu.memory_space<vmem>>, vector<1x1x32xf32>
    %173 = vector.shape_cast %172 : vector<1x1x32xf32> to vector<1x32xf32>
    %cst_82 = arith.constant dense<0.000000e+00> : vector<16xf32>
    %174 = vector.multi_reduction <add>, %169, %cst_82 [1] : vector<16x32xf32> to vector<16xf32>
    %175 = vector.shape_cast %174 : vector<16xf32> to vector<16x1xf32>
    %cst_83 = arith.constant 3.200000e+01 : f32
    %176 = vector.broadcast %cst_83 : f32 to vector<16x1xf32>
    %177 = arith.divf %175, %176 : vector<16x1xf32>
    %178 = vector.broadcast %177 : vector<16x1xf32> to vector<16x32xf32>
    %179 = arith.subf %169, %178 : vector<16x32xf32>
    %180 = arith.mulf %179, %179 : vector<16x32xf32>
    %cst_84 = arith.constant dense<0.000000e+00> : vector<16xf32>
    %181 = vector.multi_reduction <add>, %180, %cst_84 [1] : vector<16x32xf32> to vector<16xf32>
    %182 = vector.shape_cast %181 : vector<16xf32> to vector<16x1xf32>
    %cst_85 = arith.constant 3.200000e+01 : f32
    %183 = vector.broadcast %cst_85 : f32 to vector<16x1xf32>
    %184 = arith.divf %182, %183 : vector<16x1xf32>
    %185 = vector.broadcast %177 : vector<16x1xf32> to vector<16x32xf32>
    %186 = arith.subf %169, %185 : vector<16x32xf32>
    %cst_86 = arith.constant 9.99999974E-6 : f32
    %187 = vector.broadcast %cst_86 : f32 to vector<16x1xf32>
    %188 = arith.addf %184, %187 : vector<16x1xf32>
    %189 = math.rsqrt %188 : vector<16x1xf32>
    %190 = vector.broadcast %189 : vector<16x1xf32> to vector<16x32xf32>
    %191 = arith.mulf %186, %190 : vector<16x32xf32>
    %192 = vector.broadcast %171 : vector<1x32xf32> to vector<16x32xf32>
    %193 = arith.mulf %191, %192 : vector<16x32xf32>
    %194 = vector.broadcast %173 : vector<1x32xf32> to vector<16x32xf32>
    %195 = arith.addf %193, %194 : vector<16x32xf32>
    %c1_87 = arith.constant 1 : index
    %c0_88 = arith.constant 0 : index
    %c0_89 = arith.constant 0 : index
    %196 = vector.load %arg6[%c1_87, %c0_88, %c0_89] : memref<2x32x96xf32, #tpu.memory_space<vmem>>, vector<1x32x96xf32>
    %197 = vector.shape_cast %196 : vector<1x32x96xf32> to vector<32x96xf32>
    %cst_90 = arith.constant dense<0.000000e+00> : vector<16x96xf32>
    %198 = tpu.matmul %195, %197, %cst_90 {dimension_numbers = #tpu.dot_dimension_numbers<[1], [0], [0], [1], [0, 0, 1, 1], [], []>} : vector<16x32xf32>, vector<32x96xf32>, vector<16x96xf32> -> vector<16x96xf32>
    %199 = vector.extract_strided_slice %198 {offsets = [0, 0], sizes = [16, 8], strides = [1, 1]} : vector<16x96xf32> to vector<16x8xf32>
    %200 = vector.extract_strided_slice %198 {offsets = [0, 32], sizes = [16, 8], strides = [1, 1]} : vector<16x96xf32> to vector<16x8xf32>
    %201 = vector.extract_strided_slice %198 {offsets = [0, 64], sizes = [16, 8], strides = [1, 1]} : vector<16x96xf32> to vector<16x8xf32>
    %cst_91 = arith.constant dense<0.000000e+00> : vector<16x16xf32>
    %202 = tpu.matmul %199, %200, %cst_91 {dimension_numbers = #tpu.dot_dimension_numbers<[1], [1], [0], [0], [0, 0, 1, 0], [], []>} : vector<16x8xf32>, vector<16x8xf32>, vector<16x16xf32> -> vector<16x16xf32>
    %cst_92 = arith.constant 0.176776692 : f32
    %203 = vector.broadcast %cst_92 : f32 to vector<16x16xf32>
    %204 = arith.mulf %202, %203 : vector<16x16xf32>
    %205 = arith.addf %204, %10 : vector<16x16xf32>
    %cst_93 = arith.constant dense<0xFF800000> : vector<16xf32>
    %206 = vector.multi_reduction <maximumf>, %205, %cst_93 [1] : vector<16x16xf32> to vector<16xf32>
    %207 = vector.shape_cast %206 : vector<16xf32> to vector<16x1xf32>
    %208 = vector.broadcast %207 : vector<16x1xf32> to vector<16x16xf32>
    %209 = arith.subf %205, %208 : vector<16x16xf32>
    %210 = math.exp %209 : vector<16x16xf32>
    %cst_94 = arith.constant dense<0.000000e+00> : vector<16xf32>
    %211 = vector.multi_reduction <add>, %210, %cst_94 [1] : vector<16x16xf32> to vector<16xf32>
    %212 = vector.shape_cast %211 : vector<16xf32> to vector<16x1xf32>
    %213 = tpu.reciprocal %212 {approx = true} : vector<16x1xf32> -> vector<16x1xf32>
    %214 = vector.broadcast %213 : vector<16x1xf32> to vector<16x16xf32>
    %215 = arith.mulf %210, %214 : vector<16x16xf32>
    %cst_95 = arith.constant dense<0.000000e+00> : vector<16x8xf32>
    %216 = tpu.matmul %215, %201, %cst_95 {dimension_numbers = #tpu.dot_dimension_numbers<[1], [0], [0], [1], [0, 0, 1, 1], [], []>} : vector<16x16xf32>, vector<16x8xf32>, vector<16x8xf32> -> vector<16x8xf32>
    %217 = vector.extract_strided_slice %198 {offsets = [0, 8], sizes = [16, 8], strides = [1, 1]} : vector<16x96xf32> to vector<16x8xf32>
    %218 = vector.extract_strided_slice %198 {offsets = [0, 40], sizes = [16, 8], strides = [1, 1]} : vector<16x96xf32> to vector<16x8xf32>
    %219 = vector.extract_strided_slice %198 {offsets = [0, 72], sizes = [16, 8], strides = [1, 1]} : vector<16x96xf32> to vector<16x8xf32>
    %cst_96 = arith.constant dense<0.000000e+00> : vector<16x16xf32>
    %220 = tpu.matmul %217, %218, %cst_96 {dimension_numbers = #tpu.dot_dimension_numbers<[1], [1], [0], [0], [0, 0, 1, 0], [], []>} : vector<16x8xf32>, vector<16x8xf32>, vector<16x16xf32> -> vector<16x16xf32>
    %cst_97 = arith.constant 0.176776692 : f32
    %221 = vector.broadcast %cst_97 : f32 to vector<16x16xf32>
    %222 = arith.mulf %220, %221 : vector<16x16xf32>
    %223 = arith.addf %222, %10 : vector<16x16xf32>
    %cst_98 = arith.constant dense<0xFF800000> : vector<16xf32>
    %224 = vector.multi_reduction <maximumf>, %223, %cst_98 [1] : vector<16x16xf32> to vector<16xf32>
    %225 = vector.shape_cast %224 : vector<16xf32> to vector<16x1xf32>
    %226 = vector.broadcast %225 : vector<16x1xf32> to vector<16x16xf32>
    %227 = arith.subf %223, %226 : vector<16x16xf32>
    %228 = math.exp %227 : vector<16x16xf32>
    %cst_99 = arith.constant dense<0.000000e+00> : vector<16xf32>
    %229 = vector.multi_reduction <add>, %228, %cst_99 [1] : vector<16x16xf32> to vector<16xf32>
    %230 = vector.shape_cast %229 : vector<16xf32> to vector<16x1xf32>
    %231 = tpu.reciprocal %230 {approx = true} : vector<16x1xf32> -> vector<16x1xf32>
    %232 = vector.broadcast %231 : vector<16x1xf32> to vector<16x16xf32>
    %233 = arith.mulf %228, %232 : vector<16x16xf32>
    %cst_100 = arith.constant dense<0.000000e+00> : vector<16x8xf32>
    %234 = tpu.matmul %233, %219, %cst_100 {dimension_numbers = #tpu.dot_dimension_numbers<[1], [0], [0], [1], [0, 0, 1, 1], [], []>} : vector<16x16xf32>, vector<16x8xf32>, vector<16x8xf32> -> vector<16x8xf32>
    %235 = vector.extract_strided_slice %198 {offsets = [0, 16], sizes = [16, 8], strides = [1, 1]} : vector<16x96xf32> to vector<16x8xf32>
    %236 = vector.extract_strided_slice %198 {offsets = [0, 48], sizes = [16, 8], strides = [1, 1]} : vector<16x96xf32> to vector<16x8xf32>
    %237 = vector.extract_strided_slice %198 {offsets = [0, 80], sizes = [16, 8], strides = [1, 1]} : vector<16x96xf32> to vector<16x8xf32>
    %cst_101 = arith.constant dense<0.000000e+00> : vector<16x16xf32>
    %238 = tpu.matmul %235, %236, %cst_101 {dimension_numbers = #tpu.dot_dimension_numbers<[1], [1], [0], [0], [0, 0, 1, 0], [], []>} : vector<16x8xf32>, vector<16x8xf32>, vector<16x16xf32> -> vector<16x16xf32>
    %cst_102 = arith.constant 0.176776692 : f32
    %239 = vector.broadcast %cst_102 : f32 to vector<16x16xf32>
    %240 = arith.mulf %238, %239 : vector<16x16xf32>
    %241 = arith.addf %240, %10 : vector<16x16xf32>
    %cst_103 = arith.constant dense<0xFF800000> : vector<16xf32>
    %242 = vector.multi_reduction <maximumf>, %241, %cst_103 [1] : vector<16x16xf32> to vector<16xf32>
    %243 = vector.shape_cast %242 : vector<16xf32> to vector<16x1xf32>
    %244 = vector.broadcast %243 : vector<16x1xf32> to vector<16x16xf32>
    %245 = arith.subf %241, %244 : vector<16x16xf32>
    %246 = math.exp %245 : vector<16x16xf32>
    %cst_104 = arith.constant dense<0.000000e+00> : vector<16xf32>
    %247 = vector.multi_reduction <add>, %246, %cst_104 [1] : vector<16x16xf32> to vector<16xf32>
    %248 = vector.shape_cast %247 : vector<16xf32> to vector<16x1xf32>
    %249 = tpu.reciprocal %248 {approx = true} : vector<16x1xf32> -> vector<16x1xf32>
    %250 = vector.broadcast %249 : vector<16x1xf32> to vector<16x16xf32>
    %251 = arith.mulf %246, %250 : vector<16x16xf32>
    %cst_105 = arith.constant dense<0.000000e+00> : vector<16x8xf32>
    %252 = tpu.matmul %251, %237, %cst_105 {dimension_numbers = #tpu.dot_dimension_numbers<[1], [0], [0], [1], [0, 0, 1, 1], [], []>} : vector<16x16xf32>, vector<16x8xf32>, vector<16x8xf32> -> vector<16x8xf32>
    %253 = vector.extract_strided_slice %198 {offsets = [0, 24], sizes = [16, 8], strides = [1, 1]} : vector<16x96xf32> to vector<16x8xf32>
    %254 = vector.extract_strided_slice %198 {offsets = [0, 56], sizes = [16, 8], strides = [1, 1]} : vector<16x96xf32> to vector<16x8xf32>
    %255 = vector.extract_strided_slice %198 {offsets = [0, 88], sizes = [16, 8], strides = [1, 1]} : vector<16x96xf32> to vector<16x8xf32>
    %cst_106 = arith.constant dense<0.000000e+00> : vector<16x16xf32>
    %256 = tpu.matmul %253, %254, %cst_106 {dimension_numbers = #tpu.dot_dimension_numbers<[1], [1], [0], [0], [0, 0, 1, 0], [], []>} : vector<16x8xf32>, vector<16x8xf32>, vector<16x16xf32> -> vector<16x16xf32>
    %cst_107 = arith.constant 0.176776692 : f32
    %257 = vector.broadcast %cst_107 : f32 to vector<16x16xf32>
    %258 = arith.mulf %256, %257 : vector<16x16xf32>
    %259 = arith.addf %258, %10 : vector<16x16xf32>
    %cst_108 = arith.constant dense<0xFF800000> : vector<16xf32>
    %260 = vector.multi_reduction <maximumf>, %259, %cst_108 [1] : vector<16x16xf32> to vector<16xf32>
    %261 = vector.shape_cast %260 : vector<16xf32> to vector<16x1xf32>
    %262 = vector.broadcast %261 : vector<16x1xf32> to vector<16x16xf32>
    %263 = arith.subf %259, %262 : vector<16x16xf32>
    %264 = math.exp %263 : vector<16x16xf32>
    %cst_109 = arith.constant dense<0.000000e+00> : vector<16xf32>
    %265 = vector.multi_reduction <add>, %264, %cst_109 [1] : vector<16x16xf32> to vector<16xf32>
    %266 = vector.shape_cast %265 : vector<16xf32> to vector<16x1xf32>
    %267 = tpu.reciprocal %266 {approx = true} : vector<16x1xf32> -> vector<16x1xf32>
    %268 = vector.broadcast %267 : vector<16x1xf32> to vector<16x16xf32>
    %269 = arith.mulf %264, %268 : vector<16x16xf32>
    %cst_110 = arith.constant dense<0.000000e+00> : vector<16x8xf32>
    %270 = tpu.matmul %269, %255, %cst_110 {dimension_numbers = #tpu.dot_dimension_numbers<[1], [0], [0], [1], [0, 0, 1, 1], [], []>} : vector<16x16xf32>, vector<16x8xf32>, vector<16x8xf32> -> vector<16x8xf32>
    %271 = tpu.concatenate %216, %234, %252, %270 in 1 : vector<16x8xf32>, vector<16x8xf32>, vector<16x8xf32>, vector<16x8xf32> -> vector<16x32xf32>
    %c1_111 = arith.constant 1 : index
    %c0_112 = arith.constant 0 : index
    %c0_113 = arith.constant 0 : index
    %272 = vector.load %arg7[%c1_111, %c0_112, %c0_113] : memref<2x32x32xf32, #tpu.memory_space<vmem>>, vector<1x32x32xf32>
    %273 = vector.shape_cast %272 : vector<1x32x32xf32> to vector<32x32xf32>
    %cst_114 = arith.constant dense<0.000000e+00> : vector<16x32xf32>
    %274 = tpu.matmul %271, %273, %cst_114 {dimension_numbers = #tpu.dot_dimension_numbers<[1], [0], [0], [1], [0, 0, 1, 1], [], []>} : vector<16x32xf32>, vector<32x32xf32>, vector<16x32xf32> -> vector<16x32xf32>
    %c1_115 = arith.constant 1 : index
    %c0_116 = arith.constant 0 : index
    %c0_117 = arith.constant 0 : index
    %275 = vector.load %arg8[%c1_115, %c0_116, %c0_117] : memref<2x1x32xf32, #tpu.memory_space<vmem>>, vector<1x1x32xf32>
    %276 = vector.shape_cast %275 : vector<1x1x32xf32> to vector<1x32xf32>
    %277 = vector.broadcast %276 : vector<1x32xf32> to vector<16x32xf32>
    %278 = arith.addf %274, %277 : vector<16x32xf32>
    %279 = arith.addf %169, %278 : vector<16x32xf32>
    %c1_118 = arith.constant 1 : index
    %c0_119 = arith.constant 0 : index
    %c0_120 = arith.constant 0 : index
    %280 = vector.load %arg9[%c1_118, %c0_119, %c0_120] : memref<2x1x32xf32, #tpu.memory_space<vmem>>, vector<1x1x32xf32>
    %281 = vector.shape_cast %280 : vector<1x1x32xf32> to vector<1x32xf32>
    %c1_121 = arith.constant 1 : index
    %c0_122 = arith.constant 0 : index
    %c0_123 = arith.constant 0 : index
    %282 = vector.load %arg10[%c1_121, %c0_122, %c0_123] : memref<2x1x32xf32, #tpu.memory_space<vmem>>, vector<1x1x32xf32>
    %283 = vector.shape_cast %282 : vector<1x1x32xf32> to vector<1x32xf32>
    %cst_124 = arith.constant dense<0.000000e+00> : vector<16xf32>
    %284 = vector.multi_reduction <add>, %279, %cst_124 [1] : vector<16x32xf32> to vector<16xf32>
    %285 = vector.shape_cast %284 : vector<16xf32> to vector<16x1xf32>
    %cst_125 = arith.constant 3.200000e+01 : f32
    %286 = vector.broadcast %cst_125 : f32 to vector<16x1xf32>
    %287 = arith.divf %285, %286 : vector<16x1xf32>
    %288 = vector.broadcast %287 : vector<16x1xf32> to vector<16x32xf32>
    %289 = arith.subf %279, %288 : vector<16x32xf32>
    %290 = arith.mulf %289, %289 : vector<16x32xf32>
    %cst_126 = arith.constant dense<0.000000e+00> : vector<16xf32>
    %291 = vector.multi_reduction <add>, %290, %cst_126 [1] : vector<16x32xf32> to vector<16xf32>
    %292 = vector.shape_cast %291 : vector<16xf32> to vector<16x1xf32>
    %cst_127 = arith.constant 3.200000e+01 : f32
    %293 = vector.broadcast %cst_127 : f32 to vector<16x1xf32>
    %294 = arith.divf %292, %293 : vector<16x1xf32>
    %295 = vector.broadcast %287 : vector<16x1xf32> to vector<16x32xf32>
    %296 = arith.subf %279, %295 : vector<16x32xf32>
    %cst_128 = arith.constant 9.99999974E-6 : f32
    %297 = vector.broadcast %cst_128 : f32 to vector<16x1xf32>
    %298 = arith.addf %294, %297 : vector<16x1xf32>
    %299 = math.rsqrt %298 : vector<16x1xf32>
    %300 = vector.broadcast %299 : vector<16x1xf32> to vector<16x32xf32>
    %301 = arith.mulf %296, %300 : vector<16x32xf32>
    %302 = vector.broadcast %281 : vector<1x32xf32> to vector<16x32xf32>
    %303 = arith.mulf %301, %302 : vector<16x32xf32>
    %304 = vector.broadcast %283 : vector<1x32xf32> to vector<16x32xf32>
    %305 = arith.addf %303, %304 : vector<16x32xf32>
    %c1_129 = arith.constant 1 : index
    %c0_130 = arith.constant 0 : index
    %c0_131 = arith.constant 0 : index
    %306 = vector.load %arg11[%c1_129, %c0_130, %c0_131] : memref<2x32x128xf32, #tpu.memory_space<vmem>>, vector<1x32x128xf32>
    %307 = vector.shape_cast %306 : vector<1x32x128xf32> to vector<32x128xf32>
    %cst_132 = arith.constant dense<0.000000e+00> : vector<16x128xf32>
    %308 = tpu.matmul %305, %307, %cst_132 {dimension_numbers = #tpu.dot_dimension_numbers<[1], [0], [0], [1], [0, 0, 1, 1], [], []>} : vector<16x32xf32>, vector<32x128xf32>, vector<16x128xf32> -> vector<16x128xf32>
    %c1_133 = arith.constant 1 : index
    %c0_134 = arith.constant 0 : index
    %c0_135 = arith.constant 0 : index
    %309 = vector.load %arg12[%c1_133, %c0_134, %c0_135] : memref<2x1x128xf32, #tpu.memory_space<vmem>>, vector<1x1x128xf32>
    %310 = vector.shape_cast %309 : vector<1x1x128xf32> to vector<1x128xf32>
    %311 = vector.broadcast %310 : vector<1x128xf32> to vector<16x128xf32>
    %312 = arith.addf %308, %311 : vector<16x128xf32>
    %cst_136 = arith.constant 5.000000e-01 : f32
    %313 = vector.broadcast %cst_136 : f32 to vector<16x128xf32>
    %314 = arith.mulf %313, %312 : vector<16x128xf32>
    %cst_137 = arith.constant 0.707106769 : f32
    %315 = vector.broadcast %cst_137 : f32 to vector<16x128xf32>
    %316 = arith.mulf %312, %315 : vector<16x128xf32>
    %317 = math.erf %316 : vector<16x128xf32>
    %cst_138 = arith.constant 1.000000e+00 : f32
    %318 = vector.broadcast %cst_138 : f32 to vector<16x128xf32>
    %319 = arith.addf %318, %317 : vector<16x128xf32>
    %320 = arith.mulf %314, %319 : vector<16x128xf32>
    %c1_139 = arith.constant 1 : index
    %c0_140 = arith.constant 0 : index
    %c0_141 = arith.constant 0 : index
    %321 = vector.load %arg13[%c1_139, %c0_140, %c0_141] : memref<2x128x32xf32, #tpu.memory_space<vmem>>, vector<1x128x32xf32>
    %322 = vector.shape_cast %321 : vector<1x128x32xf32> to vector<128x32xf32>
    %cst_142 = arith.constant dense<0.000000e+00> : vector<16x32xf32>
    %323 = tpu.matmul %320, %322, %cst_142 {dimension_numbers = #tpu.dot_dimension_numbers<[1], [0], [0], [1], [0, 0, 1, 1], [], []>} : vector<16x128xf32>, vector<128x32xf32>, vector<16x32xf32> -> vector<16x32xf32>
    %324 = arith.addf %279, %323 : vector<16x32xf32>
    %c1_143 = arith.constant 1 : index
    %c0_144 = arith.constant 0 : index
    %c0_145 = arith.constant 0 : index
    %325 = vector.load %arg14[%c1_143, %c0_144, %c0_145] : memref<2x1x32xf32, #tpu.memory_space<vmem>>, vector<1x1x32xf32>
    %326 = vector.shape_cast %325 : vector<1x1x32xf32> to vector<1x32xf32>
    %327 = vector.broadcast %326 : vector<1x32xf32> to vector<16x32xf32>
    %328 = arith.addf %324, %327 : vector<16x32xf32>
    %c0_146 = arith.constant 0 : index
    %c0_147 = arith.constant 0 : index
    %329 = vector.load %arg15[%c0_146, %c0_147] : memref<1x32xf32, #tpu.memory_space<vmem>>, vector<1x32xf32>
    %c0_148 = arith.constant 0 : index
    %c0_149 = arith.constant 0 : index
    %330 = vector.load %arg16[%c0_148, %c0_149] : memref<1x32xf32, #tpu.memory_space<vmem>>, vector<1x32xf32>
    %cst_150 = arith.constant dense<0.000000e+00> : vector<16xf32>
    %331 = vector.multi_reduction <add>, %328, %cst_150 [1] : vector<16x32xf32> to vector<16xf32>
    %332 = vector.shape_cast %331 : vector<16xf32> to vector<16x1xf32>
    %cst_151 = arith.constant 3.200000e+01 : f32
    %333 = vector.broadcast %cst_151 : f32 to vector<16x1xf32>
    %334 = arith.divf %332, %333 : vector<16x1xf32>
    %335 = vector.broadcast %334 : vector<16x1xf32> to vector<16x32xf32>
    %336 = arith.subf %328, %335 : vector<16x32xf32>
    %337 = arith.mulf %336, %336 : vector<16x32xf32>
    %cst_152 = arith.constant dense<0.000000e+00> : vector<16xf32>
    %338 = vector.multi_reduction <add>, %337, %cst_152 [1] : vector<16x32xf32> to vector<16xf32>
    %339 = vector.shape_cast %338 : vector<16xf32> to vector<16x1xf32>
    %cst_153 = arith.constant 3.200000e+01 : f32
    %340 = vector.broadcast %cst_153 : f32 to vector<16x1xf32>
    %341 = arith.divf %339, %340 : vector<16x1xf32>
    %342 = vector.broadcast %334 : vector<16x1xf32> to vector<16x32xf32>
    %343 = arith.subf %328, %342 : vector<16x32xf32>
    %cst_154 = arith.constant 9.99999974E-6 : f32
    %344 = vector.broadcast %cst_154 : f32 to vector<16x1xf32>
    %345 = arith.addf %341, %344 : vector<16x1xf32>
    %346 = math.rsqrt %345 : vector<16x1xf32>
    %347 = vector.broadcast %346 : vector<16x1xf32> to vector<16x32xf32>
    %348 = arith.mulf %343, %347 : vector<16x32xf32>
    %349 = vector.broadcast %329 : vector<1x32xf32> to vector<16x32xf32>
    %350 = arith.mulf %348, %349 : vector<16x32xf32>
    %351 = vector.broadcast %330 : vector<1x32xf32> to vector<16x32xf32>
    %352 = arith.addf %350, %351 : vector<16x32xf32>
    %c0_155 = arith.constant 0 : index
    %c0_156 = arith.constant 0 : index
    %353 = vector.load %arg17[%c0_155, %c0_156] : memref<32x128xf32, #tpu.memory_space<vmem>>, vector<32x128xf32>
    %cst_157 = arith.constant dense<0.000000e+00> : vector<16x128xf32>
    %354 = tpu.matmul %352, %353, %cst_157 {dimension_numbers = #tpu.dot_dimension_numbers<[1], [0], [0], [1], [0, 0, 1, 1], [], []>} : vector<16x32xf32>, vector<32x128xf32>, vector<16x128xf32> -> vector<16x128xf32>
    %c0_158 = arith.constant 0 : index
    %c0_159 = arith.constant 0 : index
    %355 = vector.load %arg18[%c0_158, %c0_159] : memref<1x128xf32, #tpu.memory_space<vmem>>, vector<1x128xf32>
    %356 = vector.broadcast %355 : vector<1x128xf32> to vector<16x128xf32>
    %357 = arith.addf %354, %356 : vector<16x128xf32>
    %c0_160 = arith.constant 0 : index
    %c0_161 = arith.constant 0 : index
    %358 = vector.load %arg19[%c0_160, %c0_161] : memref<16x128xf32, #tpu.memory_space<vmem>>, vector<16x128xf32>
    tpu.vector_store %arg19[%c0_160, %c0_161], %357 {strides = array<i32>} : memref<16x128xf32, #tpu.memory_space<vmem>>, vector<16x128xf32>,
    return
  }
}

</mosaic_0001>

<llo_original>
// kernel: tpu_custom_call.1
$region0: #{tpu_custom_call.1}
  #allocation0 [shape = 'u32[]', space=smem, size = 0x4, offset = 0x4, fixed_abs, tag = 'smem constant byte address 0x4 - core index']
  #allocation1 [shape = 'u32[144,128]{1,0:T(1,128)}', space=vmem, size = 0x12000, scoped, tag = 'internal scratch']
  %s0 = inlined_call_operand.vmem [shape: s32[16,1], index: 0, kind: input, shape index: {}]
  %s1 = inlined_call_operand.vmem [shape: f32[16,32], index: 1, kind: input, shape index: {}]
  %s2 = inlined_call_operand.vmem [shape: f32[16,16], index: 2, kind: input, shape index: {}]
  %s3 = inlined_call_operand.vmem [shape: f32[128,32], index: 3, kind: input, shape index: {}]
  %s4 = inlined_call_operand.vmem [shape: f32[2,1,32], index: 4, kind: input, shape index: {}]
  %s5 = inlined_call_operand.vmem [shape: f32[2,1,32], index: 5, kind: input, shape index: {}]
  %s6 = inlined_call_operand.vmem [shape: f32[2,32,96], index: 6, kind: input, shape index: {}]
  %s7 = inlined_call_operand.vmem [shape: f32[2,32,32], index: 7, kind: input, shape index: {}]
  %s8 = inlined_call_operand.vmem [shape: f32[2,1,32], index: 8, kind: input, shape index: {}]
  %s9 = inlined_call_operand.vmem [shape: f32[2,1,32], index: 9, kind: input, shape index: {}]
  %s10 = inlined_call_operand.vmem [shape: f32[2,1,32], index: 10, kind: input, shape index: {}]
  %s11 = inlined_call_operand.vmem [shape: f32[2,32,128], index: 11, kind: input, shape index: {}]
  %s12 = inlined_call_operand.vmem [shape: f32[2,1,128], index: 12, kind: input, shape index: {}]
  %s13 = inlined_call_operand.vmem [shape: f32[2,128,32], index: 13, kind: input, shape index: {}]
  %s14 = inlined_call_operand.vmem [shape: f32[2,1,32], index: 14, kind: input, shape index: {}]
  %s15 = inlined_call_operand.vmem [shape: f32[1,32], index: 15, kind: input, shape index: {}]
  %s16 = inlined_call_operand.vmem [shape: f32[1,32], index: 16, kind: input, shape index: {}]
  %s17 = inlined_call_operand.vmem [shape: f32[32,128], index: 17, kind: input, shape index: {}]
  %s18 = inlined_call_operand.vmem [shape: f32[1,128], index: 18, kind: input, shape index: {}]
  %s19 = inlined_call_operand.hbm [shape: f32[16,128], index: 19, kind: output, shape index: {}]
  %s20 = sld [smem:[#allocation0]]
  $region86: #{tpu_custom_call.1} parent=0
    _
  %s22 = ssub.s32 1, %s20
  %s23 = scalar_select 0, %s22, %s20
  $region1: #{tpu_custom_call.1} parent=0
    #allocation2 [shape = 'u8[8192]{0}', space=vmem, size = 0x2000, scoped, tag = 'output window, operand 0, single buffered']
    #allocation3 [shape = 's32[1]{0}', space=sflag, size = 0x4, scoped, tag = 'scoped memory for tpu_custom_call.1']
    %24 = vsyncpa [#allocation3], 0
    // Predicated region
    $region2: #{tpu_custom_call.1} parent=1 // pred_check
      _
    $region3: #{tpu_custom_call.1} parent=1 // pred_check_branch
      %26 = sbr.rel (0) target = $region5
    $region4: #{tpu_custom_call.1} parent=1 // pred_region
      _
    $region5: #{tpu_custom_call.1} parent=1 // pred_fallthru
      _
    // Predicated region
    $region6: #{tpu_custom_call.1} parent=1 // pred_check
      _
    $region7: #{tpu_custom_call.1} parent=1 // pred_check_branch
      %28 = sbr.rel (0) target = $region9
    $region8: #{tpu_custom_call.1} parent=1 // pred_region
      _
    $region9: #{tpu_custom_call.1} parent=1 // pred_fallthru
      _
    // Predicated region
    $region10: #{tpu_custom_call.1} parent=1 // pred_check
      _
    $region11: #{tpu_custom_call.1} parent=1 // pred_check_branch
      %30 = sbr.rel (0) target = $region13
    $region12: #{tpu_custom_call.1} parent=1 // pred_region
      _
    $region13: #{tpu_custom_call.1} parent=1 // pred_fallthru
      _
    // Predicated region
    $region14: #{tpu_custom_call.1} parent=1 // pred_check
      _
    $region15: #{tpu_custom_call.1} parent=1 // pred_check_branch
      %32 = sbr.rel (0) target = $region17
    $region16: #{tpu_custom_call.1} parent=1 // pred_region
      _
    $region17: #{tpu_custom_call.1} parent=1 // pred_fallthru
      _
    // Predicated region
    $region18: #{tpu_custom_call.1} parent=1 // pred_check
      _
    $region19: #{tpu_custom_call.1} parent=1 // pred_check_branch
      %34 = sbr.rel (0) target = $region21
    $region20: #{tpu_custom_call.1} parent=1 // pred_region
      _
    $region21: #{tpu_custom_call.1} parent=1 // pred_fallthru
      _
    // Predicated region
    $region22: #{tpu_custom_call.1} parent=1 // pred_check
      _
    $region23: #{tpu_custom_call.1} parent=1 // pred_check_branch
      %36 = sbr.rel (0) target = $region25
    $region24: #{tpu_custom_call.1} parent=1 // pred_region
      _
    $region25: #{tpu_custom_call.1} parent=1 // pred_fallthru
      _
    // Predicated region
    $region26: #{tpu_custom_call.1} parent=1 // pred_check
      _
    $region27: #{tpu_custom_call.1} parent=1 // pred_check_branch
      %38 = sbr.rel (0) target = $region29
    $region28: #{tpu_custom_call.1} parent=1 // pred_region
      _
    $region29: #{tpu_custom_call.1} parent=1 // pred_fallthru
      _
    // Predicated region
    $region30: #{tpu_custom_call.1} parent=1 // pred_check
      _
    $region31: #{tpu_custom_call.1} parent=1 // pred_check_branch
      %40 = sbr.rel (0) target = $region33
    $region32: #{tpu_custom_call.1} parent=1 // pred_region
      _
    $region33: #{tpu_custom_call.1} parent=1 // pred_fallthru
      _
    // Predicated region
    $region34: #{tpu_custom_call.1} parent=1 // pred_check
      _
    $region35: #{tpu_custom_call.1} parent=1 // pred_check_branch
      %42 = sbr.rel (0) target = $region37
    $region36: #{tpu_custom_call.1} parent=1 // pred_region
      _
    $region37: #{tpu_custom_call.1} parent=1 // pred_fallthru
      _
    // Predicated region
    $region38: #{tpu_custom_call.1} parent=1 // pred_check
      _
    $region39: #{tpu_custom_call.1} parent=1 // pred_check_branch
      %44 = sbr.rel (0) target = $region41
    $region40: #{tpu_custom_call.1} parent=1 // pred_region
      _
    $region41: #{tpu_custom_call.1} parent=1 // pred_fallthru
      _
    // Predicated region
    $region42: #{tpu_custom_call.1} parent=1 // pred_check
      _
    $region43: #{tpu_custom_call.1} parent=1 // pred_check_branch
      %46 = sbr.rel (0) target = $region45
    $region44: #{tpu_custom_call.1} parent=1 // pred_region
      _
    $region45: #{tpu_custom_call.1} parent=1 // pred_fallthru
      _
    // Predicated region
    $region46: #{tpu_custom_call.1} parent=1 // pred_check
      _
    $region47: #{tpu_custom_call.1} parent=1 // pred_check_branch
      %48 = sbr.rel (0) target = $region49
    $region48: #{tpu_custom_call.1} parent=1 // pred_region
      _
    $region49: #{tpu_custom_call.1} parent=1 // pred_fallthru
      _
    // Predicated region
    $region50: #{tpu_custom_call.1} parent=1 // pred_check
      _
    $region51: #{tpu_custom_call.1} parent=1 // pred_check_branch
      %50 = sbr.rel (0) target = $region53
    $region52: #{tpu_custom_call.1} parent=1 // pred_region
      _
    $region53: #{tpu_custom_call.1} parent=1 // pred_fallthru
      _
    // Predicated region
    $region54: #{tpu_custom_call.1} parent=1 // pred_check
      _
    $region55: #{tpu_custom_call.1} parent=1 // pred_check_branch
      %52 = sbr.rel (0) target = $region57
    $region56: #{tpu_custom_call.1} parent=1 // pred_region
      _
    $region57: #{tpu_custom_call.1} parent=1 // pred_fallthru
      _
    // Predicated region
    $region58: #{tpu_custom_call.1} parent=1 // pred_check
      _
    $region59: #{tpu_custom_call.1} parent=1 // pred_check_branch
      %54 = sbr.rel (0) target = $region61
    $region60: #{tpu_custom_call.1} parent=1 // pred_region
      _
    $region61: #{tpu_custom_call.1} parent=1 // pred_fallthru
      _
    // Predicated region
    $region62: #{tpu_custom_call.1} parent=1 // pred_check
      _
    $region63: #{tpu_custom_call.1} parent=1 // pred_check_branch
      %56 = sbr.rel (0) target = $region65
    $region64: #{tpu_custom_call.1} parent=1 // pred_region
      _
    $region65: #{tpu_custom_call.1} parent=1 // pred_fallthru
      _
    // Predicated region
    $region66: #{tpu_custom_call.1} parent=1 // pred_check
      _
    $region67: #{tpu_custom_call.1} parent=1 // pred_check_branch
      %58 = sbr.rel (0) target = $region69
    $region68: #{tpu_custom_call.1} parent=1 // pred_region
      _
    $region69: #{tpu_custom_call.1} parent=1 // pred_fallthru
      _
    // Predicated region
    $region70: #{tpu_custom_call.1} parent=1 // pred_check
      _
    $region71: #{tpu_custom_call.1} parent=1 // pred_check_branch
      %60 = sbr.rel (0) target = $region73
    $region72: #{tpu_custom_call.1} parent=1 // pred_region
      _
    $region73: #{tpu_custom_call.1} parent=1 // pred_fallthru
      _
    // Predicated region
    $region74: #{tpu_custom_call.1} parent=1 // pred_check
      _
    $region75: #{tpu_custom_call.1} parent=1 // pred_check_branch
      %62 = sbr.rel (0) target = $region77
    $region76: #{tpu_custom_call.1} parent=1 // pred_region
      _
    $region77: #{tpu_custom_call.1} parent=1 // pred_fallthru
      _
    %v63 = vld [vmem:[%s0] sm:$0xff]
    %v64 = vld [vmem:[%s0 + $0x8] sm:$0xff]
    %v65 = vlaneseq
    %v66 = vand.u32 %v65, 127
    %67 = vset.pattern.permute.xlu0 0
    %68 = vperm.xlu0 %67, %v63
    %v69 = vpop.permute.xlu0 %68
    %70 = vset.pattern.permute.xlu0 0
    %71 = vperm.xlu0 %70, %v64
    %v72 = vpop.permute.xlu0 %71
    %vm73 = vcmp.eq.s32.totalorder %v66, %v69
    %vm74 = vcmp.eq.s32.totalorder %v66, %v72
    %v75 = vsel %vm73, 1, 0
    %v76 = vsel %vm74, 1, 0
    %v77 = vcvt.s32.f32 %v75
    %v78 = vcvt.s32.f32 %v76
    %v79 = vld [vmem:[%s3] sm:$0xff]
    %v80 = vld [vmem:[%s3 + $0x8] sm:$0xff]
    %v81 = vld [vmem:[%s3 + $0x10] sm:$0xff]
    %v82 = vld [vmem:[%s3 + $0x18] sm:$0xff]
    %v83 = vld [vmem:[%s3 + $0x20] sm:$0xff]
    %v84 = vld [vmem:[%s3 + $0x28] sm:$0xff]
    %v85 = vld [vmem:[%s3 + $0x30] sm:$0xff]
    %v86 = vld [vmem:[%s3 + $0x38] sm:$0xff]
    %v87 = vld [vmem:[%s3 + $0x40] sm:$0xff]
    %v88 = vld [vmem:[%s3 + $0x48] sm:$0xff]
    %v89 = vld [vmem:[%s3 + $0x50] sm:$0xff]
    %v90 = vld [vmem:[%s3 + $0x58] sm:$0xff]
    %v91 = vld [vmem:[%s3 + $0x60] sm:$0xff]
    %v92 = vld [vmem:[%s3 + $0x68] sm:$0xff]
    %v93 = vld [vmem:[%s3 + $0x70] sm:$0xff]
    %v94 = vld [vmem:[%s3 + $0x78] sm:$0xff]
    %v95 = vld [vmem:[%s1] sm:$0xff]
    %v96 = vld [vmem:[%s1 + $0x8] sm:$0xff]
    %97 = vmatprep.subr.mxu0 0.0
    %98 = vmatpush1.msra.mxu0 %v94
    %99 = vmatprep.subr.mxu0 0.0
    %100 = vmatpush1.msra.mxu0 %v93
    %101 = vmatprep.subr.mxu0 0.0
    %102 = vmatpush1.msra.mxu0 %v92
    %103 = vmatprep.subr.mxu0 0.0
    %104 = vmatpush1.msra.mxu0 %v91
    %105 = vmatprep.subr.mxu0 0.0
    %106 = vmatpush1.msra.mxu0 %v90
    %107 = vmatprep.subr.mxu0 0.0
    %108 = vmatpush1.msra.mxu0 %v89
    %109 = vmatprep.subr.mxu0 0.0
    %110 = vmatpush1.msra.mxu0 %v88
    %111 = vmatprep.subr.mxu0 0.0
    %112 = vmatpush1.msra.mxu0 %v87
    %113 = vmatprep.subr.mxu0 0.0
    %114 = vmatpush1.msra.mxu0 %v86
    %115 = vmatprep.subr.mxu0 0.0
    %116 = vmatpush1.msra.mxu0 %v85
    %117 = vmatprep.subr.mxu0 0.0
    %118 = vmatpush1.msra.mxu0 %v84
    %119 = vmatprep.subr.mxu0 0.0
    %120 = vmatpush1.msra.mxu0 %v83
    %121 = vmatprep.subr.mxu0 0.0
    %122 = vmatpush1.msra.mxu0 %v82
    %123 = vmatprep.subr.mxu0 0.0
    %124 = vmatpush1.msra.mxu0 %v81
    %125 = vmatprep.subr.mxu0 0.0
    %126 = vmatpush1.msra.mxu0 %v80
    %127 = vmatprep.subr.mxu0 0.0
    %128 = vmatpush1.msra.mxu0 %v79
    %129 = vmatprep.subr.mxu0 0.0
    %130 = vmatpush2.msra.mxu0 0.0
    %131 = vmatprep.subr.mxu0 0.0
    %132 = vmatpush2.msra.mxu0 0.0
    %133 = vmatprep.subr.mxu0 0.0
    %134 = vmatpush2.msra.mxu0 0.0
    %135 = vmatprep.subr.mxu0 0.0
    %136 = vmatpush2.msra.mxu0 0.0
    %137 = vmatprep.subr.mxu0 0.0
    %138 = vmatpush2.msra.mxu0 0.0
    %139 = vmatprep.subr.mxu0 0.0
    %140 = vmatpush2.msra.mxu0 0.0
    %141 = vmatprep.subr.mxu0 0.0
    %142 = vmatpush2.msra.mxu0 0.0
    %143 = vmatprep.subr.mxu0 0.0
    %144 = vmatpush2.msra.mxu0 0.0
    %145 = vmatprep.subr.mxu0 0.0
    %146 = vmatpush2.msra.mxu0 0.0
    %147 = vmatprep.subr.mxu0 0.0
    %148 = vmatpush2.msra.mxu0 0.0
    %149 = vmatprep.subr.mxu0 0.0
    %150 = vmatpush2.msra.mxu0 0.0
    %151 = vmatprep.subr.mxu0 0.0
    %152 = vmatpush2.msra.mxu0 0.0
    %153 = vmatprep.subr.mxu0 0.0
    %154 = vmatpush2.msra.mxu0 0.0
    %155 = vmatprep.subr.mxu0 0.0
    %156 = vmatpush2.msra.mxu0 0.0
    %157 = vmatprep.subr.mxu0 0.0
    %158 = vmatpush2.msra.mxu0 0.0
    %159 = vmatprep.subr.mxu0 0.0
    %160 = vmatpush2.msra.mxu0 0.0
    %161 = vmatprep.mubr.f32.mxu0 0.0
    %162 = vmatmul.mubr.f32.gmra.mxu0 %v77
    %v163 = vpop.f32.mrf.mxu0
    %v164 = vadd.f32 %v95, %v163
    %v165 = vpop.f32.mrf.mxu0
    %166 = vmatprep.mubr.f32.mxu0 0.0
    %167 = vmatmul.mubr.f32.gmra.mxu0 %v78
    %v168 = vpop.f32.mrf.mxu0
    %v169 = vadd.f32 %v96, %v168
    %v170 = vpop.f32.mrf.mxu0
    %171 = vdwg.mxu0
    %v172 = vld [vmem:[%s2] sm:$0xff]
    %v173 = vld [vmem:[%s2 + $0x8] sm:$0xff]
    %v174 = vld [vmem:[%s4] sm:$0x1]
    %v175 = vld [vmem:[%s5] sm:$0x1]
    %vm176 = vcmask 261120
    %v177 = vsel %vm176, %v164, 0.0
    %178 = vadd.xlane.f32.xlu0 %v177
    %v179 = vpop.xlane.xlu0 %178
    %v180 = vsel %vm176, %v169, 0.0
    %181 = vadd.xlane.f32.xlu0 %v180
    %v182 = vpop.xlane.xlu0 %181
    %v183 = vrcp.pop 32.0
    %v184 = vmul.f32 %v179, %v183
    %v185 = vmul.f32 %v182, %v183
    %v186 = vsub.f32 %v164, %v184
    %v187 = vsub.f32 %v169, %v185
    %v188 = vmul.f32 %v186, %v186
    %v189 = vmul.f32 %v187, %v187
    %v190 = vsel %vm176, %v188, 0.0
    %191 = vadd.xlane.f32.xlu0 %v190
    %v192 = vpop.xlane.xlu0 %191
    %v193 = vsel %vm176, %v189, 0.0
    %194 = vadd.xlane.f32.xlu0 %v193
    %v195 = vpop.xlane.xlu0 %194
    %v196 = vmul.f32 %v192, %v183
    %v197 = vmul.f32 %v195, %v183
    %v198 = vadd.f32 %v196, 1e-05
    %v199 = vadd.f32 %v197, 1e-05
    %v200 = vrsqrt.pop %v198
    %v201 = vrsqrt.pop %v199
    %v202 = vmul.f32 %v186, %v200
    %v203 = vmul.f32 %v187, %v201
    %v205 = vlaneseq
    %v206 = vshrl.u32 %v205, 7
    %v207 = vsub.s32 0, %v206
    %v208 = vrot.slane %v174, %v207
    %v210 = vmul.f32 %v202, %v208
    %v211 = vmul.f32 %v203, %v208
    %v213 = vlaneseq
    %v214 = vshrl.u32 %v213, 7
    %v215 = vsub.s32 0, %v214
    %v216 = vrot.slane %v175, %v215
    %v218 = vadd.f32 %v210, %v216
    %v219 = vadd.f32 %v211, %v216
    %v220 = vld [vmem:[%s6] sm:$0xff]
    %v221 = vld [vmem:[%s6 + $0x8] sm:$0xff]
    %v222 = vld [vmem:[%s6 + $0x10] sm:$0xff]
    %v223 = vld [vmem:[%s6 + $0x18] sm:$0xff]
    %v225 = vsel %vm176, %v218, 0
    %v228 = vsel %vm176, %v219, 0
    %230 = vmatprep.subr.mxu0 0.0
    %231 = vmatpush1.msra.mxu0 0.0
    %232 = vmatprep.subr.mxu0 0.0
    %233 = vmatpush1.msra.mxu0 0.0
    %234 = vmatprep.subr.mxu0 0.0
    %235 = vmatpush1.msra.mxu0 0.0
    %236 = vmatprep.subr.mxu0 0.0
    %237 = vmatpush1.msra.mxu0 0.0
    %238 = vmatprep.subr.mxu0 0.0
    %239 = vmatpush1.msra.mxu0 0.0
    %240 = vmatprep.subr.mxu0 0.0
    %241 = vmatpush1.msra.mxu0 0.0
    %242 = vmatprep.subr.mxu0 0.0
    %243 = vmatpush1.msra.mxu0 0.0
    %244 = vmatprep.subr.mxu0 0.0
    %245 = vmatpush1.msra.mxu0 0.0
    %246 = vmatprep.subr.mxu0 0.0
    %247 = vmatpush1.msra.mxu0 0.0
    %248 = vmatprep.subr.mxu0 0.0
    %249 = vmatpush1.msra.mxu0 0.0
    %250 = vmatprep.subr.mxu0 0.0
    %251 = vmatpush1.msra.mxu0 0.0
    %252 = vmatprep.subr.mxu0 0.0
    %253 = vmatpush1.msra.mxu0 0.0
    %254 = vmatprep.subr.mxu0 0.0
    %255 = vmatpush1.msra.mxu0 %v223
    %256 = vmatprep.subr.mxu0 0.0
    %257 = vmatpush1.msra.mxu0 %v222
    %258 = vmatprep.subr.mxu0 0.0
    %259 = vmatpush1.msra.mxu0 %v221
    %260 = vmatprep.subr.mxu0 0.0
    %261 = vmatpush1.msra.mxu0 %v220
    %262 = vmatprep.subr.mxu0 0.0
    %263 = vmatpush2.msra.mxu0 0.0
    %264 = vmatprep.subr.mxu0 0.0
    %265 = vmatpush2.msra.mxu0 0.0
    %266 = vmatprep.subr.mxu0 0.0
    %267 = vmatpush2.msra.mxu0 0.0
    %268 = vmatprep.subr.mxu0 0.0
    %269 = vmatpush2.msra.mxu0 0.0
    %270 = vmatprep.subr.mxu0 0.0
    %271 = vmatpush2.msra.mxu0 0.0
    %272 = vmatprep.subr.mxu0 0.0
    %273 = vmatpush2.msra.mxu0 0.0
    %274 = vmatprep.subr.mxu0 0.0
    %275 = vmatpush2.msra.mxu0 0.0
    %276 = vmatprep.subr.mxu0 0.0
    %277 = vmatpush2.msra.mxu0 0.0
    %278 = vmatprep.subr.mxu0 0.0
    %279 = vmatpush2.msra.mxu0 0.0
    %280 = vmatprep.subr.mxu0 0.0
    %281 = vmatpush2.msra.mxu0 0.0
    %282 = vmatprep.subr.mxu0 0.0
    %283 = vmatpush2.msra.mxu0 0.0
    %284 = vmatprep.subr.mxu0 0.0
    %285 = vmatpush2.msra.mxu0 0.0
    %286 = vmatprep.subr.mxu0 0.0
    %287 = vmatpush2.msra.mxu0 0.0
    %288 = vmatprep.subr.mxu0 0.0
    %289 = vmatpush2.msra.mxu0 0.0
    %290 = vmatprep.subr.mxu0 0.0
    %291 = vmatpush2.msra.mxu0 0.0
    %292 = vmatprep.subr.mxu0 0.0
    %293 = vmatpush2.msra.mxu0 0.0
    %294 = vmatprep.mubr.f32.mxu0 0.0
    %295 = vmatmul.mubr.f32.gmra.mxu0 %v225
    %v296 = vpop.f32.mrf.mxu0
    %v297 = vadd.f32 0.0, %v296
    %v298 = vpop.f32.mrf.mxu0
    %299 = vmatprep.mubr.f32.mxu0 0.0
    %300 = vmatmul.mubr.f32.gmra.mxu0 %v228
    %v301 = vpop.f32.mrf.mxu0
    %v302 = vadd.f32 0.0, %v301
    %v303 = vpop.f32.mrf.mxu0
    %304 = vdwg.mxu0
    %307 = vrot.lane.b32.xlu0 %v297, 96
    %v308 = vpop.permute.xlu0 %307
    %309 = vrot.lane.b32.xlu0 %v302, 96
    %v310 = vpop.permute.xlu0 %309
    %vm311 = vcmask 64512
    %v312 = vsel %vm311, %v297, 0
    %v314 = vsel %vm311, %v302, 0
    %v316 = vsel %vm311, %v308, 0
    %v318 = vsel %vm311, %v310, 0
    %320 = vmatprep.subr.mxu0 0.0
    %321 = vmatpush1.xpose.msra.mxu0 0.0
    %322 = vmatprep.subr.mxu0 0.0
    %323 = vmatpush1.xpose.msra.mxu0 0.0
    %324 = vmatprep.subr.mxu0 0.0
    %325 = vmatpush1.xpose.msra.mxu0 0.0
    %326 = vmatprep.subr.mxu0 0.0
    %327 = vmatpush1.xpose.msra.mxu0 0.0
    %328 = vmatprep.subr.mxu0 0.0
    %329 = vmatpush1.xpose.msra.mxu0 0.0
    %330 = vmatprep.subr.mxu0 0.0
    %331 = vmatpush1.xpose.msra.mxu0 0.0
    %332 = vmatprep.subr.mxu0 0.0
    %333 = vmatpush1.xpose.msra.mxu0 0.0
    %334 = vmatprep.subr.mxu0 0.0
    %335 = vmatpush1.xpose.msra.mxu0 0.0
    %336 = vmatprep.subr.mxu0 0.0
    %337 = vmatpush1.xpose.msra.mxu0 0.0
    %338 = vmatprep.subr.mxu0 0.0
    %339 = vmatpush1.xpose.msra.mxu0 0.0
    %340 = vmatprep.subr.mxu0 0.0
    %341 = vmatpush1.xpose.msra.mxu0 0.0
    %342 = vmatprep.subr.mxu0 0.0
    %343 = vmatpush1.xpose.msra.mxu0 0.0
    %344 = vmatprep.subr.mxu0 0.0
    %345 = vmatpush1.xpose.msra.mxu0 0.0
    %346 = vmatprep.subr.mxu0 0.0
    %347 = vmatpush1.xpose.msra.mxu0 0.0
    %348 = vmatprep.subr.mxu0 0.0
    %349 = vmatpush1.xpose.msra.mxu0 %v318
    %350 = vmatprep.subr.mxu0 0.0
    %351 = vmatpush1.xpose.msra.mxu0 %v316
    %352 = vmatprep.subr.mxu0 0.0
    %353 = vmatpush2.xpose.msra.mxu0 0.0
    %354 = vmatprep.subr.mxu0 0.0
    %355 = vmatpush2.xpose.msra.mxu0 0.0
    %356 = vmatprep.subr.mxu0 0.0
    %357 = vmatpush2.xpose.msra.mxu0 0.0
    %358 = vmatprep.subr.mxu0 0.0
    %359 = vmatpush2.xpose.msra.mxu0 0.0
    %360 = vmatprep.subr.mxu0 0.0
    %361 = vmatpush2.xpose.msra.mxu0 0.0
    %362 = vmatprep.subr.mxu0 0.0
    %363 = vmatpush2.xpose.msra.mxu0 0.0
    %364 = vmatprep.subr.mxu0 0.0
    %365 = vmatpush2.xpose.msra.mxu0 0.0
    %366 = vmatprep.subr.mxu0 0.0
    %367 = vmatpush2.xpose.msra.mxu0 0.0
    %368 = vmatprep.subr.mxu0 0.0
    %369 = vmatpush2.xpose.msra.mxu0 0.0
    %370 = vmatprep.subr.mxu0 0.0
    %371 = vmatpush2.xpose.msra.mxu0 0.0
    %372 = vmatprep.subr.mxu0 0.0
    %373 = vmatpush2.xpose.msra.mxu0 0.0
    %374 = vmatprep.subr.mxu0 0.0
    %375 = vmatpush2.xpose.msra.mxu0 0.0
    %376 = vmatprep.subr.mxu0 0.0
    %377 = vmatpush2.xpose.msra.mxu0 0.0
    %378 = vmatprep.subr.mxu0 0.0
    %379 = vmatpush2.xpose.msra.mxu0 0.0
    %380 = vmatprep.subr.mxu0 0.0
    %381 = vmatpush2.xpose.msra.mxu0 0.0
    %382 = vmatprep.subr.mxu0 0.0
    %383 = vmatpush2.xpose.msra.mxu0 0.0
    %384 = vmatprep.mubr.f32.mxu0 0.0
    %385 = vmatmul.mubr.f32.gmra.mxu0 %v312
    %v386 = vpop.f32.mrf.mxu0
    %v387 = vadd.f32 0.0, %v386
    %v388 = vpop.f32.mrf.mxu0
    %389 = vmatprep.mubr.f32.mxu0 0.0
    %390 = vmatmul.mubr.f32.gmra.mxu0 %v314
    %v391 = vpop.f32.mrf.mxu0
    %v392 = vadd.f32 0.0, %v391
    %v393 = vpop.f32.mrf.mxu0
    %394 = vdwg.mxu0
    %v395 = vmul.f32 %v387, 0.17677669
    %v396 = vmul.f32 %v392, 0.17677669
    %v397 = vadd.f32 %v395, %v172
    %v398 = vadd.f32 %v396, %v173
    %vm399 = vcmask 130048
    %v400 = vsel %vm399, %v397, -inf
    %401 = vmax.xlane.f32.xlu0 %v400
    %v402 = vpop.xlane.xlu0 %401
    %v403 = vsel %vm399, %v398, -inf
    %404 = vmax.xlane.f32.xlu0 %v403
    %v405 = vpop.xlane.xlu0 %404
    %v406 = vsub.f32 %v397, %v402
    %v407 = vsub.f32 %v398, %v405
    %v408 = vmul.f32 %v406, 1.442695
    %v409 = vpow.pop %v408
    %v410 = vmul.f32 %v407, 1.442695
    %v411 = vpow.pop %v410
    %v412 = vsel %vm399, %v409, 0.0
    %413 = vadd.xlane.f32.xlu0 %v412
    %v414 = vpop.xlane.xlu0 %413
    %v415 = vsel %vm399, %v411, 0.0
    %416 = vadd.xlane.f32.xlu0 %v415
    %v417 = vpop.xlane.xlu0 %416
    %v418 = vrcp.pop %v414
    %v419 = vrcp.pop %v417
    %v420 = vmul.f32 %v409, %v418
    %v421 = vmul.f32 %v411, %v419
    %422 = vrot.lane.b32.xlu0 %v297, 64
    %v423 = vpop.permute.xlu0 %422
    %424 = vrot.lane.b32.xlu0 %v302, 64
    %v425 = vpop.permute.xlu0 %424
    %v429 = vsel %vm399, %v420, 0
    %v432 = vsel %vm399, %v421, 0
    %434 = vmatprep.subr.mxu0 0.0
    %435 = vmatpush1.msra.mxu0 0.0
    %436 = vmatprep.subr.mxu0 0.0
    %437 = vmatpush1.msra.mxu0 0.0
    %438 = vmatprep.subr.mxu0 0.0
    %439 = vmatpush1.msra.mxu0 0.0
    %440 = vmatprep.subr.mxu0 0.0
    %441 = vmatpush1.msra.mxu0 0.0
    %442 = vmatprep.subr.mxu0 0.0
    %443 = vmatpush1.msra.mxu0 0.0
    %444 = vmatprep.subr.mxu0 0.0
    %445 = vmatpush1.msra.mxu0 0.0
    %446 = vmatprep.subr.mxu0 0.0
    %447 = vmatpush1.msra.mxu0 0.0
    %448 = vmatprep.subr.mxu0 0.0
    %449 = vmatpush1.msra.mxu0 0.0
    %450 = vmatprep.subr.mxu0 0.0
    %451 = vmatpush1.msra.mxu0 0.0
    %452 = vmatprep.subr.mxu0 0.0
    %453 = vmatpush1.msra.mxu0 0.0
    %454 = vmatprep.subr.mxu0 0.0
    %455 = vmatpush1.msra.mxu0 0.0
    %456 = vmatprep.subr.mxu0 0.0
    %457 = vmatpush1.msra.mxu0 0.0
    %458 = vmatprep.subr.mxu0 0.0
    %459 = vmatpush1.msra.mxu0 0.0
    %460 = vmatprep.subr.mxu0 0.0
    %461 = vmatpush1.msra.mxu0 0.0
    %462 = vmatprep.subr.mxu0 0.0
    %463 = vmatpush1.msra.mxu0 %v425
    %464 = vmatprep.subr.mxu0 0.0
    %465 = vmatpush1.msra.mxu0 %v423
    %466 = vmatprep.subr.mxu0 0.0
    %467 = vmatpush2.msra.mxu0 0.0
    %468 = vmatprep.subr.mxu0 0.0
    %469 = vmatpush2.msra.mxu0 0.0
    %470 = vmatprep.subr.mxu0 0.0
    %471 = vmatpush2.msra.mxu0 0.0
    %472 = vmatprep.subr.mxu0 0.0
    %473 = vmatpush2.msra.mxu0 0.0
    %474 = vmatprep.subr.mxu0 0.0
    %475 = vmatpush2.msra.mxu0 0.0
    %476 = vmatprep.subr.mxu0 0.0
    %477 = vmatpush2.msra.mxu0 0.0
    %478 = vmatprep.subr.mxu0 0.0
    %479 = vmatpush2.msra.mxu0 0.0
    %480 = vmatprep.subr.mxu0 0.0
    %481 = vmatpush2.msra.mxu0 0.0
    %482 = vmatprep.subr.mxu0 0.0
    %483 = vmatpush2.msra.mxu0 0.0
    %484 = vmatprep.subr.mxu0 0.0
    %485 = vmatpush2.msra.mxu0 0.0
    %486 = vmatprep.subr.mxu0 0.0
    %487 = vmatpush2.msra.mxu0 0.0
    %488 = vmatprep.subr.mxu0 0.0
    %489 = vmatpush2.msra.mxu0 0.0
    %490 = vmatprep.subr.mxu0 0.0
    %491 = vmatpush2.msra.mxu0 0.0
    %492 = vmatprep.subr.mxu0 0.0
    %493 = vmatpush2.msra.mxu0 0.0
    %494 = vmatprep.subr.mxu0 0.0
    %495 = vmatpush2.msra.mxu0 0.0
    %496 = vmatprep.subr.mxu0 0.0
    %497 = vmatpush2.msra.mxu0 0.0
    %498 = vmatprep.mubr.f32.mxu0 0.0
    %499 = vmatmul.mubr.f32.gmra.mxu0 %v429
    %v500 = vpop.f32.mrf.mxu0
    %v501 = vadd.f32 0.0, %v500
    %v502 = vpop.f32.mrf.mxu0
    %503 = vmatprep.mubr.f32.mxu0 0.0
    %504 = vmatmul.mubr.f32.gmra.mxu0 %v432
    %v505 = vpop.f32.mrf.mxu0
    %v506 = vadd.f32 0.0, %v505
    %v507 = vpop.f32.mrf.mxu0
    %508 = vdwg.mxu0
    %509 = vrot.lane.b32.xlu0 %v297, 120
    %v510 = vpop.permute.xlu0 %509
    %511 = vrot.lane.b32.xlu0 %v302, 120
    %v512 = vpop.permute.xlu0 %511
    %513 = vrot.lane.b32.xlu0 %v297, 88
    %v514 = vpop.permute.xlu0 %513
    %515 = vrot.lane.b32.xlu0 %v302, 88
    %v516 = vpop.permute.xlu0 %515
    %v517 = vsel %vm311, %v510, 0
    %v519 = vsel %vm311, %v512, 0
    %v521 = vsel %vm311, %v514, 0
    %v523 = vsel %vm311, %v516, 0
    %525 = vmatprep.subr.mxu0 0.0
    %526 = vmatpush1.xpose.msra.mxu0 0.0
    %527 = vmatprep.subr.mxu0 0.0
    %528 = vmatpush1.xpose.msra.mxu0 0.0
    %529 = vmatprep.subr.mxu0 0.0
    %530 = vmatpush1.xpose.msra.mxu0 0.0
    %531 = vmatprep.subr.mxu0 0.0
    %532 = vmatpush1.xpose.msra.mxu0 0.0
    %533 = vmatprep.subr.mxu0 0.0
    %534 = vmatpush1.xpose.msra.mxu0 0.0
    %535 = vmatprep.subr.mxu0 0.0
    %536 = vmatpush1.xpose.msra.mxu0 0.0
    %537 = vmatprep.subr.mxu0 0.0
    %538 = vmatpush1.xpose.msra.mxu0 0.0
    %539 = vmatprep.subr.mxu0 0.0
    %540 = vmatpush1.xpose.msra.mxu0 0.0
    %541 = vmatprep.subr.mxu0 0.0
    %542 = vmatpush1.xpose.msra.mxu0 0.0
    %543 = vmatprep.subr.mxu0 0.0
    %544 = vmatpush1.xpose.msra.mxu0 0.0
    %545 = vmatprep.subr.mxu0 0.0
    %546 = vmatpush1.xpose.msra.mxu0 0.0
    %547 = vmatprep.subr.mxu0 0.0
    %548 = vmatpush1.xpose.msra.mxu0 0.0
    %549 = vmatprep.subr.mxu0 0.0
    %550 = vmatpush1.xpose.msra.mxu0 0.0
    %551 = vmatprep.subr.mxu0 0.0
    %552 = vmatpush1.xpose.msra.mxu0 0.0
    %553 = vmatprep.subr.mxu0 0.0
    %554 = vmatpush1.xpose.msra.mxu0 %v523
    %555 = vmatprep.subr.mxu0 0.0
    %556 = vmatpush1.xpose.msra.mxu0 %v521
    %557 = vmatprep.subr.mxu0 0.0
    %558 = vmatpush2.xpose.msra.mxu0 0.0
    %559 = vmatprep.subr.mxu0 0.0
    %560 = vmatpush2.xpose.msra.mxu0 0.0
    %561 = vmatprep.subr.mxu0 0.0
    %562 = vmatpush2.xpose.msra.mxu0 0.0
    %563 = vmatprep.subr.mxu0 0.0
    %564 = vmatpush2.xpose.msra.mxu0 0.0
    %565 = vmatprep.subr.mxu0 0.0
    %566 = vmatpush2.xpose.msra.mxu0 0.0
    %567 = vmatprep.subr.mxu0 0.0
    %568 = vmatpush2.xpose.msra.mxu0 0.0
    %569 = vmatprep.subr.mxu0 0.0
    %570 = vmatpush2.xpose.msra.mxu0 0.0
    %571 = vmatprep.subr.mxu0 0.0
    %572 = vmatpush2.xpose.msra.mxu0 0.0
    %573 = vmatprep.subr.mxu0 0.0
    %574 = vmatpush2.xpose.msra.mxu0 0.0
    %575 = vmatprep.subr.mxu0 0.0
    %576 = vmatpush2.xpose.msra.mxu0 0.0
    %577 = vmatprep.subr.mxu0 0.0
    %578 = vmatpush2.xpose.msra.mxu0 0.0
    %579 = vmatprep.subr.mxu0 0.0
    %580 = vmatpush2.xpose.msra.mxu0 0.0
    %581 = vmatprep.subr.mxu0 0.0
    %582 = vmatpush2.xpose.msra.mxu0 0.0
    %583 = vmatprep.subr.mxu0 0.0
    %584 = vmatpush2.xpose.msra.mxu0 0.0
    %585 = vmatprep.subr.mxu0 0.0
    %586 = vmatpush2.xpose.msra.mxu0 0.0
    %587 = vmatprep.subr.mxu0 0.0
    %588 = vmatpush2.xpose.msra.mxu0 0.0
    %589 = vmatprep.mubr.f32.mxu0 0.0
    %590 = vmatmul.mubr.f32.gmra.mxu0 %v517
    %v591 = vpop.f32.mrf.mxu0
    %v592 = vadd.f32 0.0, %v591
    %v593 = vpop.f32.mrf.mxu0
    %594 = vmatprep.mubr.f32.mxu0 0.0
    %595 = vmatmul.mubr.f32.gmra.mxu0 %v519
    %v596 = vpop.f32.mrf.mxu0
    %v597 = vadd.f32 0.0, %v596
    %v598 = vpop.f32.mrf.mxu0
    %599 = vdwg.mxu0
    %v600 = vmul.f32 %v592, 0.17677669
    %v601 = vmul.f32 %v597, 0.17677669
    %v602 = vadd.f32 %v600, %v172
    %v603 = vadd.f32 %v601, %v173
    %v604 = vsel %vm399, %v602, -inf
    %605 = vmax.xlane.f32.xlu0 %v604
    %v606 = vpop.xlane.xlu0 %605
    %v607 = vsel %vm399, %v603, -inf
    %608 = vmax.xlane.f32.xlu0 %v607
    %v609 = vpop.xlane.xlu0 %608
    %v610 = vsub.f32 %v602, %v606
    %v611 = vsub.f32 %v603, %v609
    %v612 = vmul.f32 %v610, 1.442695
    %v613 = vpow.pop %v612
    %v614 = vmul.f32 %v611, 1.442695
    %v615 = vpow.pop %v614
    %v616 = vsel %vm399, %v613, 0.0
    %617 = vadd.xlane.f32.xlu0 %v616
    %v618 = vpop.xlane.xlu0 %617
    %v619 = vsel %vm399, %v615, 0.0
    %620 = vadd.xlane.f32.xlu0 %v619
    %v621 = vpop.xlane.xlu0 %620
    %v622 = vrcp.pop %v618
    %v623 = vrcp.pop %v621
    %v624 = vmul.f32 %v613, %v622
    %v625 = vmul.f32 %v615, %v623
    %626 = vrot.lane.b32.xlu0 %v297, 56
    %v627 = vpop.permute.xlu0 %626
    %628 = vrot.lane.b32.xlu0 %v302, 56
    %v629 = vpop.permute.xlu0 %628
    %v633 = vsel %vm399, %v624, 0
    %v636 = vsel %vm399, %v625, 0
    %638 = vmatprep.subr.mxu0 0.0
    %639 = vmatpush1.msra.mxu0 0.0
    %640 = vmatprep.subr.mxu0 0.0
    %641 = vmatpush1.msra.mxu0 0.0
    %642 = vmatprep.subr.mxu0 0.0
    %643 = vmatpush1.msra.mxu0 0.0
    %644 = vmatprep.subr.mxu0 0.0
    %645 = vmatpush1.msra.mxu0 0.0
    %646 = vmatprep.subr.mxu0 0.0
    %647 = vmatpush1.msra.mxu0 0.0
    %648 = vmatprep.subr.mxu0 0.0
    %649 = vmatpush1.msra.mxu0 0.0
    %650 = vmatprep.subr.mxu0 0.0
    %651 = vmatpush1.msra.mxu0 0.0
    %652 = vmatprep.subr.mxu0 0.0
    %653 = vmatpush1.msra.mxu0 0.0
    %654 = vmatprep.subr.mxu0 0.0
    %655 = vmatpush1.msra.mxu0 0.0
    %656 = vmatprep.subr.mxu0 0.0
    %657 = vmatpush1.msra.mxu0 0.0
    %658 = vmatprep.subr.mxu0 0.0
    %659 = vmatpush1.msra.mxu0 0.0
    %660 = vmatprep.subr.mxu0 0.0
    %661 = vmatpush1.msra.mxu0 0.0
    %662 = vmatprep.subr.mxu0 0.0
    %663 = vmatpush1.msra.mxu0 0.0
    %664 = vmatprep.subr.mxu0 0.0
    %665 = vmatpush1.msra.mxu0 0.0
    %666 = vmatprep.subr.mxu0 0.0
    %667 = vmatpush1.msra.mxu0 %v629
    %668 = vmatprep.subr.mxu0 0.0
    %669 = vmatpush1.msra.mxu0 %v627
    %670 = vmatprep.subr.mxu0 0.0
    %671 = vmatpush2.msra.mxu0 0.0
    %672 = vmatprep.subr.mxu0 0.0
    %673 = vmatpush2.msra.mxu0 0.0
    %674 = vmatprep.subr.mxu0 0.0
    %675 = vmatpush2.msra.mxu0 0.0
    %676 = vmatprep.subr.mxu0 0.0
    %677 = vmatpush2.msra.mxu0 0.0
    %678 = vmatprep.subr.mxu0 0.0
    %679 = vmatpush2.msra.mxu0 0.0
    %680 = vmatprep.subr.mxu0 0.0
    %681 = vmatpush2.msra.mxu0 0.0
    %682 = vmatprep.subr.mxu0 0.0
    %683 = vmatpush2.msra.mxu0 0.0
    %684 = vmatprep.subr.mxu0 0.0
    %685 = vmatpush2.msra.mxu0 0.0
    %686 = vmatprep.subr.mxu0 0.0
    %687 = vmatpush2.msra.mxu0 0.0
    %688 = vmatprep.subr.mxu0 0.0
    %689 = vmatpush2.msra.mxu0 0.0
    %690 = vmatprep.subr.mxu0 0.0
    %691 = vmatpush2.msra.mxu0 0.0
    %692 = vmatprep.subr.mxu0 0.0
    %693 = vmatpush2.msra.mxu0 0.0
    %694 = vmatprep.subr.mxu0 0.0
    %695 = vmatpush2.msra.mxu0 0.0
    %696 = vmatprep.subr.mxu0 0.0
    %697 = vmatpush2.msra.mxu0 0.0
    %698 = vmatprep.subr.mxu0 0.0
    %699 = vmatpush2.msra.mxu0 0.0
    %700 = vmatprep.subr.mxu0 0.0
    %701 = vmatpush2.msra.mxu0 0.0
    %702 = vmatprep.mubr.f32.mxu0 0.0
    %703 = vmatmul.mubr.f32.gmra.mxu0 %v633
    %v704 = vpop.f32.mrf.mxu0
    %v705 = vadd.f32 0.0, %v704
    %v706 = vpop.f32.mrf.mxu0
    %707 = vmatprep.mubr.f32.mxu0 0.0
    %708 = vmatmul.mubr.f32.gmra.mxu0 %v636
    %v709 = vpop.f32.mrf.mxu0
    %v710 = vadd.f32 0.0, %v709
    %v711 = vpop.f32.mrf.mxu0
    %712 = vdwg.mxu0
    %713 = vrot.lane.b32.xlu0 %v297, 112
    %v714 = vpop.permute.xlu0 %713
    %715 = vrot.lane.b32.xlu0 %v302, 112
    %v716 = vpop.permute.xlu0 %715
    %717 = vrot.lane.b32.xlu0 %v297, 80
    %v718 = vpop.permute.xlu0 %717
    %719 = vrot.lane.b32.xlu0 %v302, 80
    %v720 = vpop.permute.xlu0 %719
    %v721 = vsel %vm311, %v714, 0
    %v723 = vsel %vm311, %v716, 0
    %v725 = vsel %vm311, %v718, 0
    %v727 = vsel %vm311, %v720, 0
    %729 = vmatprep.subr.mxu0 0.0
    %730 = vmatpush1.xpose.msra.mxu0 0.0
    %731 = vmatprep.subr.mxu0 0.0
    %732 = vmatpush1.xpose.msra.mxu0 0.0
    %733 = vmatprep.subr.mxu0 0.0
    %734 = vmatpush1.xpose.msra.mxu0 0.0
    %735 = vmatprep.subr.mxu0 0.0
    %736 = vmatpush1.xpose.msra.mxu0 0.0
    %737 = vmatprep.subr.mxu0 0.0
    %738 = vmatpush1.xpose.msra.mxu0 0.0
    %739 = vmatprep.subr.mxu0 0.0
    %740 = vmatpush1.xpose.msra.mxu0 0.0
    %741 = vmatprep.subr.mxu0 0.0
    %742 = vmatpush1.xpose.msra.mxu0 0.0
    %743 = vmatprep.subr.mxu0 0.0
    %744 = vmatpush1.xpose.msra.mxu0 0.0
    %745 = vmatprep.subr.mxu0 0.0
    %746 = vmatpush1.xpose.msra.mxu0 0.0
    %747 = vmatprep.subr.mxu0 0.0
    %748 = vmatpush1.xpose.msra.mxu0 0.0
    %749 = vmatprep.subr.mxu0 0.0
    %750 = vmatpush1.xpose.msra.mxu0 0.0
    %751 = vmatprep.subr.mxu0 0.0
    %752 = vmatpush1.xpose.msra.mxu0 0.0
    %753 = vmatprep.subr.mxu0 0.0
    %754 = vmatpush1.xpose.msra.mxu0 0.0
    %755 = vmatprep.subr.mxu0 0.0
    %756 = vmatpush1.xpose.msra.mxu0 0.0
    %757 = vmatprep.subr.mxu0 0.0
    %758 = vmatpush1.xpose.msra.mxu0 %v727
    %759 = vmatprep.subr.mxu0 0.0
    %760 = vmatpush1.xpose.msra.mxu0 %v725
    %761 = vmatprep.subr.mxu0 0.0
    %762 = vmatpush2.xpose.msra.mxu0 0.0
    %763 = vmatprep.subr.mxu0 0.0
    %764 = vmatpush2.xpose.msra.mxu0 0.0
    %765 = vmatprep.subr.mxu0 0.0
    %766 = vmatpush2.xpose.msra.mxu0 0.0
    %767 = vmatprep.subr.mxu0 0.0
    %768 = vmatpush2.xpose.msra.mxu0 0.0
    %769 = vmatprep.subr.mxu0 0.0
    %770 = vmatpush2.xpose.msra.mxu0 0.0
    %771 = vmatprep.subr.mxu0 0.0
    %772 = vmatpush2.xpose.msra.mxu0 0.0
    %773 = vmatprep.subr.mxu0 0.0
    %774 = vmatpush2.xpose.msra.mxu0 0.0
    %775 = vmatprep.subr.mxu0 0.0
    %776 = vmatpush2.xpose.msra.mxu0 0.0
    %777 = vmatprep.subr.mxu0 0.0
    %778 = vmatpush2.xpose.msra.mxu0 0.0
    %779 = vmatprep.subr.mxu0 0.0
    %780 = vmatpush2.xpose.msra.mxu0 0.0
    %781 = vmatprep.subr.mxu0 0.0
    %782 = vmatpush2.xpose.msra.mxu0 0.0
    %783 = vmatprep.subr.mxu0 0.0
    %784 = vmatpush2.xpose.msra.mxu0 0.0
    %785 = vmatprep.subr.mxu0 0.0
    %786 = vmatpush2.xpose.msra.mxu0 0.0
    %787 = vmatprep.subr.mxu0 0.0
    %788 = vmatpush2.xpose.msra.mxu0 0.0
    %789 = vmatprep.subr.mxu0 0.0
    %790 = vmatpush2.xpose.msra.mxu0 0.0
    %791 = vmatprep.subr.mxu0 0.0
    %792 = vmatpush2.xpose.msra.mxu0 0.0
    %793 = vmatprep.mubr.f32.mxu0 0.0
    %794 = vmatmul.mubr.f32.gmra.mxu0 %v721
    %v795 = vpop.f32.mrf.mxu0
    %v796 = vadd.f32 0.0, %v795
    %v797 = vpop.f32.mrf.mxu0
    %798 = vmatprep.mubr.f32.mxu0 0.0
    %799 = vmatmul.mubr.f32.gmra.mxu0 %v723
    %v800 = vpop.f32.mrf.mxu0
    %v801 = vadd.f32 0.0, %v800
    %v802 = vpop.f32.mrf.mxu0
    %803 = vdwg.mxu0
    %v804 = vmul.f32 %v796, 0.17677669
    %v805 = vmul.f32 %v801, 0.17677669
    %v806 = vadd.f32 %v804, %v172
    %v807 = vadd.f32 %v805, %v173
    %v808 = vsel %vm399, %v806, -inf
    %809 = vmax.xlane.f32.xlu0 %v808
    %v810 = vpop.xlane.xlu0 %809
    %v811 = vsel %vm399, %v807, -inf
    %812 = vmax.xlane.f32.xlu0 %v811
    %v813 = vpop.xlane.xlu0 %812
    %v814 = vsub.f32 %v806, %v810
    %v815 = vsub.f32 %v807, %v813
    %v816 = vmul.f32 %v814, 1.442695
    %v817 = vpow.pop %v816
    %v818 = vmul.f32 %v815, 1.442695
    %v819 = vpow.pop %v818
    %v820 = vsel %vm399, %v817, 0.0
    %821 = vadd.xlane.f32.xlu0 %v820
    %v822 = vpop.xlane.xlu0 %821
    %v823 = vsel %vm399, %v819, 0.0
    %824 = vadd.xlane.f32.xlu0 %v823
    %v825 = vpop.xlane.xlu0 %824
    %v826 = vrcp.pop %v822
    %v827 = vrcp.pop %v825
    %v828 = vmul.f32 %v817, %v826
    %v829 = vmul.f32 %v819, %v827
    %830 = vrot.lane.b32.xlu0 %v297, 48
    %v831 = vpop.permute.xlu0 %830
    %832 = vrot.lane.b32.xlu0 %v302, 48
    %v833 = vpop.permute.xlu0 %832
    %v837 = vsel %vm399, %v828, 0
    %v840 = vsel %vm399, %v829, 0
    %842 = vmatprep.subr.mxu0 0.0
    %843 = vmatpush1.msra.mxu0 0.0
    %844 = vmatprep.subr.mxu0 0.0
    %845 = vmatpush1.msra.mxu0 0.0
    %846 = vmatprep.subr.mxu0 0.0
    %847 = vmatpush1.msra.mxu0 0.0
    %848 = vmatprep.subr.mxu0 0.0
    %849 = vmatpush1.msra.mxu0 0.0
    %850 = vmatprep.subr.mxu0 0.0
    %851 = vmatpush1.msra.mxu0 0.0
    %852 = vmatprep.subr.mxu0 0.0
    %853 = vmatpush1.msra.mxu0 0.0
    %854 = vmatprep.subr.mxu0 0.0
    %855 = vmatpush1.msra.mxu0 0.0
    %856 = vmatprep.subr.mxu0 0.0
    %857 = vmatpush1.msra.mxu0 0.0
    %858 = vmatprep.subr.mxu0 0.0
    %859 = vmatpush1.msra.mxu0 0.0
    %860 = vmatprep.subr.mxu0 0.0
    %861 = vmatpush1.msra.mxu0 0.0
    %862 = vmatprep.subr.mxu0 0.0
    %863 = vmatpush1.msra.mxu0 0.0
    %864 = vmatprep.subr.mxu0 0.0
    %865 = vmatpush1.msra.mxu0 0.0
    %866 = vmatprep.subr.mxu0 0.0
    %867 = vmatpush1.msra.mxu0 0.0
    %868 = vmatprep.subr.mxu0 0.0
    %869 = vmatpush1.msra.mxu0 0.0
    %870 = vmatprep.subr.mxu0 0.0
    %871 = vmatpush1.msra.mxu0 %v833
    %872 = vmatprep.subr.mxu0 0.0
    %873 = vmatpush1.msra.mxu0 %v831
    %874 = vmatprep.subr.mxu0 0.0
    %875 = vmatpush2.msra.mxu0 0.0
    %876 = vmatprep.subr.mxu0 0.0
    %877 = vmatpush2.msra.mxu0 0.0
    %878 = vmatprep.subr.mxu0 0.0
    %879 = vmatpush2.msra.mxu0 0.0
    %880 = vmatprep.subr.mxu0 0.0
    %881 = vmatpush2.msra.mxu0 0.0
    %882 = vmatprep.subr.mxu0 0.0
    %883 = vmatpush2.msra.mxu0 0.0
    %884 = vmatprep.subr.mxu0 0.0
    %885 = vmatpush2.msra.mxu0 0.0
    %886 = vmatprep.subr.mxu0 0.0
    %887 = vmatpush2.msra.mxu0 0.0
    %888 = vmatprep.subr.mxu0 0.0
    %889 = vmatpush2.msra.mxu0 0.0
    %890 = vmatprep.subr.mxu0 0.0
    %891 = vmatpush2.msra.mxu0 0.0
    %892 = vmatprep.subr.mxu0 0.0
    %893 = vmatpush2.msra.mxu0 0.0
    %894 = vmatprep.subr.mxu0 0.0
    %895 = vmatpush2.msra.mxu0 0.0
    %896 = vmatprep.subr.mxu0 0.0
    %897 = vmatpush2.msra.mxu0 0.0
    %898 = vmatprep.subr.mxu0 0.0
    %899 = vmatpush2.msra.mxu0 0.0
    %900 = vmatprep.subr.mxu0 0.0
    %901 = vmatpush2.msra.mxu0 0.0
    %902 = vmatprep.subr.mxu0 0.0
    %903 = vmatpush2.msra.mxu0 0.0
    %904 = vmatprep.subr.mxu0 0.0
    %905 = vmatpush2.msra.mxu0 0.0
    %906 = vmatprep.mubr.f32.mxu0 0.0
    %907 = vmatmul.mubr.f32.gmra.mxu0 %v837
    %v908 = vpop.f32.mrf.mxu0
    %v909 = vadd.f32 0.0, %v908
    %v910 = vpop.f32.mrf.mxu0
    %911 = vmatprep.mubr.f32.mxu0 0.0
    %912 = vmatmul.mubr.f32.gmra.mxu0 %v840
    %v913 = vpop.f32.mrf.mxu0
    %v914 = vadd.f32 0.0, %v913
    %v915 = vpop.f32.mrf.mxu0
    %916 = vdwg.mxu0
    %917 = vrot.lane.b32.xlu0 %v297, 104
    %v918 = vpop.permute.xlu0 %917
    %919 = vrot.lane.b32.xlu0 %v302, 104
    %v920 = vpop.permute.xlu0 %919
    %921 = vrot.lane.b32.xlu0 %v297, 72
    %v922 = vpop.permute.xlu0 %921
    %923 = vrot.lane.b32.xlu0 %v302, 72
    %v924 = vpop.permute.xlu0 %923
    %v925 = vsel %vm311, %v918, 0
    %v927 = vsel %vm311, %v920, 0
    %v929 = vsel %vm311, %v922, 0
    %v931 = vsel %vm311, %v924, 0
    %933 = vmatprep.subr.mxu0 0.0
    %934 = vmatpush1.xpose.msra.mxu0 0.0
    %935 = vmatprep.subr.mxu0 0.0
    %936 = vmatpush1.xpose.msra.mxu0 0.0
    %937 = vmatprep.subr.mxu0 0.0
    %938 = vmatpush1.xpose.msra.mxu0 0.0
    %939 = vmatprep.subr.mxu0 0.0
    %940 = vmatpush1.xpose.msra.mxu0 0.0
    %941 = vmatprep.subr.mxu0 0.0
    %942 = vmatpush1.xpose.msra.mxu0 0.0
    %943 = vmatprep.subr.mxu0 0.0
    %944 = vmatpush1.xpose.msra.mxu0 0.0
    %945 = vmatprep.subr.mxu0 0.0
    %946 = vmatpush1.xpose.msra.mxu0 0.0
    %947 = vmatprep.subr.mxu0 0.0
    %948 = vmatpush1.xpose.msra.mxu0 0.0
    %949 = vmatprep.subr.mxu0 0.0
    %950 = vmatpush1.xpose.msra.mxu0 0.0
    %951 = vmatprep.subr.mxu0 0.0
    %952 = vmatpush1.xpose.msra.mxu0 0.0
    %953 = vmatprep.subr.mxu0 0.0
    %954 = vmatpush1.xpose.msra.mxu0 0.0
    %955 = vmatprep.subr.mxu0 0.0
    %956 = vmatpush1.xpose.msra.mxu0 0.0
    %957 = vmatprep.subr.mxu0 0.0
    %958 = vmatpush1.xpose.msra.mxu0 0.0
    %959 = vmatprep.subr.mxu0 0.0
    %960 = vmatpush1.xpose.msra.mxu0 0.0
    %961 = vmatprep.subr.mxu0 0.0
    %962 = vmatpush1.xpose.msra.mxu0 %v931
    %963 = vmatprep.subr.mxu0 0.0
    %964 = vmatpush1.xpose.msra.mxu0 %v929
    %965 = vmatprep.subr.mxu0 0.0
    %966 = vmatpush2.xpose.msra.mxu0 0.0
    %967 = vmatprep.subr.mxu0 0.0
    %968 = vmatpush2.xpose.msra.mxu0 0.0
    %969 = vmatprep.subr.mxu0 0.0
    %970 = vmatpush2.xpose.msra.mxu0 0.0
    %971 = vmatprep.subr.mxu0 0.0
    %972 = vmatpush2.xpose.msra.mxu0 0.0
    %973 = vmatprep.subr.mxu0 0.0
    %974 = vmatpush2.xpose.msra.mxu0 0.0
    %975 = vmatprep.subr.mxu0 0.0
    %976 = vmatpush2.xpose.msra.mxu0 0.0
    %977 = vmatprep.subr.mxu0 0.0
    %978 = vmatpush2.xpose.msra.mxu0 0.0
    %979 = vmatprep.subr.mxu0 0.0
    %980 = vmatpush2.xpose.msra.mxu0 0.0
    %981 = vmatprep.subr.mxu0 0.0
    %982 = vmatpush2.xpose.msra.mxu0 0.0
    %983 = vmatprep.subr.mxu0 0.0
    %984 = vmatpush2.xpose.msra.mxu0 0.0
    %985 = vmatprep.subr.mxu0 0.0
    %986 = vmatpush2.xpose.msra.mxu0 0.0
    %987 = vmatprep.subr.mxu0 0.0
    %988 = vmatpush2.xpose.msra.mxu0 0.0
    %989 = vmatprep.subr.mxu0 0.0
    %990 = vmatpush2.xpose.msra.mxu0 0.0
    %991 = vmatprep.subr.mxu0 0.0
    %992 = vmatpush2.xpose.msra.mxu0 0.0
    %993 = vmatprep.subr.mxu0 0.0
    %994 = vmatpush2.xpose.msra.mxu0 0.0
    %995 = vmatprep.subr.mxu0 0.0
    %996 = vmatpush2.xpose.msra.mxu0 0.0
    %997 = vmatprep.mubr.f32.mxu0 0.0
    %998 = vmatmul.mubr.f32.gmra.mxu0 %v925
    %v999 = vpop.f32.mrf.mxu0
    %v1000 = vadd.f32 0.0, %v999
    %v1001 = vpop.f32.mrf.mxu0
    %1002 = vmatprep.mubr.f32.mxu0 0.0
    %1003 = vmatmul.mubr.f32.gmra.mxu0 %v927
    %v1004 = vpop.f32.mrf.mxu0
    %v1005 = vadd.f32 0.0, %v1004
    %v1006 = vpop.f32.mrf.mxu0
    %1007 = vdwg.mxu0
    %v1008 = vmul.f32 %v1000, 0.17677669
    %v1009 = vmul.f32 %v1005, 0.17677669
    %v1010 = vadd.f32 %v1008, %v172
    %v1011 = vadd.f32 %v1009, %v173
    %v1012 = vsel %vm399, %v1010, -inf
    %1013 = vmax.xlane.f32.xlu0 %v1012
    %v1014 = vpop.xlane.xlu0 %1013
    %v1015 = vsel %vm399, %v1011, -inf
    %1016 = vmax.xlane.f32.xlu0 %v1015
    %v1017 = vpop.xlane.xlu0 %1016
    %v1018 = vsub.f32 %v1010, %v1014
    %v1019 = vsub.f32 %v1011, %v1017
    %v1020 = vmul.f32 %v1018, 1.442695
    %v1021 = vpow.pop %v1020
    %v1022 = vmul.f32 %v1019, 1.442695
    %v1023 = vpow.pop %v1022
    %v1024 = vsel %vm399, %v1021, 0.0
    %1025 = vadd.xlane.f32.xlu0 %v1024
    %v1026 = vpop.xlane.xlu0 %1025
    %v1027 = vsel %vm399, %v1023, 0.0
    %1028 = vadd.xlane.f32.xlu0 %v1027
    %v1029 = vpop.xlane.xlu0 %1028
    %v1030 = vrcp.pop %v1026
    %v1031 = vrcp.pop %v1029
    %v1032 = vmul.f32 %v1021, %v1030
    %v1033 = vmul.f32 %v1023, %v1031
    %1034 = vrot.lane.b32.xlu0 %v297, 40
    %v1035 = vpop.permute.xlu0 %1034
    %1036 = vrot.lane.b32.xlu0 %v302, 40
    %v1037 = vpop.permute.xlu0 %1036
    %v1041 = vsel %vm399, %v1032, 0
    %v1044 = vsel %vm399, %v1033, 0
    %1046 = vmatprep.subr.mxu0 0.0
    %1047 = vmatpush1.msra.mxu0 0.0
    %1048 = vmatprep.subr.mxu0 0.0
    %1049 = vmatpush1.msra.mxu0 0.0
    %1050 = vmatprep.subr.mxu0 0.0
    %1051 = vmatpush1.msra.mxu0 0.0
    %1052 = vmatprep.subr.mxu0 0.0
    %1053 = vmatpush1.msra.mxu0 0.0
    %1054 = vmatprep.subr.mxu0 0.0
    %1055 = vmatpush1.msra.mxu0 0.0
    %1056 = vmatprep.subr.mxu0 0.0
    %1057 = vmatpush1.msra.mxu0 0.0
    %1058 = vmatprep.subr.mxu0 0.0
    %1059 = vmatpush1.msra.mxu0 0.0
    %1060 = vmatprep.subr.mxu0 0.0
    %1061 = vmatpush1.msra.mxu0 0.0
    %1062 = vmatprep.subr.mxu0 0.0
    %1063 = vmatpush1.msra.mxu0 0.0
    %1064 = vmatprep.subr.mxu0 0.0
    %1065 = vmatpush1.msra.mxu0 0.0
    %1066 = vmatprep.subr.mxu0 0.0
    %1067 = vmatpush1.msra.mxu0 0.0
    %1068 = vmatprep.subr.mxu0 0.0
    %1069 = vmatpush1.msra.mxu0 0.0
    %1070 = vmatprep.subr.mxu0 0.0
    %1071 = vmatpush1.msra.mxu0 0.0
    %1072 = vmatprep.subr.mxu0 0.0
    %1073 = vmatpush1.msra.mxu0 0.0
    %1074 = vmatprep.subr.mxu0 0.0
    %1075 = vmatpush1.msra.mxu0 %v1037
    %1076 = vmatprep.subr.mxu0 0.0
    %1077 = vmatpush1.msra.mxu0 %v1035
    %1078 = vmatprep.subr.mxu0 0.0
    %1079 = vmatpush2.msra.mxu0 0.0
    %1080 = vmatprep.subr.mxu0 0.0
    %1081 = vmatpush2.msra.mxu0 0.0
    %1082 = vmatprep.subr.mxu0 0.0
    %1083 = vmatpush2.msra.mxu0 0.0
    %1084 = vmatprep.subr.mxu0 0.0
    %1085 = vmatpush2.msra.mxu0 0.0
    %1086 = vmatprep.subr.mxu0 0.0
    %1087 = vmatpush2.msra.mxu0 0.0
    %1088 = vmatprep.subr.mxu0 0.0
    %1089 = vmatpush2.msra.mxu0 0.0
    %1090 = vmatprep.subr.mxu0 0.0
    %1091 = vmatpush2.msra.mxu0 0.0
    %1092 = vmatprep.subr.mxu0 0.0
    %1093 = vmatpush2.msra.mxu0 0.0
    %1094 = vmatprep.subr.mxu0 0.0
    %1095 = vmatpush2.msra.mxu0 0.0
    %1096 = vmatprep.subr.mxu0 0.0
    %1097 = vmatpush2.msra.mxu0 0.0
    %1098 = vmatprep.subr.mxu0 0.0
    %1099 = vmatpush2.msra.mxu0 0.0
    %1100 = vmatprep.subr.mxu0 0.0
    %1101 = vmatpush2.msra.mxu0 0.0
    %1102 = vmatprep.subr.mxu0 0.0
    %1103 = vmatpush2.msra.mxu0 0.0
    %1104 = vmatprep.subr.mxu0 0.0
    %1105 = vmatpush2.msra.mxu0 0.0
    %1106 = vmatprep.subr.mxu0 0.0
    %1107 = vmatpush2.msra.mxu0 0.0
    %1108 = vmatprep.subr.mxu0 0.0
    %1109 = vmatpush2.msra.mxu0 0.0
    %1110 = vmatprep.mubr.f32.mxu0 0.0
    %1111 = vmatmul.mubr.f32.gmra.mxu0 %v1041
    %v1112 = vpop.f32.mrf.mxu0
    %v1113 = vadd.f32 0.0, %v1112
    %v1114 = vpop.f32.mrf.mxu0
    %1115 = vmatprep.mubr.f32.mxu0 0.0
    %1116 = vmatmul.mubr.f32.gmra.mxu0 %v1044
    %v1117 = vpop.f32.mrf.mxu0
    %v1118 = vadd.f32 0.0, %v1117
    %v1119 = vpop.f32.mrf.mxu0
    %1120 = vdwg.mxu0
    %1123 = vrot.lane.b32.xlu0 %v705, 8
    %v1124 = vpop.permute.xlu0 %1123
    %1125 = vrot.lane.b32.xlu0 %v710, 8
    %v1126 = vpop.permute.xlu0 %1125
    %1131 = vrot.lane.b32.xlu0 %v909, 16
    %v1132 = vpop.permute.xlu0 %1131
    %1133 = vrot.lane.b32.xlu0 %v914, 16
    %v1134 = vpop.permute.xlu0 %1133
    %1139 = vrot.lane.b32.xlu0 %v1113, 24
    %v1140 = vpop.permute.xlu0 %1139
    %1141 = vrot.lane.b32.xlu0 %v1118, 24
    %v1142 = vpop.permute.xlu0 %1141
    %v1145 = vsel %vm311, %v501, %v1124
    %v1146 = vsel %vm311, %v506, %v1126
    %v1147 = vsel %vm399, %v1145, %v1132
    %v1148 = vsel %vm399, %v1146, %v1134
    %vm1149 = vcmask 195584
    %v1150 = vsel %vm1149, %v1147, %v1140
    %v1151 = vsel %vm1149, %v1148, %v1142
    %v1152 = vld [vmem:[%s7] sm:$0xff]
    %v1153 = vld [vmem:[%s7 + $0x8] sm:$0xff]
    %v1154 = vld [vmem:[%s7 + $0x10] sm:$0xff]
    %v1155 = vld [vmem:[%s7 + $0x18] sm:$0xff]
    %v1156 = vld [vmem:[%s8] sm:$0x1]
    %v1158 = vlaneseq
    %v1159 = vshrl.u32 %v1158, 7
    %v1160 = vsub.s32 0, %v1159
    %v1161 = vrot.slane %v1156, %v1160
    %v1164 = vsel %vm176, %v1150, 0
    %v1167 = vsel %vm176, %v1151, 0
    %1169 = vmatprep.subr.mxu0 0.0
    %1170 = vmatpush1.msra.mxu0 0.0
    %1171 = vmatprep.subr.mxu0 0.0
    %1172 = vmatpush1.msra.mxu0 0.0
    %1173 = vmatprep.subr.mxu0 0.0
    %1174 = vmatpush1.msra.mxu0 0.0
    %1175 = vmatprep.subr.mxu0 0.0
    %1176 = vmatpush1.msra.mxu0 0.0
    %1177 = vmatprep.subr.mxu0 0.0
    %1178 = vmatpush1.msra.mxu0 0.0
    %1179 = vmatprep.subr.mxu0 0.0
    %1180 = vmatpush1.msra.mxu0 0.0
    %1181 = vmatprep.subr.mxu0 0.0
    %1182 = vmatpush1.msra.mxu0 0.0
    %1183 = vmatprep.subr.mxu0 0.0
    %1184 = vmatpush1.msra.mxu0 0.0
    %1185 = vmatprep.subr.mxu0 0.0
    %1186 = vmatpush1.msra.mxu0 0.0
    %1187 = vmatprep.subr.mxu0 0.0
    %1188 = vmatpush1.msra.mxu0 0.0
    %1189 = vmatprep.subr.mxu0 0.0
    %1190 = vmatpush1.msra.mxu0 0.0
    %1191 = vmatprep.subr.mxu0 0.0
    %1192 = vmatpush1.msra.mxu0 0.0
    %1193 = vmatprep.subr.mxu0 0.0
    %1194 = vmatpush1.msra.mxu0 %v1155
    %1195 = vmatprep.subr.mxu0 0.0
    %1196 = vmatpush1.msra.mxu0 %v1154
    %1197 = vmatprep.subr.mxu0 0.0
    %1198 = vmatpush1.msra.mxu0 %v1153
    %1199 = vmatprep.subr.mxu0 0.0
    %1200 = vmatpush1.msra.mxu0 %v1152
    %1201 = vmatprep.subr.mxu0 0.0
    %1202 = vmatpush2.msra.mxu0 0.0
    %1203 = vmatprep.subr.mxu0 0.0
    %1204 = vmatpush2.msra.mxu0 0.0
    %1205 = vmatprep.subr.mxu0 0.0
    %1206 = vmatpush2.msra.mxu0 0.0
    %1207 = vmatprep.subr.mxu0 0.0
    %1208 = vmatpush2.msra.mxu0 0.0
    %1209 = vmatprep.subr.mxu0 0.0
    %1210 = vmatpush2.msra.mxu0 0.0
    %1211 = vmatprep.subr.mxu0 0.0
    %1212 = vmatpush2.msra.mxu0 0.0
    %1213 = vmatprep.subr.mxu0 0.0
    %1214 = vmatpush2.msra.mxu0 0.0
    %1215 = vmatprep.subr.mxu0 0.0
    %1216 = vmatpush2.msra.mxu0 0.0
    %1217 = vmatprep.subr.mxu0 0.0
    %1218 = vmatpush2.msra.mxu0 0.0
    %1219 = vmatprep.subr.mxu0 0.0
    %1220 = vmatpush2.msra.mxu0 0.0
    %1221 = vmatprep.subr.mxu0 0.0
    %1222 = vmatpush2.msra.mxu0 0.0
    %1223 = vmatprep.subr.mxu0 0.0
    %1224 = vmatpush2.msra.mxu0 0.0
    %1225 = vmatprep.subr.mxu0 0.0
    %1226 = vmatpush2.msra.mxu0 0.0
    %1227 = vmatprep.subr.mxu0 0.0
    %1228 = vmatpush2.msra.mxu0 0.0
    %1229 = vmatprep.subr.mxu0 0.0
    %1230 = vmatpush2.msra.mxu0 0.0
    %1231 = vmatprep.subr.mxu0 0.0
    %1232 = vmatpush2.msra.mxu0 0.0
    %1233 = vmatprep.mubr.f32.mxu0 0.0
    %1234 = vmatmul.mubr.f32.gmra.mxu0 %v1164
    %v1235 = vpop.f32.mrf.mxu0
    %v1236 = vadd.f32 %v1161, %v1235
    %v1237 = vpop.f32.mrf.mxu0
    %1238 = vmatprep.mubr.f32.mxu0 0.0
    %1239 = vmatmul.mubr.f32.gmra.mxu0 %v1167
    %v1240 = vpop.f32.mrf.mxu0
    %v1241 = vadd.f32 %v1161, %v1240
    %v1242 = vpop.f32.mrf.mxu0
    %1243 = vdwg.mxu0
    %v1244 = vadd.f32 %v164, %v1236
    %v1245 = vadd.f32 %v169, %v1241
    %v1246 = vld [vmem:[%s9] sm:$0x1]
    %v1247 = vld [vmem:[%s10] sm:$0x1]
    %v1248 = vsel %vm176, %v1244, 0.0
    %1249 = vadd.xlane.f32.xlu0 %v1248
    %v1250 = vpop.xlane.xlu0 %1249
    %v1251 = vsel %vm176, %v1245, 0.0
    %1252 = vadd.xlane.f32.xlu0 %v1251
    %v1253 = vpop.xlane.xlu0 %1252
    %v1254 = vmul.f32 %v1250, %v183
    %v1255 = vmul.f32 %v1253, %v183
    %v1256 = vsub.f32 %v1244, %v1254
    %v1257 = vsub.f32 %v1245, %v1255
    %v1258 = vmul.f32 %v1256, %v1256
    %v1259 = vmul.f32 %v1257, %v1257
    %v1260 = vsel %vm176, %v1258, 0.0
    %1261 = vadd.xlane.f32.xlu0 %v1260
    %v1262 = vpop.xlane.xlu0 %1261
    %v1263 = vsel %vm176, %v1259, 0.0
    %1264 = vadd.xlane.f32.xlu0 %v1263
    %v1265 = vpop.xlane.xlu0 %1264
    %v1266 = vmul.f32 %v1262, %v183
    %v1267 = vmul.f32 %v1265, %v183
    %v1268 = vadd.f32 %v1266, 1e-05
    %v1269 = vadd.f32 %v1267, 1e-05
    %v1270 = vrsqrt.pop %v1268
    %v1271 = vrsqrt.pop %v1269
    %v1272 = vmul.f32 %v1256, %v1270
    %v1273 = vmul.f32 %v1257, %v1271
    %v1275 = vlaneseq
    %v1276 = vshrl.u32 %v1275, 7
    %v1277 = vsub.s32 0, %v1276
    %v1278 = vrot.slane %v1246, %v1277
    %v1280 = vmul.f32 %v1272, %v1278
    %v1281 = vmul.f32 %v1273, %v1278
    %v1283 = vlaneseq
    %v1284 = vshrl.u32 %v1283, 7
    %v1285 = vsub.s32 0, %v1284
    %v1286 = vrot.slane %v1247, %v1285
    %v1288 = vadd.f32 %v1280, %v1286
    %v1289 = vadd.f32 %v1281, %v1286
    %v1290 = vld [vmem:[%s11] sm:$0xff]
    %v1291 = vld [vmem:[%s11 + $0x8] sm:$0xff]
    %v1292 = vld [vmem:[%s11 + $0x10] sm:$0xff]
    %v1293 = vld [vmem:[%s11 + $0x18] sm:$0xff]
    %v1294 = vld [vmem:[%s12] sm:$0x1]
    %v1296 = vlaneseq
    %v1297 = vshrl.u32 %v1296, 7
    %v1298 = vsub.s32 0, %v1297
    %v1299 = vrot.slane %v1294, %v1298
    %v1302 = vsel %vm176, %v1288, 0
    %v1305 = vsel %vm176, %v1289, 0
    %1307 = vmatprep.subr.mxu0 0.0
    %1308 = vmatpush1.msra.mxu0 0.0
    %1309 = vmatprep.subr.mxu0 0.0
    %1310 = vmatpush1.msra.mxu0 0.0
    %1311 = vmatprep.subr.mxu0 0.0
    %1312 = vmatpush1.msra.mxu0 0.0
    %1313 = vmatprep.subr.mxu0 0.0
    %1314 = vmatpush1.msra.mxu0 0.0
    %1315 = vmatprep.subr.mxu0 0.0
    %1316 = vmatpush1.msra.mxu0 0.0
    %1317 = vmatprep.subr.mxu0 0.0
    %1318 = vmatpush1.msra.mxu0 0.0
    %1319 = vmatprep.subr.mxu0 0.0
    %1320 = vmatpush1.msra.mxu0 0.0
    %1321 = vmatprep.subr.mxu0 0.0
    %1322 = vmatpush1.msra.mxu0 0.0
    %1323 = vmatprep.subr.mxu0 0.0
    %1324 = vmatpush1.msra.mxu0 0.0
    %1325 = vmatprep.subr.mxu0 0.0
    %1326 = vmatpush1.msra.mxu0 0.0
    %1327 = vmatprep.subr.mxu0 0.0
    %1328 = vmatpush1.msra.mxu0 0.0
    %1329 = vmatprep.subr.mxu0 0.0
    %1330 = vmatpush1.msra.mxu0 0.0
    %1331 = vmatprep.subr.mxu0 0.0
    %1332 = vmatpush1.msra.mxu0 %v1293
    %1333 = vmatprep.subr.mxu0 0.0
    %1334 = vmatpush1.msra.mxu0 %v1292
    %1335 = vmatprep.subr.mxu0 0.0
    %1336 = vmatpush1.msra.mxu0 %v1291
    %1337 = vmatprep.subr.mxu0 0.0
    %1338 = vmatpush1.msra.mxu0 %v1290
    %1339 = vmatprep.subr.mxu0 0.0
    %1340 = vmatpush2.msra.mxu0 0.0
    %1341 = vmatprep.subr.mxu0 0.0
    %1342 = vmatpush2.msra.mxu0 0.0
    %1343 = vmatprep.subr.mxu0 0.0
    %1344 = vmatpush2.msra.mxu0 0.0
    %1345 = vmatprep.subr.mxu0 0.0
    %1346 = vmatpush2.msra.mxu0 0.0
    %1347 = vmatprep.subr.mxu0 0.0
    %1348 = vmatpush2.msra.mxu0 0.0
    %1349 = vmatprep.subr.mxu0 0.0
    %1350 = vmatpush2.msra.mxu0 0.0
    %1351 = vmatprep.subr.mxu0 0.0
    %1352 = vmatpush2.msra.mxu0 0.0
    %1353 = vmatprep.subr.mxu0 0.0
    %1354 = vmatpush2.msra.mxu0 0.0
    %1355 = vmatprep.subr.mxu0 0.0
    %1356 = vmatpush2.msra.mxu0 0.0
    %1357 = vmatprep.subr.mxu0 0.0
    %1358 = vmatpush2.msra.mxu0 0.0
    %1359 = vmatprep.subr.mxu0 0.0
    %1360 = vmatpush2.msra.mxu0 0.0
    %1361 = vmatprep.subr.mxu0 0.0
    %1362 = vmatpush2.msra.mxu0 0.0
    %1363 = vmatprep.subr.mxu0 0.0
    %1364 = vmatpush2.msra.mxu0 0.0
    %1365 = vmatprep.subr.mxu0 0.0
    %1366 = vmatpush2.msra.mxu0 0.0
    %1367 = vmatprep.subr.mxu0 0.0
    %1368 = vmatpush2.msra.mxu0 0.0
    %1369 = vmatprep.subr.mxu0 0.0
    %1370 = vmatpush2.msra.mxu0 0.0
    %1371 = vmatprep.mubr.f32.mxu0 0.0
    %1372 = vmatmul.mubr.f32.gmra.mxu0 %v1302
    %v1373 = vpop.f32.mrf.mxu0
    %v1374 = vadd.f32 %v1299, %v1373
    %v1375 = vpop.f32.mrf.mxu0
    %1376 = vmatprep.mubr.f32.mxu0 0.0
    %1377 = vmatmul.mubr.f32.gmra.mxu0 %v1305
    %v1378 = vpop.f32.mrf.mxu0
    %v1379 = vadd.f32 %v1299, %v1378
    %v1380 = vpop.f32.mrf.mxu0
    %1381 = vdwg.mxu0
    %v1382 = vmul.f32 %v1374, 0.5
    %v1383 = vmul.f32 %v1379, 0.5
    %v1384 = vmul.f32 %v1374, 0.70710677
    %v1385 = vmul.f32 %v1379, 0.70710677
    %v1386 = verf.f32.pop %v1384
    %v1387 = verf.f32.pop %v1385
    %v1388 = vadd.f32 %v1386, 1.0
    %v1389 = vadd.f32 %v1387, 1.0
    %v1390 = vmul.f32 %v1382, %v1388
    %v1391 = vmul.f32 %v1383, %v1389
    %v1392 = vld [vmem:[%s13] sm:$0xff]
    %v1393 = vld [vmem:[%s13 + $0x8] sm:$0xff]
    %v1394 = vld [vmem:[%s13 + $0x10] sm:$0xff]
    %v1395 = vld [vmem:[%s13 + $0x18] sm:$0xff]
    %v1396 = vld [vmem:[%s13 + $0x20] sm:$0xff]
    %v1397 = vld [vmem:[%s13 + $0x28] sm:$0xff]
    %v1398 = vld [vmem:[%s13 + $0x30] sm:$0xff]
    %v1399 = vld [vmem:[%s13 + $0x38] sm:$0xff]
    %v1400 = vld [vmem:[%s13 + $0x40] sm:$0xff]
    %v1401 = vld [vmem:[%s13 + $0x48] sm:$0xff]
    %v1402 = vld [vmem:[%s13 + $0x50] sm:$0xff]
    %v1403 = vld [vmem:[%s13 + $0x58] sm:$0xff]
    %v1404 = vld [vmem:[%s13 + $0x60] sm:$0xff]
    %v1405 = vld [vmem:[%s13 + $0x68] sm:$0xff]
    %v1406 = vld [vmem:[%s13 + $0x70] sm:$0xff]
    %v1407 = vld [vmem:[%s13 + $0x78] sm:$0xff]
    %1408 = vmatprep.subr.mxu0 0.0
    %1409 = vmatpush1.msra.mxu0 %v1407
    %1410 = vmatprep.subr.mxu0 0.0
    %1411 = vmatpush1.msra.mxu0 %v1406
    %1412 = vmatprep.subr.mxu0 0.0
    %1413 = vmatpush1.msra.mxu0 %v1405
    %1414 = vmatprep.subr.mxu0 0.0
    %1415 = vmatpush1.msra.mxu0 %v1404
    %1416 = vmatprep.subr.mxu0 0.0
    %1417 = vmatpush1.msra.mxu0 %v1403
    %1418 = vmatprep.subr.mxu0 0.0
    %1419 = vmatpush1.msra.mxu0 %v1402
    %1420 = vmatprep.subr.mxu0 0.0
    %1421 = vmatpush1.msra.mxu0 %v1401
    %1422 = vmatprep.subr.mxu0 0.0
    %1423 = vmatpush1.msra.mxu0 %v1400
    %1424 = vmatprep.subr.mxu0 0.0
    %1425 = vmatpush1.msra.mxu0 %v1399
    %1426 = vmatprep.subr.mxu0 0.0
    %1427 = vmatpush1.msra.mxu0 %v1398
    %1428 = vmatprep.subr.mxu0 0.0
    %1429 = vmatpush1.msra.mxu0 %v1397
    %1430 = vmatprep.subr.mxu0 0.0
    %1431 = vmatpush1.msra.mxu0 %v1396
    %1432 = vmatprep.subr.mxu0 0.0
    %1433 = vmatpush1.msra.mxu0 %v1395
    %1434 = vmatprep.subr.mxu0 0.0
    %1435 = vmatpush1.msra.mxu0 %v1394
    %1436 = vmatprep.subr.mxu0 0.0
    %1437 = vmatpush1.msra.mxu0 %v1393
    %1438 = vmatprep.subr.mxu0 0.0
    %1439 = vmatpush1.msra.mxu0 %v1392
    %1440 = vmatprep.subr.mxu0 0.0
    %1441 = vmatpush2.msra.mxu0 0.0
    %1442 = vmatprep.subr.mxu0 0.0
    %1443 = vmatpush2.msra.mxu0 0.0
    %1444 = vmatprep.subr.mxu0 0.0
    %1445 = vmatpush2.msra.mxu0 0.0
    %1446 = vmatprep.subr.mxu0 0.0
    %1447 = vmatpush2.msra.mxu0 0.0
    %1448 = vmatprep.subr.mxu0 0.0
    %1449 = vmatpush2.msra.mxu0 0.0
    %1450 = vmatprep.subr.mxu0 0.0
    %1451 = vmatpush2.msra.mxu0 0.0
    %1452 = vmatprep.subr.mxu0 0.0
    %1453 = vmatpush2.msra.mxu0 0.0
    %1454 = vmatprep.subr.mxu0 0.0
    %1455 = vmatpush2.msra.mxu0 0.0
    %1456 = vmatprep.subr.mxu0 0.0
    %1457 = vmatpush2.msra.mxu0 0.0
    %1458 = vmatprep.subr.mxu0 0.0
    %1459 = vmatpush2.msra.mxu0 0.0
    %1460 = vmatprep.subr.mxu0 0.0
    %1461 = vmatpush2.msra.mxu0 0.0
    %1462 = vmatprep.subr.mxu0 0.0
    %1463 = vmatpush2.msra.mxu0 0.0
    %1464 = vmatprep.subr.mxu0 0.0
    %1465 = vmatpush2.msra.mxu0 0.0
    %1466 = vmatprep.subr.mxu0 0.0
    %1467 = vmatpush2.msra.mxu0 0.0
    %1468 = vmatprep.subr.mxu0 0.0
    %1469 = vmatpush2.msra.mxu0 0.0
    %1470 = vmatprep.subr.mxu0 0.0
    %1471 = vmatpush2.msra.mxu0 0.0
    %1472 = vmatprep.mubr.f32.mxu0 0.0
    %1473 = vmatmul.mubr.f32.gmra.mxu0 %v1390
    %v1474 = vpop.f32.mrf.mxu0
    %v1475 = vadd.f32 0.0, %v1474
    %v1476 = vpop.f32.mrf.mxu0
    %1477 = vmatprep.mubr.f32.mxu0 0.0
    %1478 = vmatmul.mubr.f32.gmra.mxu0 %v1391
    %v1479 = vpop.f32.mrf.mxu0
    %v1480 = vadd.f32 0.0, %v1479
    %v1481 = vpop.f32.mrf.mxu0
    %1482 = vdwg.mxu0
    %v1483 = vadd.f32 %v1244, %v1475
    %v1484 = vadd.f32 %v1245, %v1480
    %v1485 = vld [vmem:[%s14] sm:$0x1]
    %v1487 = vlaneseq
    %v1488 = vshrl.u32 %v1487, 7
    %v1489 = vsub.s32 0, %v1488
    %v1490 = vrot.slane %v1485, %v1489
    %v1492 = vadd.f32 %v1483, %v1490
    %v1493 = vadd.f32 %v1484, %v1490
    %s1494 = scalar_lea.vmem %s4, 1
    %v1495 = vld [vmem:[%s1494] sm:$0x1]
    %s1496 = scalar_lea.vmem %s5, 1
    %v1497 = vld [vmem:[%s1496] sm:$0x1]
    %v1498 = vsel %vm176, %v1492, 0.0
    %1499 = vadd.xlane.f32.xlu0 %v1498
    %v1500 = vpop.xlane.xlu0 %1499
    %v1501 = vsel %vm176, %v1493, 0.0
    %1502 = vadd.xlane.f32.xlu0 %v1501
    %v1503 = vpop.xlane.xlu0 %1502
    %v1504 = vmul.f32 %v1500, %v183
    %v1505 = vmul.f32 %v1503, %v183
    %v1506 = vsub.f32 %v1492, %v1504
    %v1507 = vsub.f32 %v1493, %v1505
    %v1508 = vmul.f32 %v1506, %v1506
    %v1509 = vmul.f32 %v1507, %v1507
    %v1510 = vsel %vm176, %v1508, 0.0
    %1511 = vadd.xlane.f32.xlu0 %v1510
    %v1512 = vpop.xlane.xlu0 %1511
    %v1513 = vsel %vm176, %v1509, 0.0
    %1514 = vadd.xlane.f32.xlu0 %v1513
    %v1515 = vpop.xlane.xlu0 %1514
    %v1516 = vmul.f32 %v1512, %v183
    %v1517 = vmul.f32 %v1515, %v183
    %v1518 = vadd.f32 %v1516, 1e-05
    %v1519 = vadd.f32 %v1517, 1e-05
    %v1520 = vrsqrt.pop %v1518
    %v1521 = vrsqrt.pop %v1519
    %v1522 = vmul.f32 %v1506, %v1520
    %v1523 = vmul.f32 %v1507, %v1521
    %v1525 = vlaneseq
    %v1526 = vshrl.u32 %v1525, 7
    %v1527 = vsub.s32 0, %v1526
    %v1528 = vrot.slane %v1495, %v1527
    %v1530 = vmul.f32 %v1522, %v1528
    %v1531 = vmul.f32 %v1523, %v1528
    %v1533 = vlaneseq
    %v1534 = vshrl.u32 %v1533, 7
    %v1535 = vsub.s32 0, %v1534
    %v1536 = vrot.slane %v1497, %v1535
    %v1538 = vadd.f32 %v1530, %v1536
    %v1539 = vadd.f32 %v1531, %v1536
    %s1540 = scalar_lea.vmem %s6, 32
    %v1541 = vld [vmem:[%s1540] sm:$0xff]
    %v1542 = vld [vmem:[%s1540 + $0x8] sm:$0xff]
    %v1543 = vld [vmem:[%s1540 + $0x10] sm:$0xff]
    %v1544 = vld [vmem:[%s1540 + $0x18] sm:$0xff]
    %v1546 = vsel %vm176, %v1538, 0
    %v1549 = vsel %vm176, %v1539, 0
    %1551 = vmatprep.subr.mxu0 0.0
    %1552 = vmatpush1.msra.mxu0 0.0
    %1553 = vmatprep.subr.mxu0 0.0
    %1554 = vmatpush1.msra.mxu0 0.0
    %1555 = vmatprep.subr.mxu0 0.0
    %1556 = vmatpush1.msra.mxu0 0.0
    %1557 = vmatprep.subr.mxu0 0.0
    %1558 = vmatpush1.msra.mxu0 0.0
    %1559 = vmatprep.subr.mxu0 0.0
    %1560 = vmatpush1.msra.mxu0 0.0
    %1561 = vmatprep.subr.mxu0 0.0
    %1562 = vmatpush1.msra.mxu0 0.0
    %1563 = vmatprep.subr.mxu0 0.0
    %1564 = vmatpush1.msra.mxu0 0.0
    %1565 = vmatprep.subr.mxu0 0.0
    %1566 = vmatpush1.msra.mxu0 0.0
    %1567 = vmatprep.subr.mxu0 0.0
    %1568 = vmatpush1.msra.mxu0 0.0
    %1569 = vmatprep.subr.mxu0 0.0
    %1570 = vmatpush1.msra.mxu0 0.0
    %1571 = vmatprep.subr.mxu0 0.0
    %1572 = vmatpush1.msra.mxu0 0.0
    %1573 = vmatprep.subr.mxu0 0.0
    %1574 = vmatpush1.msra.mxu0 0.0
    %1575 = vmatprep.subr.mxu0 0.0
    %1576 = vmatpush1.msra.mxu0 %v1544
    %1577 = vmatprep.subr.mxu0 0.0
    %1578 = vmatpush1.msra.mxu0 %v1543
    %1579 = vmatprep.subr.mxu0 0.0
    %1580 = vmatpush1.msra.mxu0 %v1542
    %1581 = vmatprep.subr.mxu0 0.0
    %1582 = vmatpush1.msra.mxu0 %v1541
    %1583 = vmatprep.subr.mxu0 0.0
    %1584 = vmatpush2.msra.mxu0 0.0
    %1585 = vmatprep.subr.mxu0 0.0
    %1586 = vmatpush2.msra.mxu0 0.0
    %1587 = vmatprep.subr.mxu0 0.0
    %1588 = vmatpush2.msra.mxu0 0.0
    %1589 = vmatprep.subr.mxu0 0.0
    %1590 = vmatpush2.msra.mxu0 0.0
    %1591 = vmatprep.subr.mxu0 0.0
    %1592 = vmatpush2.msra.mxu0 0.0
    %1593 = vmatprep.subr.mxu0 0.0
    %1594 = vmatpush2.msra.mxu0 0.0
    %1595 = vmatprep.subr.mxu0 0.0
    %1596 = vmatpush2.msra.mxu0 0.0
    %1597 = vmatprep.subr.mxu0 0.0
    %1598 = vmatpush2.msra.mxu0 0.0
    %1599 = vmatprep.subr.mxu0 0.0
    %1600 = vmatpush2.msra.mxu0 0.0
    %1601 = vmatprep.subr.mxu0 0.0
    %1602 = vmatpush2.msra.mxu0 0.0
    %1603 = vmatprep.subr.mxu0 0.0
    %1604 = vmatpush2.msra.mxu0 0.0
    %1605 = vmatprep.subr.mxu0 0.0
    %1606 = vmatpush2.msra.mxu0 0.0
    %1607 = vmatprep.subr.mxu0 0.0
    %1608 = vmatpush2.msra.mxu0 0.0
    %1609 = vmatprep.subr.mxu0 0.0
    %1610 = vmatpush2.msra.mxu0 0.0
    %1611 = vmatprep.subr.mxu0 0.0
    %1612 = vmatpush2.msra.mxu0 0.0
    %1613 = vmatprep.subr.mxu0 0.0
    %1614 = vmatpush2.msra.mxu0 0.0
    %1615 = vmatprep.mubr.f32.mxu0 0.0
    %1616 = vmatmul.mubr.f32.gmra.mxu0 %v1546
    %v1617 = vpop.f32.mrf.mxu0
    %v1618 = vadd.f32 0.0, %v1617
    %v1619 = vpop.f32.mrf.mxu0
    %1620 = vmatprep.mubr.f32.mxu0 0.0
    %1621 = vmatmul.mubr.f32.gmra.mxu0 %v1549
    %v1622 = vpop.f32.mrf.mxu0
    %v1623 = vadd.f32 0.0, %v1622
    %v1624 = vpop.f32.mrf.mxu0
    %1625 = vdwg.mxu0
    %1628 = vrot.lane.b32.xlu0 %v1618, 96
    %v1629 = vpop.permute.xlu0 %1628
    %1630 = vrot.lane.b32.xlu0 %v1623, 96
    %v1631 = vpop.permute.xlu0 %1630
    %v1632 = vsel %vm311, %v1618, 0
    %v1634 = vsel %vm311, %v1623, 0
    %v1636 = vsel %vm311, %v1629, 0
    %v1638 = vsel %vm311, %v1631, 0
    %1640 = vmatprep.subr.mxu0 0.0
    %1641 = vmatpush1.xpose.msra.mxu0 0.0
    %1642 = vmatprep.subr.mxu0 0.0
    %1643 = vmatpush1.xpose.msra.mxu0 0.0
    %1644 = vmatprep.subr.mxu0 0.0
    %1645 = vmatpush1.xpose.msra.mxu0 0.0
    %1646 = vmatprep.subr.mxu0 0.0
    %1647 = vmatpush1.xpose.msra.mxu0 0.0
    %1648 = vmatprep.subr.mxu0 0.0
    %1649 = vmatpush1.xpose.msra.mxu0 0.0
    %1650 = vmatprep.subr.mxu0 0.0
    %1651 = vmatpush1.xpose.msra.mxu0 0.0
    %1652 = vmatprep.subr.mxu0 0.0
    %1653 = vmatpush1.xpose.msra.mxu0 0.0
    %1654 = vmatprep.subr.mxu0 0.0
    %1655 = vmatpush1.xpose.msra.mxu0 0.0
    %1656 = vmatprep.subr.mxu0 0.0
    %1657 = vmatpush1.xpose.msra.mxu0 0.0
    %1658 = vmatprep.subr.mxu0 0.0
    %1659 = vmatpush1.xpose.msra.mxu0 0.0
    %1660 = vmatprep.subr.mxu0 0.0
    %1661 = vmatpush1.xpose.msra.mxu0 0.0
    %1662 = vmatprep.subr.mxu0 0.0
    %1663 = vmatpush1.xpose.msra.mxu0 0.0
    %1664 = vmatprep.subr.mxu0 0.0
    %1665 = vmatpush1.xpose.msra.mxu0 0.0
    %1666 = vmatprep.subr.mxu0 0.0
    %1667 = vmatpush1.xpose.msra.mxu0 0.0
    %1668 = vmatprep.subr.mxu0 0.0
    %1669 = vmatpush1.xpose.msra.mxu0 %v1638
    %1670 = vmatprep.subr.mxu0 0.0
    %1671 = vmatpush1.xpose.msra.mxu0 %v1636
    %1672 = vmatprep.subr.mxu0 0.0
    %1673 = vmatpush2.xpose.msra.mxu0 0.0
    %1674 = vmatprep.subr.mxu0 0.0
    %1675 = vmatpush2.xpose.msra.mxu0 0.0
    %1676 = vmatprep.subr.mxu0 0.0
    %1677 = vmatpush2.xpose.msra.mxu0 0.0
    %1678 = vmatprep.subr.mxu0 0.0
    %1679 = vmatpush2.xpose.msra.mxu0 0.0
    %1680 = vmatprep.subr.mxu0 0.0
    %1681 = vmatpush2.xpose.msra.mxu0 0.0
    %1682 = vmatprep.subr.mxu0 0.0
    %1683 = vmatpush2.xpose.msra.mxu0 0.0
    %1684 = vmatprep.subr.mxu0 0.0
    %1685 = vmatpush2.xpose.msra.mxu0 0.0
    %1686 = vmatprep.subr.mxu0 0.0
    %1687 = vmatpush2.xpose.msra.mxu0 0.0
    %1688 = vmatprep.subr.mxu0 0.0
    %1689 = vmatpush2.xpose.msra.mxu0 0.0
    %1690 = vmatprep.subr.mxu0 0.0
    %1691 = vmatpush2.xpose.msra.mxu0 0.0
    %1692 = vmatprep.subr.mxu0 0.0
    %1693 = vmatpush2.xpose.msra.mxu0 0.0
    %1694 = vmatprep.subr.mxu0 0.0
    %1695 = vmatpush2.xpose.msra.mxu0 0.0
    %1696 = vmatprep.subr.mxu0 0.0
    %1697 = vmatpush2.xpose.msra.mxu0 0.0
    %1698 = vmatprep.subr.mxu0 0.0
    %1699 = vmatpush2.xpose.msra.mxu0 0.0
    %1700 = vmatprep.subr.mxu0 0.0
    %1701 = vmatpush2.xpose.msra.mxu0 0.0
    %1702 = vmatprep.subr.mxu0 0.0
    %1703 = vmatpush2.xpose.msra.mxu0 0.0
    %1704 = vmatprep.mubr.f32.mxu0 0.0
    %1705 = vmatmul.mubr.f32.gmra.mxu0 %v1632
    %v1706 = vpop.f32.mrf.mxu0
    %v1707 = vadd.f32 0.0, %v1706
    %v1708 = vpop.f32.mrf.mxu0
    %1709 = vmatprep.mubr.f32.mxu0 0.0
    %1710 = vmatmul.mubr.f32.gmra.mxu0 %v1634
    %v1711 = vpop.f32.mrf.mxu0
    %v1712 = vadd.f32 0.0, %v1711
    %v1713 = vpop.f32.mrf.mxu0
    %1714 = vdwg.mxu0
    %v1715 = vmul.f32 %v1707, 0.17677669
    %v1716 = vmul.f32 %v1712, 0.17677669
    %v1717 = vadd.f32 %v1715, %v172
    %v1718 = vadd.f32 %v1716, %v173
    %v1719 = vsel %vm399, %v1717, -inf
    %1720 = vmax.xlane.f32.xlu0 %v1719
    %v1721 = vpop.xlane.xlu0 %1720
    %v1722 = vsel %vm399, %v1718, -inf
    %1723 = vmax.xlane.f32.xlu0 %v1722
    %v1724 = vpop.xlane.xlu0 %1723
    %v1725 = vsub.f32 %v1717, %v1721
    %v1726 = vsub.f32 %v1718, %v1724
    %v1727 = vmul.f32 %v1725, 1.442695
    %v1728 = vpow.pop %v1727
    %v1729 = vmul.f32 %v1726, 1.442695
    %v1730 = vpow.pop %v1729
    %v1731 = vsel %vm399, %v1728, 0.0
    %1732 = vadd.xlane.f32.xlu0 %v1731
    %v1733 = vpop.xlane.xlu0 %1732
    %v1734 = vsel %vm399, %v1730, 0.0
    %1735 = vadd.xlane.f32.xlu0 %v1734
    %v1736 = vpop.xlane.xlu0 %1735
    %v1737 = vrcp.pop %v1733
    %v1738 = vrcp.pop %v1736
    %v1739 = vmul.f32 %v1728, %v1737
    %v1740 = vmul.f32 %v1730, %v1738
    %1741 = vrot.lane.b32.xlu0 %v1618, 64
    %v1742 = vpop.permute.xlu0 %1741
    %1743 = vrot.lane.b32.xlu0 %v1623, 64
    %v1744 = vpop.permute.xlu0 %1743
    %v1748 = vsel %vm399, %v1739, 0
    %v1751 = vsel %vm399, %v1740, 0
    %1753 = vmatprep.subr.mxu0 0.0
    %1754 = vmatpush1.msra.mxu0 0.0
    %1755 = vmatprep.subr.mxu0 0.0
    %1756 = vmatpush1.msra.mxu0 0.0
    %1757 = vmatprep.subr.mxu0 0.0
    %1758 = vmatpush1.msra.mxu0 0.0
    %1759 = vmatprep.subr.mxu0 0.0
    %1760 = vmatpush1.msra.mxu0 0.0
    %1761 = vmatprep.subr.mxu0 0.0
    %1762 = vmatpush1.msra.mxu0 0.0
    %1763 = vmatprep.subr.mxu0 0.0
    %1764 = vmatpush1.msra.mxu0 0.0
    %1765 = vmatprep.subr.mxu0 0.0
    %1766 = vmatpush1.msra.mxu0 0.0
    %1767 = vmatprep.subr.mxu0 0.0
    %1768 = vmatpush1.msra.mxu0 0.0
    %1769 = vmatprep.subr.mxu0 0.0
    %1770 = vmatpush1.msra.mxu0 0.0
    %1771 = vmatprep.subr.mxu0 0.0
    %1772 = vmatpush1.msra.mxu0 0.0
    %1773 = vmatprep.subr.mxu0 0.0
    %1774 = vmatpush1.msra.mxu0 0.0
    %1775 = vmatprep.subr.mxu0 0.0
    %1776 = vmatpush1.msra.mxu0 0.0
    %1777 = vmatprep.subr.mxu0 0.0
    %1778 = vmatpush1.msra.mxu0 0.0
    %1779 = vmatprep.subr.mxu0 0.0
    %1780 = vmatpush1.msra.mxu0 0.0
    %1781 = vmatprep.subr.mxu0 0.0
    %1782 = vmatpush1.msra.mxu0 %v1744
    %1783 = vmatprep.subr.mxu0 0.0
    %1784 = vmatpush1.msra.mxu0 %v1742
    %1785 = vmatprep.subr.mxu0 0.0
    %1786 = vmatpush2.msra.mxu0 0.0
    %1787 = vmatprep.subr.mxu0 0.0
    %1788 = vmatpush2.msra.mxu0 0.0
    %1789 = vmatprep.subr.mxu0 0.0
    %1790 = vmatpush2.msra.mxu0 0.0
    %1791 = vmatprep.subr.mxu0 0.0
    %1792 = vmatpush2.msra.mxu0 0.0
    %1793 = vmatprep.subr.mxu0 0.0
    %1794 = vmatpush2.msra.mxu0 0.0
    %1795 = vmatprep.subr.mxu0 0.0
    %1796 = vmatpush2.msra.mxu0 0.0
    %1797 = vmatprep.subr.mxu0 0.0
    %1798 = vmatpush2.msra.mxu0 0.0
    %1799 = vmatprep.subr.mxu0 0.0
    %1800 = vmatpush2.msra.mxu0 0.0
    %1801 = vmatprep.subr.mxu0 0.0
    %1802 = vmatpush2.msra.mxu0 0.0
    %1803 = vmatprep.subr.mxu0 0.0
    %1804 = vmatpush2.msra.mxu0 0.0
    %1805 = vmatprep.subr.mxu0 0.0
    %1806 = vmatpush2.msra.mxu0 0.0
    %1807 = vmatprep.subr.mxu0 0.0
    %1808 = vmatpush2.msra.mxu0 0.0
    %1809 = vmatprep.subr.mxu0 0.0
    %1810 = vmatpush2.msra.mxu0 0.0
    %1811 = vmatprep.subr.mxu0 0.0
    %1812 = vmatpush2.msra.mxu0 0.0
    %1813 = vmatprep.subr.mxu0 0.0
    %1814 = vmatpush2.msra.mxu0 0.0
    %1815 = vmatprep.subr.mxu0 0.0
    %1816 = vmatpush2.msra.mxu0 0.0
    %1817 = vmatprep.mubr.f32.mxu0 0.0
    %1818 = vmatmul.mubr.f32.gmra.mxu0 %v1748
    %v1819 = vpop.f32.mrf.mxu0
    %v1820 = vadd.f32 0.0, %v1819
    %v1821 = vpop.f32.mrf.mxu0
    %1822 = vmatprep.mubr.f32.mxu0 0.0
    %1823 = vmatmul.mubr.f32.gmra.mxu0 %v1751
    %v1824 = vpop.f32.mrf.mxu0
    %v1825 = vadd.f32 0.0, %v1824
    %v1826 = vpop.f32.mrf.mxu0
    %1827 = vdwg.mxu0
    %1828 = vrot.lane.b32.xlu0 %v1618, 120
    %v1829 = vpop.permute.xlu0 %1828
    %1830 = vrot.lane.b32.xlu0 %v1623, 120
    %v1831 = vpop.permute.xlu0 %1830
    %1832 = vrot.lane.b32.xlu0 %v1618, 88
    %v1833 = vpop.permute.xlu0 %1832
    %1834 = vrot.lane.b32.xlu0 %v1623, 88
    %v1835 = vpop.permute.xlu0 %1834
    %v1836 = vsel %vm311, %v1829, 0
    %v1838 = vsel %vm311, %v1831, 0
    %v1840 = vsel %vm311, %v1833, 0
    %v1842 = vsel %vm311, %v1835, 0
    %1844 = vmatprep.subr.mxu0 0.0
    %1845 = vmatpush1.xpose.msra.mxu0 0.0
    %1846 = vmatprep.subr.mxu0 0.0
    %1847 = vmatpush1.xpose.msra.mxu0 0.0
    %1848 = vmatprep.subr.mxu0 0.0
    %1849 = vmatpush1.xpose.msra.mxu0 0.0
    %1850 = vmatprep.subr.mxu0 0.0
    %1851 = vmatpush1.xpose.msra.mxu0 0.0
    %1852 = vmatprep.subr.mxu0 0.0
    %1853 = vmatpush1.xpose.msra.mxu0 0.0
    %1854 = vmatprep.subr.mxu0 0.0
    %1855 = vmatpush1.xpose.msra.mxu0 0.0
    %1856 = vmatprep.subr.mxu0 0.0
    %1857 = vmatpush1.xpose.msra.mxu0 0.0
    %1858 = vmatprep.subr.mxu0 0.0
    %1859 = vmatpush1.xpose.msra.mxu0 0.0
    %1860 = vmatprep.subr.mxu0 0.0
    %1861 = vmatpush1.xpose.msra.mxu0 0.0
    %1862 = vmatprep.subr.mxu0 0.0
    %1863 = vmatpush1.xpose.msra.mxu0 0.0
    %1864 = vmatprep.subr.mxu0 0.0
    %1865 = vmatpush1.xpose.msra.mxu0 0.0
    %1866 = vmatprep.subr.mxu0 0.0
    %1867 = vmatpush1.xpose.msra.mxu0 0.0
    %1868 = vmatprep.subr.mxu0 0.0
    %1869 = vmatpush1.xpose.msra.mxu0 0.0
    %1870 = vmatprep.subr.mxu0 0.0
    %1871 = vmatpush1.xpose.msra.mxu0 0.0
    %1872 = vmatprep.subr.mxu0 0.0
    %1873 = vmatpush1.xpose.msra.mxu0 %v1842
    %1874 = vmatprep.subr.mxu0 0.0
    %1875 = vmatpush1.xpose.msra.mxu0 %v1840
    %1876 = vmatprep.subr.mxu0 0.0
    %1877 = vmatpush2.xpose.msra.mxu0 0.0
    %1878 = vmatprep.subr.mxu0 0.0
    %1879 = vmatpush2.xpose.msra.mxu0 0.0
    %1880 = vmatprep.subr.mxu0 0.0
    %1881 = vmatpush2.xpose.msra.mxu0 0.0
    %1882 = vmatprep.subr.mxu0 0.0
    %1883 = vmatpush2.xpose.msra.mxu0 0.0
    %1884 = vmatprep.subr.mxu0 0.0
    %1885 = vmatpush2.xpose.msra.mxu0 0.0
    %1886 = vmatprep.subr.mxu0 0.0
    %1887 = vmatpush2.xpose.msra.mxu0 0.0
    %1888 = vmatprep.subr.mxu0 0.0
    %1889 = vmatpush2.xpose.msra.mxu0 0.0
    %1890 = vmatprep.subr.mxu0 0.0
    %1891 = vmatpush2.xpose.msra.mxu0 0.0
    %1892 = vmatprep.subr.mxu0 0.0
    %1893 = vmatpush2.xpose.msra.mxu0 0.0
    %1894 = vmatprep.subr.mxu0 0.0
    %1895 = vmatpush2.xpose.msra.mxu0 0.0
    %1896 = vmatprep.subr.mxu0 0.0
    %1897 = vmatpush2.xpose.msra.mxu0 0.0
    %1898 = vmatprep.subr.mxu0 0.0
    %1899 = vmatpush2.xpose.msra.mxu0 0.0
    %1900 = vmatprep.subr.mxu0 0.0
    %1901 = vmatpush2.xpose.msra.mxu0 0.0
    %1902 = vmatprep.subr.mxu0 0.0
    %1903 = vmatpush2.xpose.msra.mxu0 0.0
    %1904 = vmatprep.subr.mxu0 0.0
    %1905 = vmatpush2.xpose.msra.mxu0 0.0
    %1906 = vmatprep.subr.mxu0 0.0
    %1907 = vmatpush2.xpose.msra.mxu0 0.0
    %1908 = vmatprep.mubr.f32.mxu0 0.0
    %1909 = vmatmul.mubr.f32.gmra.mxu0 %v1836
    %v1910 = vpop.f32.mrf.mxu0
    %v1911 = vadd.f32 0.0, %v1910
    %v1912 = vpop.f32.mrf.mxu0
    %1913 = vmatprep.mubr.f32.mxu0 0.0
    %1914 = vmatmul.mubr.f32.gmra.mxu0 %v1838
    %v1915 = vpop.f32.mrf.mxu0
    %v1916 = vadd.f32 0.0, %v1915
    %v1917 = vpop.f32.mrf.mxu0
    %1918 = vdwg.mxu0
    %v1919 = vmul.f32 %v1911, 0.17677669
    %v1920 = vmul.f32 %v1916, 0.17677669
    %v1921 = vadd.f32 %v1919, %v172
    %v1922 = vadd.f32 %v1920, %v173
    %v1923 = vsel %vm399, %v1921, -inf
    %1924 = vmax.xlane.f32.xlu0 %v1923
    %v1925 = vpop.xlane.xlu0 %1924
    %v1926 = vsel %vm399, %v1922, -inf
    %1927 = vmax.xlane.f32.xlu0 %v1926
    %v1928 = vpop.xlane.xlu0 %1927
    %v1929 = vsub.f32 %v1921, %v1925
    %v1930 = vsub.f32 %v1922, %v1928
    %v1931 = vmul.f32 %v1929, 1.442695
    %v1932 = vpow.pop %v1931
    %v1933 = vmul.f32 %v1930, 1.442695
    %v1934 = vpow.pop %v1933
    %v1935 = vsel %vm399, %v1932, 0.0
    %1936 = vadd.xlane.f32.xlu0 %v1935
    %v1937 = vpop.xlane.xlu0 %1936
    %v1938 = vsel %vm399, %v1934, 0.0
    %1939 = vadd.xlane.f32.xlu0 %v1938
    %v1940 = vpop.xlane.xlu0 %1939
    %v1941 = vrcp.pop %v1937
    %v1942 = vrcp.pop %v1940
    %v1943 = vmul.f32 %v1932, %v1941
    %v1944 = vmul.f32 %v1934, %v1942
    %1945 = vrot.lane.b32.xlu0 %v1618, 56
    %v1946 = vpop.permute.xlu0 %1945
    %1947 = vrot.lane.b32.xlu0 %v1623, 56
    %v1948 = vpop.permute.xlu0 %1947
    %v1952 = vsel %vm399, %v1943, 0
    %v1955 = vsel %vm399, %v1944, 0
    %1957 = vmatprep.subr.mxu0 0.0
    %1958 = vmatpush1.msra.mxu0 0.0
    %1959 = vmatprep.subr.mxu0 0.0
    %1960 = vmatpush1.msra.mxu0 0.0
    %1961 = vmatprep.subr.mxu0 0.0
    %1962 = vmatpush1.msra.mxu0 0.0
    %1963 = vmatprep.subr.mxu0 0.0
    %1964 = vmatpush1.msra.mxu0 0.0
    %1965 = vmatprep.subr.mxu0 0.0
    %1966 = vmatpush1.msra.mxu0 0.0
    %1967 = vmatprep.subr.mxu0 0.0
    %1968 = vmatpush1.msra.mxu0 0.0
    %1969 = vmatprep.subr.mxu0 0.0
    %1970 = vmatpush1.msra.mxu0 0.0
    %1971 = vmatprep.subr.mxu0 0.0
    %1972 = vmatpush1.msra.mxu0 0.0
    %1973 = vmatprep.subr.mxu0 0.0
    %1974 = vmatpush1.msra.mxu0 0.0
    %1975 = vmatprep.subr.mxu0 0.0
    %1976 = vmatpush1.msra.mxu0 0.0
    %1977 = vmatprep.subr.mxu0 0.0
    %1978 = vmatpush1.msra.mxu0 0.0
    %1979 = vmatprep.subr.mxu0 0.0
    %1980 = vmatpush1.msra.mxu0 0.0
    %1981 = vmatprep.subr.mxu0 0.0
    %1982 = vmatpush1.msra.mxu0 0.0
    %1983 = vmatprep.subr.mxu0 0.0
    %1984 = vmatpush1.msra.mxu0 0.0
    %1985 = vmatprep.subr.mxu0 0.0
    %1986 = vmatpush1.msra.mxu0 %v1948
    %1987 = vmatprep.subr.mxu0 0.0
    %1988 = vmatpush1.msra.mxu0 %v1946
    %1989 = vmatprep.subr.mxu0 0.0
    %1990 = vmatpush2.msra.mxu0 0.0
    %1991 = vmatprep.subr.mxu0 0.0
    %1992 = vmatpush2.msra.mxu0 0.0
    %1993 = vmatprep.subr.mxu0 0.0
    %1994 = vmatpush2.msra.mxu0 0.0
    %1995 = vmatprep.subr.mxu0 0.0
    %1996 = vmatpush2.msra.mxu0 0.0
    %1997 = vmatprep.subr.mxu0 0.0
    %1998 = vmatpush2.msra.mxu0 0.0
    %1999 = vmatprep.subr.mxu0 0.0
    %2000 = vmatpush2.msra.mxu0 0.0
    %2001 = vmatprep.subr.mxu0 0.0
    %2002 = vmatpush2.msra.mxu0 0.0
    %2003 = vmatprep.subr.mxu0 0.0
    %2004 = vmatpush2.msra.mxu0 0.0
    %2005 = vmatprep.subr.mxu0 0.0
    %2006 = vmatpush2.msra.mxu0 0.0
    %2007 = vmatprep.subr.mxu0 0.0
    %2008 = vmatpush2.msra.mxu0 0.0
    %2009 = vmatprep.subr.mxu0 0.0
    %2010 = vmatpush2.msra.mxu0 0.0
    %2011 = vmatprep.subr.mxu0 0.0
    %2012 = vmatpush2.msra.mxu0 0.0
    %2013 = vmatprep.subr.mxu0 0.0
    %2014 = vmatpush2.msra.mxu0 0.0
    %2015 = vmatprep.subr.mxu0 0.0
    %2016 = vmatpush2.msra.mxu0 0.0
    %2017 = vmatprep.subr.mxu0 0.0
    %2018 = vmatpush2.msra.mxu0 0.0
    %2019 = vmatprep.subr.mxu0 0.0
    %2020 = vmatpush2.msra.mxu0 0.0
    %2021 = vmatprep.mubr.f32.mxu0 0.0
    %2022 = vmatmul.mubr.f32.gmra.mxu0 %v1952
    %v2023 = vpop.f32.mrf.mxu0
    %v2024 = vadd.f32 0.0, %v2023
    %v2025 = vpop.f32.mrf.mxu0
    %2026 = vmatprep.mubr.f32.mxu0 0.0
    %2027 = vmatmul.mubr.f32.gmra.mxu0 %v1955
    %v2028 = vpop.f32.mrf.mxu0
    %v2029 = vadd.f32 0.0, %v2028
    %v2030 = vpop.f32.mrf.mxu0
    %2031 = vdwg.mxu0
    %2032 = vrot.lane.b32.xlu0 %v1618, 112
    %v2033 = vpop.permute.xlu0 %2032
    %2034 = vrot.lane.b32.xlu0 %v1623, 112
    %v2035 = vpop.permute.xlu0 %2034
    %2036 = vrot.lane.b32.xlu0 %v1618, 80
    %v2037 = vpop.permute.xlu0 %2036
    %2038 = vrot.lane.b32.xlu0 %v1623, 80
    %v2039 = vpop.permute.xlu0 %2038
    %v2040 = vsel %vm311, %v2033, 0
    %v2042 = vsel %vm311, %v2035, 0
    %v2044 = vsel %vm311, %v2037, 0
    %v2046 = vsel %vm311, %v2039, 0
    %2048 = vmatprep.subr.mxu0 0.0
    %2049 = vmatpush1.xpose.msra.mxu0 0.0
    %2050 = vmatprep.subr.mxu0 0.0
    %2051 = vmatpush1.xpose.msra.mxu0 0.0
    %2052 = vmatprep.subr.mxu0 0.0
    %2053 = vmatpush1.xpose.msra.mxu0 0.0
    %2054 = vmatprep.subr.mxu0 0.0
    %2055 = vmatpush1.xpose.msra.mxu0 0.0
    %2056 = vmatprep.subr.mxu0 0.0
    %2057 = vmatpush1.xpose.msra.mxu0 0.0
    %2058 = vmatprep.subr.mxu0 0.0
    %2059 = vmatpush1.xpose.msra.mxu0 0.0
    %2060 = vmatprep.subr.mxu0 0.0
    %2061 = vmatpush1.xpose.msra.mxu0 0.0
    %2062 = vmatprep.subr.mxu0 0.0
    %2063 = vmatpush1.xpose.msra.mxu0 0.0
    %2064 = vmatprep.subr.mxu0 0.0
    %2065 = vmatpush1.xpose.msra.mxu0 0.0
    %2066 = vmatprep.subr.mxu0 0.0
    %2067 = vmatpush1.xpose.msra.mxu0 0.0
    %2068 = vmatprep.subr.mxu0 0.0
    %2069 = vmatpush1.xpose.msra.mxu0 0.0
    %2070 = vmatprep.subr.mxu0 0.0
    %2071 = vmatpush1.xpose.msra.mxu0 0.0
    %2072 = vmatprep.subr.mxu0 0.0
    %2073 = vmatpush1.xpose.msra.mxu0 0.0
    %2074 = vmatprep.subr.mxu0 0.0
    %2075 = vmatpush1.xpose.msra.mxu0 0.0
    %2076 = vmatprep.subr.mxu0 0.0
    %2077 = vmatpush1.xpose.msra.mxu0 %v2046
    %2078 = vmatprep.subr.mxu0 0.0
    %2079 = vmatpush1.xpose.msra.mxu0 %v2044
    %2080 = vmatprep.subr.mxu0 0.0
    %2081 = vmatpush2.xpose.msra.mxu0 0.0
    %2082 = vmatprep.subr.mxu0 0.0
    %2083 = vmatpush2.xpose.msra.mxu0 0.0
    %2084 = vmatprep.subr.mxu0 0.0
    %2085 = vmatpush2.xpose.msra.mxu0 0.0
    %2086 = vmatprep.subr.mxu0 0.0
    %2087 = vmatpush2.xpose.msra.mxu0 0.0
    %2088 = vmatprep.subr.mxu0 0.0
    %2089 = vmatpush2.xpose.msra.mxu0 0.0
    %2090 = vmatprep.subr.mxu0 0.0
    %2091 = vmatpush2.xpose.msra.mxu0 0.0
    %2092 = vmatprep.subr.mxu0 0.0
    %2093 = vmatpush2.xpose.msra.mxu0 0.0
    %2094 = vmatprep.subr.mxu0 0.0
    %2095 = vmatpush2.xpose.msra.mxu0 0.0
    %2096 = vmatprep.subr.mxu0 0.0
    %2097 = vmatpush2.xpose.msra.mxu0 0.0
    %2098 = vmatprep.subr.mxu0 0.0
    %2099 = vmatpush2.xpose.msra.mxu0 0.0
    %2100 = vmatprep.subr.mxu0 0.0
    %2101 = vmatpush2.xpose.msra.mxu0 0.0
    %2102 = vmatprep.subr.mxu0 0.0
    %2103 = vmatpush2.xpose.msra.mxu0 0.0
    %2104 = vmatprep.subr.mxu0 0.0
    %2105 = vmatpush2.xpose.msra.mxu0 0.0
    %2106 = vmatprep.subr.mxu0 0.0
    %2107 = vmatpush2.xpose.msra.mxu0 0.0
    %2108 = vmatprep.subr.mxu0 0.0
    %2109 = vmatpush2.xpose.msra.mxu0 0.0
    %2110 = vmatprep.subr.mxu0 0.0
    %2111 = vmatpush2.xpose.msra.mxu0 0.0
    %2112 = vmatprep.mubr.f32.mxu0 0.0
    %2113 = vmatmul.mubr.f32.gmra.mxu0 %v2040
    %v2114 = vpop.f32.mrf.mxu0
    %v2115 = vadd.f32 0.0, %v2114
    %v2116 = vpop.f32.mrf.mxu0
    %2117 = vmatprep.mubr.f32.mxu0 0.0
    %2118 = vmatmul.mubr.f32.gmra.mxu0 %v2042
    %v2119 = vpop.f32.mrf.mxu0
    %v2120 = vadd.f32 0.0, %v2119
    %v2121 = vpop.f32.mrf.mxu0
    %2122 = vdwg.mxu0
    %v2123 = vmul.f32 %v2115, 0.17677669
    %v2124 = vmul.f32 %v2120, 0.17677669
    %v2125 = vadd.f32 %v2123, %v172
    %v2126 = vadd.f32 %v2124, %v173
    %v2127 = vsel %vm399, %v2125, -inf
    %2128 = vmax.xlane.f32.xlu0 %v2127
    %v2129 = vpop.xlane.xlu0 %2128
    %v2130 = vsel %vm399, %v2126, -inf
    %2131 = vmax.xlane.f32.xlu0 %v2130
    %v2132 = vpop.xlane.xlu0 %2131
    %v2133 = vsub.f32 %v2125, %v2129
    %v2134 = vsub.f32 %v2126, %v2132
    %v2135 = vmul.f32 %v2133, 1.442695
    %v2136 = vpow.pop %v2135
    %v2137 = vmul.f32 %v2134, 1.442695
    %v2138 = vpow.pop %v2137
    %v2139 = vsel %vm399, %v2136, 0.0
    %2140 = vadd.xlane.f32.xlu0 %v2139
    %v2141 = vpop.xlane.xlu0 %2140
    %v2142 = vsel %vm399, %v2138, 0.0
    %2143 = vadd.xlane.f32.xlu0 %v2142
    %v2144 = vpop.xlane.xlu0 %2143
    %v2145 = vrcp.pop %v2141
    %v2146 = vrcp.pop %v2144
    %v2147 = vmul.f32 %v2136, %v2145
    %v2148 = vmul.f32 %v2138, %v2146
    %2149 = vrot.lane.b32.xlu0 %v1618, 48
    %v2150 = vpop.permute.xlu0 %2149
    %2151 = vrot.lane.b32.xlu0 %v1623, 48
    %v2152 = vpop.permute.xlu0 %2151
    %v2156 = vsel %vm399, %v2147, 0
    %v2159 = vsel %vm399, %v2148, 0
    %2161 = vmatprep.subr.mxu0 0.0
    %2162 = vmatpush1.msra.mxu0 0.0
    %2163 = vmatprep.subr.mxu0 0.0
    %2164 = vmatpush1.msra.mxu0 0.0
    %2165 = vmatprep.subr.mxu0 0.0
    %2166 = vmatpush1.msra.mxu0 0.0
    %2167 = vmatprep.subr.mxu0 0.0
    %2168 = vmatpush1.msra.mxu0 0.0
    %2169 = vmatprep.subr.mxu0 0.0
    %2170 = vmatpush1.msra.mxu0 0.0
    %2171 = vmatprep.subr.mxu0 0.0
    %2172 = vmatpush1.msra.mxu0 0.0
    %2173 = vmatprep.subr.mxu0 0.0
    %2174 = vmatpush1.msra.mxu0 0.0
    %2175 = vmatprep.subr.mxu0 0.0
    %2176 = vmatpush1.msra.mxu0 0.0
    %2177 = vmatprep.subr.mxu0 0.0
    %2178 = vmatpush1.msra.mxu0 0.0
    %2179 = vmatprep.subr.mxu0 0.0
    %2180 = vmatpush1.msra.mxu0 0.0
    %2181 = vmatprep.subr.mxu0 0.0
    %2182 = vmatpush1.msra.mxu0 0.0
    %2183 = vmatprep.subr.mxu0 0.0
    %2184 = vmatpush1.msra.mxu0 0.0
    %2185 = vmatprep.subr.mxu0 0.0
    %2186 = vmatpush1.msra.mxu0 0.0
    %2187 = vmatprep.subr.mxu0 0.0
    %2188 = vmatpush1.msra.mxu0 0.0
    %2189 = vmatprep.subr.mxu0 0.0
    %2190 = vmatpush1.msra.mxu0 %v2152
    %2191 = vmatprep.subr.mxu0 0.0
    %2192 = vmatpush1.msra.mxu0 %v2150
    %2193 = vmatprep.subr.mxu0 0.0
    %2194 = vmatpush2.msra.mxu0 0.0
    %2195 = vmatprep.subr.mxu0 0.0
    %2196 = vmatpush2.msra.mxu0 0.0
    %2197 = vmatprep.subr.mxu0 0.0
    %2198 = vmatpush2.msra.mxu0 0.0
    %2199 = vmatprep.subr.mxu0 0.0
    %2200 = vmatpush2.msra.mxu0 0.0
    %2201 = vmatprep.subr.mxu0 0.0
    %2202 = vmatpush2.msra.mxu0 0.0
    %2203 = vmatprep.subr.mxu0 0.0
    %2204 = vmatpush2.msra.mxu0 0.0
    %2205 = vmatprep.subr.mxu0 0.0
    %2206 = vmatpush2.msra.mxu0 0.0
    %2207 = vmatprep.subr.mxu0 0.0
    %2208 = vmatpush2.msra.mxu0 0.0
    %2209 = vmatprep.subr.mxu0 0.0
    %2210 = vmatpush2.msra.mxu0 0.0
    %2211 = vmatprep.subr.mxu0 0.0
    %2212 = vmatpush2.msra.mxu0 0.0
    %2213 = vmatprep.subr.mxu0 0.0
    %2214 = vmatpush2.msra.mxu0 0.0
    %2215 = vmatprep.subr.mxu0 0.0
    %2216 = vmatpush2.msra.mxu0 0.0
    %2217 = vmatprep.subr.mxu0 0.0
    %2218 = vmatpush2.msra.mxu0 0.0
    %2219 = vmatprep.subr.mxu0 0.0
    %2220 = vmatpush2.msra.mxu0 0.0
    %2221 = vmatprep.subr.mxu0 0.0
    %2222 = vmatpush2.msra.mxu0 0.0
    %2223 = vmatprep.subr.mxu0 0.0
    %2224 = vmatpush2.msra.mxu0 0.0
    %2225 = vmatprep.mubr.f32.mxu0 0.0
    %2226 = vmatmul.mubr.f32.gmra.mxu0 %v2156
    %v2227 = vpop.f32.mrf.mxu0
    %v2228 = vadd.f32 0.0, %v2227
    %v2229 = vpop.f32.mrf.mxu0
    %2230 = vmatprep.mubr.f32.mxu0 0.0
    %2231 = vmatmul.mubr.f32.gmra.mxu0 %v2159
    %v2232 = vpop.f32.mrf.mxu0
    %v2233 = vadd.f32 0.0, %v2232
    %v2234 = vpop.f32.mrf.mxu0
    %2235 = vdwg.mxu0
    %2236 = vrot.lane.b32.xlu0 %v1618, 104
    %v2237 = vpop.permute.xlu0 %2236
    %2238 = vrot.lane.b32.xlu0 %v1623, 104
    %v2239 = vpop.permute.xlu0 %2238
    %2240 = vrot.lane.b32.xlu0 %v1618, 72
    %v2241 = vpop.permute.xlu0 %2240
    %2242 = vrot.lane.b32.xlu0 %v1623, 72
    %v2243 = vpop.permute.xlu0 %2242
    %v2244 = vsel %vm311, %v2237, 0
    %v2246 = vsel %vm311, %v2239, 0
    %v2248 = vsel %vm311, %v2241, 0
    %v2250 = vsel %vm311, %v2243, 0
    %2252 = vmatprep.subr.mxu0 0.0
    %2253 = vmatpush1.xpose.msra.mxu0 0.0
    %2254 = vmatprep.subr.mxu0 0.0
    %2255 = vmatpush1.xpose.msra.mxu0 0.0
    %2256 = vmatprep.subr.mxu0 0.0
    %2257 = vmatpush1.xpose.msra.mxu0 0.0
    %2258 = vmatprep.subr.mxu0 0.0
    %2259 = vmatpush1.xpose.msra.mxu0 0.0
    %2260 = vmatprep.subr.mxu0 0.0
    %2261 = vmatpush1.xpose.msra.mxu0 0.0
    %2262 = vmatprep.subr.mxu0 0.0
    %2263 = vmatpush1.xpose.msra.mxu0 0.0
    %2264 = vmatprep.subr.mxu0 0.0
    %2265 = vmatpush1.xpose.msra.mxu0 0.0
    %2266 = vmatprep.subr.mxu0 0.0
    %2267 = vmatpush1.xpose.msra.mxu0 0.0
    %2268 = vmatprep.subr.mxu0 0.0
    %2269 = vmatpush1.xpose.msra.mxu0 0.0
    %2270 = vmatprep.subr.mxu0 0.0
    %2271 = vmatpush1.xpose.msra.mxu0 0.0
    %2272 = vmatprep.subr.mxu0 0.0
    %2273 = vmatpush1.xpose.msra.mxu0 0.0
    %2274 = vmatprep.subr.mxu0 0.0
    %2275 = vmatpush1.xpose.msra.mxu0 0.0
    %2276 = vmatprep.subr.mxu0 0.0
    %2277 = vmatpush1.xpose.msra.mxu0 0.0
    %2278 = vmatprep.subr.mxu0 0.0
    %2279 = vmatpush1.xpose.msra.mxu0 0.0
    %2280 = vmatprep.subr.mxu0 0.0
    %2281 = vmatpush1.xpose.msra.mxu0 %v2250
    %2282 = vmatprep.subr.mxu0 0.0
    %2283 = vmatpush1.xpose.msra.mxu0 %v2248
    %2284 = vmatprep.subr.mxu0 0.0
    %2285 = vmatpush2.xpose.msra.mxu0 0.0
    %2286 = vmatprep.subr.mxu0 0.0
    %2287 = vmatpush2.xpose.msra.mxu0 0.0
    %2288 = vmatprep.subr.mxu0 0.0
    %2289 = vmatpush2.xpose.msra.mxu0 0.0
    %2290 = vmatprep.subr.mxu0 0.0
    %2291 = vmatpush2.xpose.msra.mxu0 0.0
    %2292 = vmatprep.subr.mxu0 0.0
    %2293 = vmatpush2.xpose.msra.mxu0 0.0
    %2294 = vmatprep.subr.mxu0 0.0
    %2295 = vmatpush2.xpose.msra.mxu0 0.0
    %2296 = vmatprep.subr.mxu0 0.0
    %2297 = vmatpush2.xpose.msra.mxu0 0.0
    %2298 = vmatprep.subr.mxu0 0.0
    %2299 = vmatpush2.xpose.msra.mxu0 0.0
    %2300 = vmatprep.subr.mxu0 0.0
    %2301 = vmatpush2.xpose.msra.mxu0 0.0
    %2302 = vmatprep.subr.mxu0 0.0
    %2303 = vmatpush2.xpose.msra.mxu0 0.0
    %2304 = vmatprep.subr.mxu0 0.0
    %2305 = vmatpush2.xpose.msra.mxu0 0.0
    %2306 = vmatprep.subr.mxu0 0.0
    %2307 = vmatpush2.xpose.msra.mxu0 0.0
    %2308 = vmatprep.subr.mxu0 0.0
    %2309 = vmatpush2.xpose.msra.mxu0 0.0
    %2310 = vmatprep.subr.mxu0 0.0
    %2311 = vmatpush2.xpose.msra.mxu0 0.0
    %2312 = vmatprep.subr.mxu0 0.0
    %2313 = vmatpush2.xpose.msra.mxu0 0.0
    %2314 = vmatprep.subr.mxu0 0.0
    %2315 = vmatpush2.xpose.msra.mxu0 0.0
    %2316 = vmatprep.mubr.f32.mxu0 0.0
    %2317 = vmatmul.mubr.f32.gmra.mxu0 %v2244
    %v2318 = vpop.f32.mrf.mxu0
    %v2319 = vadd.f32 0.0, %v2318
    %v2320 = vpop.f32.mrf.mxu0
    %2321 = vmatprep.mubr.f32.mxu0 0.0
    %2322 = vmatmul.mubr.f32.gmra.mxu0 %v2246
    %v2323 = vpop.f32.mrf.mxu0
    %v2324 = vadd.f32 0.0, %v2323
    %v2325 = vpop.f32.mrf.mxu0
    %2326 = vdwg.mxu0
    %v2327 = vmul.f32 %v2319, 0.17677669
    %v2328 = vmul.f32 %v2324, 0.17677669
    %v2329 = vadd.f32 %v2327, %v172
    %v2330 = vadd.f32 %v2328, %v173
    %v2331 = vsel %vm399, %v2329, -inf
    %2332 = vmax.xlane.f32.xlu0 %v2331
    %v2333 = vpop.xlane.xlu0 %2332
    %v2334 = vsel %vm399, %v2330, -inf
    %2335 = vmax.xlane.f32.xlu0 %v2334
    %v2336 = vpop.xlane.xlu0 %2335
    %v2337 = vsub.f32 %v2329, %v2333
    %v2338 = vsub.f32 %v2330, %v2336
    %v2339 = vmul.f32 %v2337, 1.442695
    %v2340 = vpow.pop %v2339
    %v2341 = vmul.f32 %v2338, 1.442695
    %v2342 = vpow.pop %v2341
    %v2343 = vsel %vm399, %v2340, 0.0
    %2344 = vadd.xlane.f32.xlu0 %v2343
    %v2345 = vpop.xlane.xlu0 %2344
    %v2346 = vsel %vm399, %v2342, 0.0
    %2347 = vadd.xlane.f32.xlu0 %v2346
    %v2348 = vpop.xlane.xlu0 %2347
    %v2349 = vrcp.pop %v2345
    %v2350 = vrcp.pop %v2348
    %v2351 = vmul.f32 %v2340, %v2349
    %v2352 = vmul.f32 %v2342, %v2350
    %2353 = vrot.lane.b32.xlu0 %v1618, 40
    %v2354 = vpop.permute.xlu0 %2353
    %2355 = vrot.lane.b32.xlu0 %v1623, 40
    %v2356 = vpop.permute.xlu0 %2355
    %v2360 = vsel %vm399, %v2351, 0
    %v2363 = vsel %vm399, %v2352, 0
    %2365 = vmatprep.subr.mxu0 0.0
    %2366 = vmatpush1.msra.mxu0 0.0
    %2367 = vmatprep.subr.mxu0 0.0
    %2368 = vmatpush1.msra.mxu0 0.0
    %2369 = vmatprep.subr.mxu0 0.0
    %2370 = vmatpush1.msra.mxu0 0.0
    %2371 = vmatprep.subr.mxu0 0.0
    %2372 = vmatpush1.msra.mxu0 0.0
    %2373 = vmatprep.subr.mxu0 0.0
    %2374 = vmatpush1.msra.mxu0 0.0
    %2375 = vmatprep.subr.mxu0 0.0
    %2376 = vmatpush1.msra.mxu0 0.0
    %2377 = vmatprep.subr.mxu0 0.0
    %2378 = vmatpush1.msra.mxu0 0.0
    %2379 = vmatprep.subr.mxu0 0.0
    %2380 = vmatpush1.msra.mxu0 0.0
    %2381 = vmatprep.subr.mxu0 0.0
    %2382 = vmatpush1.msra.mxu0 0.0
    %2383 = vmatprep.subr.mxu0 0.0
    %2384 = vmatpush1.msra.mxu0 0.0
    %2385 = vmatprep.subr.mxu0 0.0
    %2386 = vmatpush1.msra.mxu0 0.0
    %2387 = vmatprep.subr.mxu0 0.0
    %2388 = vmatpush1.msra.mxu0 0.0
    %2389 = vmatprep.subr.mxu0 0.0
    %2390 = vmatpush1.msra.mxu0 0.0
    %2391 = vmatprep.subr.mxu0 0.0
    %2392 = vmatpush1.msra.mxu0 0.0
    %2393 = vmatprep.subr.mxu0 0.0
    %2394 = vmatpush1.msra.mxu0 %v2356
    %2395 = vmatprep.subr.mxu0 0.0
    %2396 = vmatpush1.msra.mxu0 %v2354
    %2397 = vmatprep.subr.mxu0 0.0
    %2398 = vmatpush2.msra.mxu0 0.0
    %2399 = vmatprep.subr.mxu0 0.0
    %2400 = vmatpush2.msra.mxu0 0.0
    %2401 = vmatprep.subr.mxu0 0.0
    %2402 = vmatpush2.msra.mxu0 0.0
    %2403 = vmatprep.subr.mxu0 0.0
    %2404 = vmatpush2.msra.mxu0 0.0
    %2405 = vmatprep.subr.mxu0 0.0
    %2406 = vmatpush2.msra.mxu0 0.0
    %2407 = vmatprep.subr.mxu0 0.0
    %2408 = vmatpush2.msra.mxu0 0.0
    %2409 = vmatprep.subr.mxu0 0.0
    %2410 = vmatpush2.msra.mxu0 0.0
    %2411 = vmatprep.subr.mxu0 0.0
    %2412 = vmatpush2.msra.mxu0 0.0
    %2413 = vmatprep.subr.mxu0 0.0
    %2414 = vmatpush2.msra.mxu0 0.0
    %2415 = vmatprep.subr.mxu0 0.0
    %2416 = vmatpush2.msra.mxu0 0.0
    %2417 = vmatprep.subr.mxu0 0.0
    %2418 = vmatpush2.msra.mxu0 0.0
    %2419 = vmatprep.subr.mxu0 0.0
    %2420 = vmatpush2.msra.mxu0 0.0
    %2421 = vmatprep.subr.mxu0 0.0
    %2422 = vmatpush2.msra.mxu0 0.0
    %2423 = vmatprep.subr.mxu0 0.0
    %2424 = vmatpush2.msra.mxu0 0.0
    %2425 = vmatprep.subr.mxu0 0.0
    %2426 = vmatpush2.msra.mxu0 0.0
    %2427 = vmatprep.subr.mxu0 0.0
    %2428 = vmatpush2.msra.mxu0 0.0
    %2429 = vmatprep.mubr.f32.mxu0 0.0
    %2430 = vmatmul.mubr.f32.gmra.mxu0 %v2360
    %v2431 = vpop.f32.mrf.mxu0
    %v2432 = vadd.f32 0.0, %v2431
    %v2433 = vpop.f32.mrf.mxu0
    %2434 = vmatprep.mubr.f32.mxu0 0.0
    %2435 = vmatmul.mubr.f32.gmra.mxu0 %v2363
    %v2436 = vpop.f32.mrf.mxu0
    %v2437 = vadd.f32 0.0, %v2436
    %v2438 = vpop.f32.mrf.mxu0
    %2439 = vdwg.mxu0
    %2442 = vrot.lane.b32.xlu0 %v2024, 8
    %v2443 = vpop.permute.xlu0 %2442
    %2444 = vrot.lane.b32.xlu0 %v2029, 8
    %v2445 = vpop.permute.xlu0 %2444
    %2450 = vrot.lane.b32.xlu0 %v2228, 16
    %v2451 = vpop.permute.xlu0 %2450
    %2452 = vrot.lane.b32.xlu0 %v2233, 16
    %v2453 = vpop.permute.xlu0 %2452
    %2458 = vrot.lane.b32.xlu0 %v2432, 24
    %v2459 = vpop.permute.xlu0 %2458
    %2460 = vrot.lane.b32.xlu0 %v2437, 24
    %v2461 = vpop.permute.xlu0 %2460
    %v2464 = vsel %vm311, %v1820, %v2443
    %v2465 = vsel %vm311, %v1825, %v2445
    %v2466 = vsel %vm399, %v2464, %v2451
    %v2467 = vsel %vm399, %v2465, %v2453
    %v2468 = vsel %vm1149, %v2466, %v2459
    %v2469 = vsel %vm1149, %v2467, %v2461
    %s2470 = scalar_lea.vmem %s7, 32
    %v2471 = vld [vmem:[%s2470] sm:$0xff]
    %v2472 = vld [vmem:[%s2470 + $0x8] sm:$0xff]
    %v2473 = vld [vmem:[%s2470 + $0x10] sm:$0xff]
    %v2474 = vld [vmem:[%s2470 + $0x18] sm:$0xff]
    %s2475 = scalar_lea.vmem %s8, 1
    %v2476 = vld [vmem:[%s2475] sm:$0x1]
    %v2478 = vlaneseq
    %v2479 = vshrl.u32 %v2478, 7
    %v2480 = vsub.s32 0, %v2479
    %v2481 = vrot.slane %v2476, %v2480
    %v2484 = vsel %vm176, %v2468, 0
    %v2487 = vsel %vm176, %v2469, 0
    %2489 = vmatprep.subr.mxu0 0.0
    %2490 = vmatpush1.msra.mxu0 0.0
    %2491 = vmatprep.subr.mxu0 0.0
    %2492 = vmatpush1.msra.mxu0 0.0
    %2493 = vmatprep.subr.mxu0 0.0
    %2494 = vmatpush1.msra.mxu0 0.0
    %2495 = vmatprep.subr.mxu0 0.0
    %2496 = vmatpush1.msra.mxu0 0.0
    %2497 = vmatprep.subr.mxu0 0.0
    %2498 = vmatpush1.msra.mxu0 0.0
    %2499 = vmatprep.subr.mxu0 0.0
    %2500 = vmatpush1.msra.mxu0 0.0
    %2501 = vmatprep.subr.mxu0 0.0
    %2502 = vmatpush1.msra.mxu0 0.0
    %2503 = vmatprep.subr.mxu0 0.0
    %2504 = vmatpush1.msra.mxu0 0.0
    %2505 = vmatprep.subr.mxu0 0.0
    %2506 = vmatpush1.msra.mxu0 0.0
    %2507 = vmatprep.subr.mxu0 0.0
    %2508 = vmatpush1.msra.mxu0 0.0
    %2509 = vmatprep.subr.mxu0 0.0
    %2510 = vmatpush1.msra.mxu0 0.0
    %2511 = vmatprep.subr.mxu0 0.0
    %2512 = vmatpush1.msra.mxu0 0.0
    %2513 = vmatprep.subr.mxu0 0.0
    %2514 = vmatpush1.msra.mxu0 %v2474
    %2515 = vmatprep.subr.mxu0 0.0
    %2516 = vmatpush1.msra.mxu0 %v2473
    %2517 = vmatprep.subr.mxu0 0.0
    %2518 = vmatpush1.msra.mxu0 %v2472
    %2519 = vmatprep.subr.mxu0 0.0
    %2520 = vmatpush1.msra.mxu0 %v2471
    %2521 = vmatprep.subr.mxu0 0.0
    %2522 = vmatpush2.msra.mxu0 0.0
    %2523 = vmatprep.subr.mxu0 0.0
    %2524 = vmatpush2.msra.mxu0 0.0
    %2525 = vmatprep.subr.mxu0 0.0
    %2526 = vmatpush2.msra.mxu0 0.0
    %2527 = vmatprep.subr.mxu0 0.0
    %2528 = vmatpush2.msra.mxu0 0.0
    %2529 = vmatprep.subr.mxu0 0.0
    %2530 = vmatpush2.msra.mxu0 0.0
    %2531 = vmatprep.subr.mxu0 0.0
    %2532 = vmatpush2.msra.mxu0 0.0
    %2533 = vmatprep.subr.mxu0 0.0
    %2534 = vmatpush2.msra.mxu0 0.0
    %2535 = vmatprep.subr.mxu0 0.0
    %2536 = vmatpush2.msra.mxu0 0.0
    %2537 = vmatprep.subr.mxu0 0.0
    %2538 = vmatpush2.msra.mxu0 0.0
    %2539 = vmatprep.subr.mxu0 0.0
    %2540 = vmatpush2.msra.mxu0 0.0
    %2541 = vmatprep.subr.mxu0 0.0
    %2542 = vmatpush2.msra.mxu0 0.0
    %2543 = vmatprep.subr.mxu0 0.0
    %2544 = vmatpush2.msra.mxu0 0.0
    %2545 = vmatprep.subr.mxu0 0.0
    %2546 = vmatpush2.msra.mxu0 0.0
    %2547 = vmatprep.subr.mxu0 0.0
    %2548 = vmatpush2.msra.mxu0 0.0
    %2549 = vmatprep.subr.mxu0 0.0
    %2550 = vmatpush2.msra.mxu0 0.0
    %2551 = vmatprep.subr.mxu0 0.0
    %2552 = vmatpush2.msra.mxu0 0.0
    %2553 = vmatprep.mubr.f32.mxu0 0.0
    %2554 = vmatmul.mubr.f32.gmra.mxu0 %v2484
    %v2555 = vpop.f32.mrf.mxu0
    %v2556 = vadd.f32 %v2481, %v2555
    %v2557 = vpop.f32.mrf.mxu0
    %2558 = vmatprep.mubr.f32.mxu0 0.0
    %2559 = vmatmul.mubr.f32.gmra.mxu0 %v2487
    %v2560 = vpop.f32.mrf.mxu0
    %v2561 = vadd.f32 %v2481, %v2560
    %v2562 = vpop.f32.mrf.mxu0
    %2563 = vdwg.mxu0
    %v2564 = vadd.f32 %v1492, %v2556
    %v2565 = vadd.f32 %v1493, %v2561
    %s2566 = scalar_lea.vmem %s9, 1
    %v2567 = vld [vmem:[%s2566] sm:$0x1]
    %s2568 = scalar_lea.vmem %s10, 1
    %v2569 = vld [vmem:[%s2568] sm:$0x1]
    %v2570 = vsel %vm176, %v2564, 0.0
    %2571 = vadd.xlane.f32.xlu0 %v2570
    %v2572 = vpop.xlane.xlu0 %2571
    %v2573 = vsel %vm176, %v2565, 0.0
    %2574 = vadd.xlane.f32.xlu0 %v2573
    %v2575 = vpop.xlane.xlu0 %2574
    %v2576 = vmul.f32 %v2572, %v183
    %v2577 = vmul.f32 %v2575, %v183
    %v2578 = vsub.f32 %v2564, %v2576
    %v2579 = vsub.f32 %v2565, %v2577
    %v2580 = vmul.f32 %v2578, %v2578
    %v2581 = vmul.f32 %v2579, %v2579
    %v2582 = vsel %vm176, %v2580, 0.0
    %2583 = vadd.xlane.f32.xlu0 %v2582
    %v2584 = vpop.xlane.xlu0 %2583
    %v2585 = vsel %vm176, %v2581, 0.0
    %2586 = vadd.xlane.f32.xlu0 %v2585
    %v2587 = vpop.xlane.xlu0 %2586
    %v2588 = vmul.f32 %v2584, %v183
    %v2589 = vmul.f32 %v2587, %v183
    %v2590 = vadd.f32 %v2588, 1e-05
    %v2591 = vadd.f32 %v2589, 1e-05
    %v2592 = vrsqrt.pop %v2590
    %v2593 = vrsqrt.pop %v2591
    %v2594 = vmul.f32 %v2578, %v2592
    %v2595 = vmul.f32 %v2579, %v2593
    %v2597 = vlaneseq
    %v2598 = vshrl.u32 %v2597, 7
    %v2599 = vsub.s32 0, %v2598
    %v2600 = vrot.slane %v2567, %v2599
    %v2602 = vmul.f32 %v2594, %v2600
    %v2603 = vmul.f32 %v2595, %v2600
    %v2605 = vlaneseq
    %v2606 = vshrl.u32 %v2605, 7
    %v2607 = vsub.s32 0, %v2606
    %v2608 = vrot.slane %v2569, %v2607
    %v2610 = vadd.f32 %v2602, %v2608
    %v2611 = vadd.f32 %v2603, %v2608
    %s2612 = scalar_lea.vmem %s11, 32
    %v2613 = vld [vmem:[%s2612] sm:$0xff]
    %v2614 = vld [vmem:[%s2612 + $0x8] sm:$0xff]
    %v2615 = vld [vmem:[%s2612 + $0x10] sm:$0xff]
    %v2616 = vld [vmem:[%s2612 + $0x18] sm:$0xff]
    %s2617 = scalar_lea.vmem %s12, 1
    %v2618 = vld [vmem:[%s2617] sm:$0x1]
    %v2620 = vlaneseq
    %v2621 = vshrl.u32 %v2620, 7
    %v2622 = vsub.s32 0, %v2621
    %v2623 = vrot.slane %v2618, %v2622
    %v2626 = vsel %vm176, %v2610, 0
    %v2629 = vsel %vm176, %v2611, 0
    %2631 = vmatprep.subr.mxu0 0.0
    %2632 = vmatpush1.msra.mxu0 0.0
    %2633 = vmatprep.subr.mxu0 0.0
    %2634 = vmatpush1.msra.mxu0 0.0
    %2635 = vmatprep.subr.mxu0 0.0
    %2636 = vmatpush1.msra.mxu0 0.0
    %2637 = vmatprep.subr.mxu0 0.0
    %2638 = vmatpush1.msra.mxu0 0.0
    %2639 = vmatprep.subr.mxu0 0.0
    %2640 = vmatpush1.msra.mxu0 0.0
    %2641 = vmatprep.subr.mxu0 0.0
    %2642 = vmatpush1.msra.mxu0 0.0
    %2643 = vmatprep.subr.mxu0 0.0
    %2644 = vmatpush1.msra.mxu0 0.0
    %2645 = vmatprep.subr.mxu0 0.0
    %2646 = vmatpush1.msra.mxu0 0.0
    %2647 = vmatprep.subr.mxu0 0.0
    %2648 = vmatpush1.msra.mxu0 0.0
    %2649 = vmatprep.subr.mxu0 0.0
    %2650 = vmatpush1.msra.mxu0 0.0
    %2651 = vmatprep.subr.mxu0 0.0
    %2652 = vmatpush1.msra.mxu0 0.0
    %2653 = vmatprep.subr.mxu0 0.0
    %2654 = vmatpush1.msra.mxu0 0.0
    %2655 = vmatprep.subr.mxu0 0.0
    %2656 = vmatpush1.msra.mxu0 %v2616
    %2657 = vmatprep.subr.mxu0 0.0
    %2658 = vmatpush1.msra.mxu0 %v2615
    %2659 = vmatprep.subr.mxu0 0.0
    %2660 = vmatpush1.msra.mxu0 %v2614
    %2661 = vmatprep.subr.mxu0 0.0
    %2662 = vmatpush1.msra.mxu0 %v2613
    %2663 = vmatprep.subr.mxu0 0.0
    %2664 = vmatpush2.msra.mxu0 0.0
    %2665 = vmatprep.subr.mxu0 0.0
    %2666 = vmatpush2.msra.mxu0 0.0
    %2667 = vmatprep.subr.mxu0 0.0
    %2668 = vmatpush2.msra.mxu0 0.0
    %2669 = vmatprep.subr.mxu0 0.0
    %2670 = vmatpush2.msra.mxu0 0.0
    %2671 = vmatprep.subr.mxu0 0.0
    %2672 = vmatpush2.msra.mxu0 0.0
    %2673 = vmatprep.subr.mxu0 0.0
    %2674 = vmatpush2.msra.mxu0 0.0
    %2675 = vmatprep.subr.mxu0 0.0
    %2676 = vmatpush2.msra.mxu0 0.0
    %2677 = vmatprep.subr.mxu0 0.0
    %2678 = vmatpush2.msra.mxu0 0.0
    %2679 = vmatprep.subr.mxu0 0.0
    %2680 = vmatpush2.msra.mxu0 0.0
    %2681 = vmatprep.subr.mxu0 0.0
    %2682 = vmatpush2.msra.mxu0 0.0
    %2683 = vmatprep.subr.mxu0 0.0
    %2684 = vmatpush2.msra.mxu0 0.0
    %2685 = vmatprep.subr.mxu0 0.0
    %2686 = vmatpush2.msra.mxu0 0.0
    %2687 = vmatprep.subr.mxu0 0.0
    %2688 = vmatpush2.msra.mxu0 0.0
    %2689 = vmatprep.subr.mxu0 0.0
    %2690 = vmatpush2.msra.mxu0 0.0
    %2691 = vmatprep.subr.mxu0 0.0
    %2692 = vmatpush2.msra.mxu0 0.0
    %2693 = vmatprep.subr.mxu0 0.0
    %2694 = vmatpush2.msra.mxu0 0.0
    %2695 = vmatprep.mubr.f32.mxu0 0.0
    %2696 = vmatmul.mubr.f32.gmra.mxu0 %v2626
    %v2697 = vpop.f32.mrf.mxu0
    %v2698 = vadd.f32 %v2623, %v2697
    %v2699 = vpop.f32.mrf.mxu0
    %2700 = vmatprep.mubr.f32.mxu0 0.0
    %2701 = vmatmul.mubr.f32.gmra.mxu0 %v2629
    %v2702 = vpop.f32.mrf.mxu0
    %v2703 = vadd.f32 %v2623, %v2702
    %v2704 = vpop.f32.mrf.mxu0
    %2705 = vdwg.mxu0
    %v2706 = vmul.f32 %v2698, 0.5
    %v2707 = vmul.f32 %v2703, 0.5
    %v2708 = vmul.f32 %v2698, 0.70710677
    %v2709 = vmul.f32 %v2703, 0.70710677
    %v2710 = verf.f32.pop %v2708
    %v2711 = verf.f32.pop %v2709
    %v2712 = vadd.f32 %v2710, 1.0
    %v2713 = vadd.f32 %v2711, 1.0
    %v2714 = vmul.f32 %v2706, %v2712
    %v2715 = vmul.f32 %v2707, %v2713
    %s2716 = scalar_lea.vmem %s13, 128
    %v2717 = vld [vmem:[%s2716] sm:$0xff]
    %v2718 = vld [vmem:[%s2716 + $0x8] sm:$0xff]
    %v2719 = vld [vmem:[%s2716 + $0x10] sm:$0xff]
    %v2720 = vld [vmem:[%s2716 + $0x18] sm:$0xff]
    %v2721 = vld [vmem:[%s2716 + $0x20] sm:$0xff]
    %v2722 = vld [vmem:[%s2716 + $0x28] sm:$0xff]
    %v2723 = vld [vmem:[%s2716 + $0x30] sm:$0xff]
    %v2724 = vld [vmem:[%s2716 + $0x38] sm:$0xff]
    %v2725 = vld [vmem:[%s2716 + $0x40] sm:$0xff]
    %v2726 = vld [vmem:[%s2716 + $0x48] sm:$0xff]
    %v2727 = vld [vmem:[%s2716 + $0x50] sm:$0xff]
    %v2728 = vld [vmem:[%s2716 + $0x58] sm:$0xff]
    %v2729 = vld [vmem:[%s2716 + $0x60] sm:$0xff]
    %v2730 = vld [vmem:[%s2716 + $0x68] sm:$0xff]
    %v2731 = vld [vmem:[%s2716 + $0x70] sm:$0xff]
    %v2732 = vld [vmem:[%s2716 + $0x78] sm:$0xff]
    %2733 = vmatprep.subr.mxu0 0.0
    %2734 = vmatpush1.msra.mxu0 %v2732
    %2735 = vmatprep.subr.mxu0 0.0
    %2736 = vmatpush1.msra.mxu0 %v2731
    %2737 = vmatprep.subr.mxu0 0.0
    %2738 = vmatpush1.msra.mxu0 %v2730
    %2739 = vmatprep.subr.mxu0 0.0
    %2740 = vmatpush1.msra.mxu0 %v2729
    %2741 = vmatprep.subr.mxu0 0.0
    %2742 = vmatpush1.msra.mxu0 %v2728
    %2743 = vmatprep.subr.mxu0 0.0
    %2744 = vmatpush1.msra.mxu0 %v2727
    %2745 = vmatprep.subr.mxu0 0.0
    %2746 = vmatpush1.msra.mxu0 %v2726
    %2747 = vmatprep.subr.mxu0 0.0
    %2748 = vmatpush1.msra.mxu0 %v2725
    %2749 = vmatprep.subr.mxu0 0.0
    %2750 = vmatpush1.msra.mxu0 %v2724
    %2751 = vmatprep.subr.mxu0 0.0
    %2752 = vmatpush1.msra.mxu0 %v2723
    %2753 = vmatprep.subr.mxu0 0.0
    %2754 = vmatpush1.msra.mxu0 %v2722
    %2755 = vmatprep.subr.mxu0 0.0
    %2756 = vmatpush1.msra.mxu0 %v2721
    %2757 = vmatprep.subr.mxu0 0.0
    %2758 = vmatpush1.msra.mxu0 %v2720
    %2759 = vmatprep.subr.mxu0 0.0
    %2760 = vmatpush1.msra.mxu0 %v2719
    %2761 = vmatprep.subr.mxu0 0.0
    %2762 = vmatpush1.msra.mxu0 %v2718
    %2763 = vmatprep.subr.mxu0 0.0
    %2764 = vmatpush1.msra.mxu0 %v2717
    %2765 = vmatprep.subr.mxu0 0.0
    %2766 = vmatpush2.msra.mxu0 0.0
    %2767 = vmatprep.subr.mxu0 0.0
    %2768 = vmatpush2.msra.mxu0 0.0
    %2769 = vmatprep.subr.mxu0 0.0
    %2770 = vmatpush2.msra.mxu0 0.0
    %2771 = vmatprep.subr.mxu0 0.0
    %2772 = vmatpush2.msra.mxu0 0.0
    %2773 = vmatprep.subr.mxu0 0.0
    %2774 = vmatpush2.msra.mxu0 0.0
    %2775 = vmatprep.subr.mxu0 0.0
    %2776 = vmatpush2.msra.mxu0 0.0
    %2777 = vmatprep.subr.mxu0 0.0
    %2778 = vmatpush2.msra.mxu0 0.0
    %2779 = vmatprep.subr.mxu0 0.0
    %2780 = vmatpush2.msra.mxu0 0.0
    %2781 = vmatprep.subr.mxu0 0.0
    %2782 = vmatpush2.msra.mxu0 0.0
    %2783 = vmatprep.subr.mxu0 0.0
    %2784 = vmatpush2.msra.mxu0 0.0
    %2785 = vmatprep.subr.mxu0 0.0
    %2786 = vmatpush2.msra.mxu0 0.0
    %2787 = vmatprep.subr.mxu0 0.0
    %2788 = vmatpush2.msra.mxu0 0.0
    %2789 = vmatprep.subr.mxu0 0.0
    %2790 = vmatpush2.msra.mxu0 0.0
    %2791 = vmatprep.subr.mxu0 0.0
    %2792 = vmatpush2.msra.mxu0 0.0
    %2793 = vmatprep.subr.mxu0 0.0
    %2794 = vmatpush2.msra.mxu0 0.0
    %2795 = vmatprep.subr.mxu0 0.0
    %2796 = vmatpush2.msra.mxu0 0.0
    %2797 = vmatprep.mubr.f32.mxu0 0.0
    %2798 = vmatmul.mubr.f32.gmra.mxu0 %v2714
    %v2799 = vpop.f32.mrf.mxu0
    %v2800 = vadd.f32 0.0, %v2799
    %v2801 = vpop.f32.mrf.mxu0
    %2802 = vmatprep.mubr.f32.mxu0 0.0
    %2803 = vmatmul.mubr.f32.gmra.mxu0 %v2715
    %v2804 = vpop.f32.mrf.mxu0
    %v2805 = vadd.f32 0.0, %v2804
    %v2806 = vpop.f32.mrf.mxu0
    %2807 = vdwg.mxu0
    %v2808 = vadd.f32 %v2564, %v2800
    %v2809 = vadd.f32 %v2565, %v2805
    %s2810 = scalar_lea.vmem %s14, 1
    %v2811 = vld [vmem:[%s2810] sm:$0x1]
    %v2813 = vlaneseq
    %v2814 = vshrl.u32 %v2813, 7
    %v2815 = vsub.s32 0, %v2814
    %v2816 = vrot.slane %v2811, %v2815
    %v2818 = vadd.f32 %v2808, %v2816
    %v2819 = vadd.f32 %v2809, %v2816
    %v2820 = vld [vmem:[%s15] sm:$0x1]
    %v2821 = vld [vmem:[%s16] sm:$0x1]
    %v2822 = vsel %vm176, %v2818, 0.0
    %2823 = vadd.xlane.f32.xlu0 %v2822
    %v2824 = vpop.xlane.xlu0 %2823
    %v2825 = vsel %vm176, %v2819, 0.0
    %2826 = vadd.xlane.f32.xlu0 %v2825
    %v2827 = vpop.xlane.xlu0 %2826
    %v2828 = vmul.f32 %v2824, %v183
    %v2829 = vmul.f32 %v2827, %v183
    %v2830 = vsub.f32 %v2818, %v2828
    %v2831 = vsub.f32 %v2819, %v2829
    %v2832 = vmul.f32 %v2830, %v2830
    %v2833 = vmul.f32 %v2831, %v2831
    %v2834 = vsel %vm176, %v2832, 0.0
    %2835 = vadd.xlane.f32.xlu0 %v2834
    %v2836 = vpop.xlane.xlu0 %2835
    %v2837 = vsel %vm176, %v2833, 0.0
    %2838 = vadd.xlane.f32.xlu0 %v2837
    %v2839 = vpop.xlane.xlu0 %2838
    %v2840 = vmul.f32 %v2836, %v183
    %v2841 = vmul.f32 %v2839, %v183
    %v2842 = vadd.f32 %v2840, 1e-05
    %v2843 = vadd.f32 %v2841, 1e-05
    %v2844 = vrsqrt.pop %v2842
    %v2845 = vrsqrt.pop %v2843
    %v2846 = vmul.f32 %v2830, %v2844
    %v2847 = vmul.f32 %v2831, %v2845
    %v2849 = vlaneseq
    %v2850 = vshrl.u32 %v2849, 7
    %v2851 = vsub.s32 0, %v2850
    %v2852 = vrot.slane %v2820, %v2851
    %v2854 = vmul.f32 %v2846, %v2852
    %v2855 = vmul.f32 %v2847, %v2852
    %v2857 = vlaneseq
    %v2858 = vshrl.u32 %v2857, 7
    %v2859 = vsub.s32 0, %v2858
    %v2860 = vrot.slane %v2821, %v2859
    %v2862 = vadd.f32 %v2854, %v2860
    %v2863 = vadd.f32 %v2855, %v2860
    %v2864 = vld [vmem:[%s17] sm:$0xff]
    %v2865 = vld [vmem:[%s17 + $0x8] sm:$0xff]
    %v2866 = vld [vmem:[%s17 + $0x10] sm:$0xff]
    %v2867 = vld [vmem:[%s17 + $0x18] sm:$0xff]
    %v2868 = vld [vmem:[%s18] sm:$0x1]
    %v2870 = vlaneseq
    %v2871 = vshrl.u32 %v2870, 7
    %v2872 = vsub.s32 0, %v2871
    %v2873 = vrot.slane %v2868, %v2872
    %v2876 = vsel %vm176, %v2862, 0
    %v2879 = vsel %vm176, %v2863, 0
    %2881 = vmatprep.subr.mxu0 0.0
    %2882 = vmatpush1.msra.mxu0 0.0
    %2883 = vmatprep.subr.mxu0 0.0
    %2884 = vmatpush1.msra.mxu0 0.0
    %2885 = vmatprep.subr.mxu0 0.0
    %2886 = vmatpush1.msra.mxu0 0.0
    %2887 = vmatprep.subr.mxu0 0.0
    %2888 = vmatpush1.msra.mxu0 0.0
    %2889 = vmatprep.subr.mxu0 0.0
    %2890 = vmatpush1.msra.mxu0 0.0
    %2891 = vmatprep.subr.mxu0 0.0
    %2892 = vmatpush1.msra.mxu0 0.0
    %2893 = vmatprep.subr.mxu0 0.0
    %2894 = vmatpush1.msra.mxu0 0.0
    %2895 = vmatprep.subr.mxu0 0.0
    %2896 = vmatpush1.msra.mxu0 0.0
    %2897 = vmatprep.subr.mxu0 0.0
    %2898 = vmatpush1.msra.mxu0 0.0
    %2899 = vmatprep.subr.mxu0 0.0
    %2900 = vmatpush1.msra.mxu0 0.0
    %2901 = vmatprep.subr.mxu0 0.0
    %2902 = vmatpush1.msra.mxu0 0.0
    %2903 = vmatprep.subr.mxu0 0.0
    %2904 = vmatpush1.msra.mxu0 0.0
    %2905 = vmatprep.subr.mxu0 0.0
    %2906 = vmatpush1.msra.mxu0 %v2867
    %2907 = vmatprep.subr.mxu0 0.0
    %2908 = vmatpush1.msra.mxu0 %v2866
    %2909 = vmatprep.subr.mxu0 0.0
    %2910 = vmatpush1.msra.mxu0 %v2865
    %2911 = vmatprep.subr.mxu0 0.0
    %2912 = vmatpush1.msra.mxu0 %v2864
    %2913 = vmatprep.subr.mxu0 0.0
    %2914 = vmatpush2.msra.mxu0 0.0
    %2915 = vmatprep.subr.mxu0 0.0
    %2916 = vmatpush2.msra.mxu0 0.0
    %2917 = vmatprep.subr.mxu0 0.0
    %2918 = vmatpush2.msra.mxu0 0.0
    %2919 = vmatprep.subr.mxu0 0.0
    %2920 = vmatpush2.msra.mxu0 0.0
    %2921 = vmatprep.subr.mxu0 0.0
    %2922 = vmatpush2.msra.mxu0 0.0
    %2923 = vmatprep.subr.mxu0 0.0
    %2924 = vmatpush2.msra.mxu0 0.0
    %2925 = vmatprep.subr.mxu0 0.0
    %2926 = vmatpush2.msra.mxu0 0.0
    %2927 = vmatprep.subr.mxu0 0.0
    %2928 = vmatpush2.msra.mxu0 0.0
    %2929 = vmatprep.subr.mxu0 0.0
    %2930 = vmatpush2.msra.mxu0 0.0
    %2931 = vmatprep.subr.mxu0 0.0
    %2932 = vmatpush2.msra.mxu0 0.0
    %2933 = vmatprep.subr.mxu0 0.0
    %2934 = vmatpush2.msra.mxu0 0.0
    %2935 = vmatprep.subr.mxu0 0.0
    %2936 = vmatpush2.msra.mxu0 0.0
    %2937 = vmatprep.subr.mxu0 0.0
    %2938 = vmatpush2.msra.mxu0 0.0
    %2939 = vmatprep.subr.mxu0 0.0
    %2940 = vmatpush2.msra.mxu0 0.0
    %2941 = vmatprep.subr.mxu0 0.0
    %2942 = vmatpush2.msra.mxu0 0.0
    %2943 = vmatprep.subr.mxu0 0.0
    %2944 = vmatpush2.msra.mxu0 0.0
    %2945 = vmatprep.mubr.f32.mxu0 0.0
    %2946 = vmatmul.mubr.f32.gmra.mxu0 %v2876
    %v2947 = vpop.f32.mrf.mxu0
    %v2948 = vadd.f32 %v2873, %v2947
    %v2949 = vpop.f32.mrf.mxu0
    %2950 = vmatprep.mubr.f32.mxu0 0.0
    %2951 = vmatmul.mubr.f32.gmra.mxu0 %v2879
    %v2952 = vpop.f32.mrf.mxu0
    %v2953 = vadd.f32 %v2873, %v2952
    %v2954 = vpop.f32.mrf.mxu0
    %2955 = vdwg.mxu0
    %2956 = vst [vmem:[#allocation2] sm:$0xff] %v2948
    %2957 = vst [vmem:[#allocation2 + $0x8] sm:$0xff] %v2953
    // Predicated region
    $region78: #{tpu_custom_call.1} parent=1 // pred_check
      _
    $region79: #{tpu_custom_call.1} parent=1 // pred_check_branch
      %2959 = sbr.rel (0) target = $region81
    $region80: #{tpu_custom_call.1} parent=1 // pred_region
      %s2961 = ssub.s32 256, 256
      %2962 = vsyncadd [#allocation3], %s2961
      %s2963 = sshll.u32 [#allocation2], 4
      %s2964 = int_to_ptr.vmem [resolvable:$true] %s2963
      %2969 = dma.vmem_to_hbm [thread:$0]  %s2964, 256, %s19, [#allocation3], 128, 128, 8
    $region81: #{tpu_custom_call.1} parent=1 // pred_fallthru
      _
    // Predicated region
    $region82: #{tpu_custom_call.1} parent=1 // pred_check
      _
    $region83: #{tpu_custom_call.1} parent=1 // pred_check_branch
      %2971 = sbr.rel (0) target = $region85
    $region84: #{tpu_custom_call.1} parent=1 // pred_region
      %2972 = dma.done [#allocation3], 256
    $region85: #{tpu_custom_call.1} parent=1 // pred_fallthru
      _
    %2973 = vsyncpa [#allocation3], 1

</llo_original>
